<compile_context>
chip_gen: v6e
topology: v6e:2x2x1
jax: 0.10.0
libtpu: 0.0.40
codegen_flags: <defaults>
</compile_context>

<pallas_src>
import jax
import jax.numpy as jnp
from jax.experimental import pallas as pl
from jax.experimental.pallas import tpu as pltpu


# ----------------------------------------------------------------------------
# Kernel 1: fused dual-branch 3x3 conv (+bias) + 2x2 max-pool + ReLU  (MXU)
# ----------------------------------------------------------------------------
def conv_pool_relu_kernel(p_ref, w_ref, o_ref):
    # p_ref: (4, KPAD, Mb) bf16 im2col; dim0 = pool candidate (py*2+px),
    #        dim1 = (dy*3+dx)*C + ch taps, then a constant-1 bias row, then zeros,
    #        dim2 = Mb = tb*256 (lane-dense, multiple of 128).
    # w_ref: (CO, KPAD) bf16 [w1; w2] conv taps, bias in the column matching the 1-row.
    # o_ref: (CO, Mb)   f32 pooled + biased + ReLU activations (lane-dense store).
    w = w_ref[...]
    # One K=32 MXU contraction per pool candidate; running max keeps only two
    # (CO, Mb) f32 values live at a time (bounds VMEM at large tb).
    y = jnp.dot(w, p_ref[0], preferred_element_type=jnp.float32)
    y = jnp.maximum(y, jnp.dot(w, p_ref[1], preferred_element_type=jnp.float32))
    y = jnp.maximum(y, jnp.dot(w, p_ref[2], preferred_element_type=jnp.float32))
    y = jnp.maximum(y, jnp.dot(w, p_ref[3], preferred_element_type=jnp.float32))
    o_ref[...] = jnp.maximum(y, 0.0)


# ----------------------------------------------------------------------------
# Kernel 2: fully-connected layer on the (channel, batch, position) activation
# ----------------------------------------------------------------------------
def fc_kernel(x_ref, w_ref, b_ref, o_ref):
    # x_ref: (CO, tb, PGPG) f32   w_ref: (CO, PGPG, NC) f32
    # b_ref: (1, NC) f32          o_ref: (tb, NC) f32
    # out[b, n] = sum_{c,p} x[c, b, p] * w[c, p, n] + bias[n]
    # CO (=20) unrolled K=256 dots keep everything a plain 2-D MXU matmul
    # (no in-kernel relayout of the activation).  Numerics are intentionally
    # plain f32 here (conv path is the deliberate bf16 stage).
    acc = jnp.zeros(o_ref.shape, jnp.float32)
    for c in range(x_ref.shape[0]):
        acc = acc + jnp.dot(x_ref[c], w_ref[c], preferred_element_type=jnp.float32)
    o_ref[...] = acc + b_ref[...]


# ----------------------------------------------------------------------------
# One-time parameter repack (call once, outside the jitted forward)
# ----------------------------------------------------------------------------
def prepare_params(params):
    w1, w2 = params["w1"], params["w2"]          # (10, C, 3, 3)
    b1, b2 = params["b1"], params["b2"]          # (10,)
    fc_w, fc_b = params["fc_w"], params["fc_b"]  # (NC, 10*15*15*2), (NC,)

    CO1, Cin, KH, KW = w1.shape
    CO = CO1 + w2.shape[0]                       # 20
    NC, F = fc_w.shape
    HP = WP = int(round((F // CO) ** 0.5))       # 15
    PG = HP + 1                                  # padded pool grid (16)
    K = KH * KW * Cin                            # 27
    KPAD = max(32, -(-(K + 1) // 16) * 16)       # taps + bias row, bf16-tile aligned

    # Conv weights -> (CO, KPAD): column (dy*KW+dx)*Cin+ch, column K holds the bias
    # (it multiplies the constant-1 im2col row).
    w_cat = jnp.concatenate([w1, w2], axis=0)                     # (CO, C, 3, 3)
    w_k = jnp.transpose(w_cat, (0, 2, 3, 1)).reshape(CO, K)       # (co, dy, dx, ch)
    b_cat = jnp.concatenate([b1, b2]).reshape(CO, 1)
    w = jnp.concatenate(
        [w_k, b_cat, jnp.zeros((CO, KPAD - K - 1), w_k.dtype)], axis=1
    ).astype(jnp.bfloat16)                                        # (CO, KPAD)

    # FC weights: torch feature order (branch, ch, hp, wp) -> kernel order
    # (co = branch*CO1 + ch, pos = hp*PG + wp, n), with ZERO rows for the padded
    # pool positions (hp == PG-1 or wp == PG-1) so finite garbage there is killed.
    fcw = fc_w.reshape(NC, 2, CO1, HP, WP)
    fcw = jnp.transpose(fcw, (1, 2, 3, 4, 0)).reshape(CO, HP, WP, NC)
    fcw = jnp.pad(fcw, ((0, 0), (0, PG - HP), (0, PG - WP), (0, 0)))
    fcw = fcw.reshape(CO, PG * PG, NC).astype(jnp.float32)        # (CO, PG*PG, NC)
    fcb = fc_b.reshape(1, NC).astype(jnp.float32)
    return {"w": w, "fcw": fcw, "fcb": fcb}


# ----------------------------------------------------------------------------
# Batch-tile selection (VMEM-estimate capped, keep >= 2 parallel steps if possible)
# ----------------------------------------------------------------------------
def _conv_batch_tile(B, max_tb=32):
    # ~0.3 MB VMEM per sample (bf16 patches x2 buffers + f32 out x2 + transients):
    # tb=32 -> ~10 MB, safely under the 32 MiB scoped limit on v5e/v6e/v7x.
    for tb in (32, 16, 8, 4, 2, 1):
        if tb <= max_tb and tb <= B and B % tb == 0 and B // tb >= 2:
            return tb
    for tb in (32, 16, 8, 4, 2, 1):
        if tb <= B and B % tb == 0:
            return tb
    return 1


def _fc_batch_tile(B):
    # Block sublane dim must be a multiple of 8 or the full batch.
    for tb in (128, 64, 32, 16, 8):
        if tb <= B and B % tb == 0 and B // tb >= 2:
            return tb
    return B


# ----------------------------------------------------------------------------
# Forward pass
# ----------------------------------------------------------------------------
def model_forward(x_nchw, prepped):
    B, C, H, W = x_nchw.shape
    w = prepped["w"]            # (CO, KPAD) bf16
    fcw = prepped["fcw"]        # (CO, PG*PG, NC) f32
    fcb = prepped["fcb"]        # (1, NC) f32
    CO, KPAD = w.shape
    PGPG, NC = fcw.shape[1], fcw.shape[2]
    PG = int(round(PGPG ** 0.5))
    K = 9 * C

    # ---- im2col in ONE wrapper pass, already in the kernel's lane-dense layout.
    # Zero-pad so every 3x3 window of every (even padded) pool position is a full
    # static slice; padded pool rows/cols produce finite garbage that the zeroed
    # fcw rows annihilate.
    # TODO(synk): an in-kernel im2col would need stride-2 lane gathers (XLU-hostile
    # on TPU), so the space-to-depth stays a single XLA pass feeding (4, KPAD, B*256).
    x_p = jnp.pad(x_nchw, ((0, 0), (0, 0), (0, 2 * PG + 2 - H), (0, 2 * PG + 2 - W)))
    taps = jnp.stack([x_p[:, :, dy:dy + 2 * PG, dx:dx + 2 * PG]
                      for dy in range(3) for dx in range(3)], axis=0)  # (9,B,C,2PG,2PG)
    taps = taps.reshape(9, B, C, PG, 2, PG, 2)
    pat = jnp.transpose(taps, (4, 6, 0, 2, 1, 3, 5)).reshape(4, K, B * PGPG)
    pat = jnp.concatenate(
        [pat,
         jnp.ones((4, 1, B * PGPG), pat.dtype),                    # bias channel
         jnp.zeros((4, KPAD - K - 1, B * PGPG), pat.dtype)], axis=1)
    pat = pat.astype(jnp.bfloat16)                                 # (4, KPAD, B*PGPG)

    tb = _conv_batch_tile(B)
    Mb = tb * PGPG

    conv_out = pl.pallas_call(
        conv_pool_relu_kernel,
        out_shape=jax.ShapeDtypeStruct((CO, B * PGPG), jnp.float32),
        grid_spec=pltpu.PrefetchScalarGridSpec(
            num_scalar_prefetch=0,
            grid=(B // tb,),
            in_specs=[
                pl.BlockSpec((4, KPAD, Mb), lambda i: (0, 0, i)),
                pl.BlockSpec((CO, KPAD), lambda i: (0, 0)),
            ],
            out_specs=pl.BlockSpec((CO, Mb), lambda i: (0, i)),
        ),
        compiler_params=pltpu.CompilerParams(
            dimension_semantics=("parallel",),
            vmem_limit_bytes=32 * 1024 * 1024),
    )(pat, w)

    # Free HBM reshape: (CO, B*PGPG) -> (CO, B, PGPG); feature order matches fcw.
    feats = conv_out.reshape(CO, B, PGPG)

    tb2 = _fc_batch_tile(B)
    out = pl.pallas_call(
        fc_kernel,
        out_shape=jax.ShapeDtypeStruct((B, NC), jnp.float32),
        grid_spec=pltpu.PrefetchScalarGridSpec(
            num_scalar_prefetch=0,
            grid=(B // tb2,),
            in_specs=[
                pl.BlockSpec((CO, tb2, PGPG), lambda i: (0, i, 0)),
                pl.BlockSpec((CO, PGPG, NC), lambda i: (0, 0, 0)),
                pl.BlockSpec((1, NC), lambda i: (0, 0)),
            ],
            out_specs=pl.BlockSpec((tb2, NC), lambda i: (i, 0)),
        ),
        compiler_params=pltpu.CompilerParams(
            dimension_semantics=("parallel",),
            vmem_limit_bytes=32 * 1024 * 1024),
    )(feats, fcw, fcb)
    return out


# ----------------------------------------------------------------------------
# Pure-JAX reference (correctness check only)
# ----------------------------------------------------------------------------
def reference_forward(x_nchw, params):
    def branch(w, b):
        y = jax.lax.conv_general_dilated(
            x_nchw, w, (1, 1), "VALID",
            dimension_numbers=("NCHW", "OIHW", "NCHW"),
            precision=jax.lax.Precision.HIGHEST,
        ) + b.reshape(1, -1, 1, 1)
        y = jax.lax.reduce_window(
            y, -jnp.inf, jax.lax.max, (1, 1, 2, 2), (1, 1, 2, 2), "VALID")
        y = jnp.maximum(y, 0.0)
        return y.reshape(y.shape[0], -1)

    f = jnp.concatenate(
        [branch(params["w1"], params["b1"]), branch(params["w2"], params["b2"])],
        axis=1)
    return (jnp.dot(f, params["fc_w"].T, precision=jax.lax.Precision.HIGHEST)
            + params["fc_b"])


if __name__ == "__main__":
    # Shapes implied by the module: fc expects 10*15*15*2 features, so the input
    # spatial size must be 32x32 (conv3 -> 30, pool2 -> 15).
    B, C, H, W = 2, 3, 32, 32
    COUT, NUM_CLASSES = 10, 10

    key = jax.random.PRNGKey(0)
    kx, kw1, kb1, kw2, kb2, kwf, kbf = jax.random.split(key, 7)

    x = jax.random.normal(kx, (B, C, H, W), dtype=jnp.float32)

    conv_bound = 1.0 / jnp.sqrt(jnp.float32(C * 9))
    fc_in = COUT * 15 * 15 * 2
    fc_bound = 1.0 / jnp.sqrt(jnp.float32(fc_in))
    params = {
        "w1": jax.random.uniform(kw1, (COUT, C, 3, 3), jnp.float32, -conv_bound, conv_bound),
        "b1": jax.random.uniform(kb1, (COUT,), jnp.float32, -conv_bound, conv_bound),
        "w2": jax.random.uniform(kw2, (COUT, C, 3, 3), jnp.float32, -conv_bound, conv_bound),
        "b2": jax.random.uniform(kb2, (COUT,), jnp.float32, -conv_bound, conv_bound),
        "fc_w": jax.random.uniform(kwf, (NUM_CLASSES, fc_in), jnp.float32, -fc_bound, fc_bound),
        "fc_b": jax.random.uniform(kbf, (NUM_CLASSES,), jnp.float32, -fc_bound, fc_bound),
    }

    prepped = prepare_params(params)          # one-time torch -> kernel repack

    out = jax.jit(model_forward)(x, prepped)
    out = jax.block_until_ready(out)

    ref = jax.block_until_ready(reference_forward(x, params))
    assert out.shape == (B, NUM_CLASSES), out.shape
    max_err = float(jnp.max(jnp.abs(out - ref)))
    # bf16 conv operands with f32 accumulation + f32 FC: expected abs error ~1e-3.
    assert jnp.allclose(out, ref, rtol=5e-3, atol=1e-2), max_err

    print("KERNEL_OK")
</pallas_src>

<mosaic_0001>
module attributes {stable_mosaic.version = 11 : i64} {
  func.func @conv_pool_relu_kernel(%arg0: i32, %arg1: memref<4x32x256xbf16, #tpu.memory_space<vmem>>, %arg2: memref<20x32xbf16, #tpu.memory_space<vmem>>, %arg3: memref<20x256xf32, #tpu.memory_space<vmem>>) attributes {dimension_semantics = [#tpu.dimension_semantics<parallel>], iteration_bounds = array<i64: 2>, scalar_prefetch = 0 : i64, scratch_operands = 0 : i64, tpu.core_type = #tpu.core_type<tc>, window_params = [{transform_indices = @transform_0, window_bounds = array<i64: 4, 32, 256>}, {pipeline_mode = #tpu.pipeline_mode<synchronous>, transform_indices = @transform_1, window_bounds = array<i64: 20, 32>}, {transform_indices = @transform_2, window_bounds = array<i64: 20, 256>}]} {
    %c0 = arith.constant 0 : index
    %c0_0 = arith.constant 0 : index
    %0 = vector.load %arg2[%c0, %c0_0] : memref<20x32xbf16, #tpu.memory_space<vmem>>, vector<20x32xbf16>
    %c0_1 = arith.constant 0 : index
    %c0_2 = arith.constant 0 : index
    %c0_3 = arith.constant 0 : index
    %1 = vector.load %arg1[%c0_1, %c0_2, %c0_3] : memref<4x32x256xbf16, #tpu.memory_space<vmem>>, vector<1x32x256xbf16>
    %2 = vector.shape_cast %1 : vector<1x32x256xbf16> to vector<32x256xbf16>
    %cst = arith.constant dense<0.000000e+00> : vector<20x256xf32>
    %3 = tpu.matmul %0, %2, %cst {dimension_numbers = #tpu.dot_dimension_numbers<[1], [0], [0], [1], [0, 0, 1, 1], [], []>} : vector<20x32xbf16>, vector<32x256xbf16>, vector<20x256xf32> -> vector<20x256xf32>
    %c1 = arith.constant 1 : index
    %c0_4 = arith.constant 0 : index
    %c0_5 = arith.constant 0 : index
    %4 = vector.load %arg1[%c1, %c0_4, %c0_5] : memref<4x32x256xbf16, #tpu.memory_space<vmem>>, vector<1x32x256xbf16>
    %5 = vector.shape_cast %4 : vector<1x32x256xbf16> to vector<32x256xbf16>
    %cst_6 = arith.constant dense<0.000000e+00> : vector<20x256xf32>
    %6 = tpu.matmul %0, %5, %cst_6 {dimension_numbers = #tpu.dot_dimension_numbers<[1], [0], [0], [1], [0, 0, 1, 1], [], []>} : vector<20x32xbf16>, vector<32x256xbf16>, vector<20x256xf32> -> vector<20x256xf32>
    %7 = arith.maximumf %3, %6 : vector<20x256xf32>
    %c2 = arith.constant 2 : index
    %c0_7 = arith.constant 0 : index
    %c0_8 = arith.constant 0 : index
    %8 = vector.load %arg1[%c2, %c0_7, %c0_8] : memref<4x32x256xbf16, #tpu.memory_space<vmem>>, vector<1x32x256xbf16>
    %9 = vector.shape_cast %8 : vector<1x32x256xbf16> to vector<32x256xbf16>
    %cst_9 = arith.constant dense<0.000000e+00> : vector<20x256xf32>
    %10 = tpu.matmul %0, %9, %cst_9 {dimension_numbers = #tpu.dot_dimension_numbers<[1], [0], [0], [1], [0, 0, 1, 1], [], []>} : vector<20x32xbf16>, vector<32x256xbf16>, vector<20x256xf32> -> vector<20x256xf32>
    %11 = arith.maximumf %7, %10 : vector<20x256xf32>
    %c3 = arith.constant 3 : index
    %c0_10 = arith.constant 0 : index
    %c0_11 = arith.constant 0 : index
    %12 = vector.load %arg1[%c3, %c0_10, %c0_11] : memref<4x32x256xbf16, #tpu.memory_space<vmem>>, vector<1x32x256xbf16>
    %13 = vector.shape_cast %12 : vector<1x32x256xbf16> to vector<32x256xbf16>
    %cst_12 = arith.constant dense<0.000000e+00> : vector<20x256xf32>
    %14 = tpu.matmul %0, %13, %cst_12 {dimension_numbers = #tpu.dot_dimension_numbers<[1], [0], [0], [1], [0, 0, 1, 1], [], []>} : vector<20x32xbf16>, vector<32x256xbf16>, vector<20x256xf32> -> vector<20x256xf32>
    %15 = arith.maximumf %11, %14 : vector<20x256xf32>
    %cst_13 = arith.constant 0.000000e+00 : f32
    %16 = vector.broadcast %cst_13 : f32 to vector<20x256xf32>
    %17 = arith.maximumf %15, %16 : vector<20x256xf32>
    %c0_14 = arith.constant 0 : index
    %c0_15 = arith.constant 0 : index
    %18 = vector.load %arg3[%c0_14, %c0_15] : memref<20x256xf32, #tpu.memory_space<vmem>>, vector<20x256xf32>
    tpu.vector_store %arg3[%c0_14, %c0_15], %17 {strides = array<i32>} : memref<20x256xf32, #tpu.memory_space<vmem>>, vector<20x256xf32>,
    return
  }
  func.func @transform_0(%arg0: i32) -> (i32, i32, i32) {
    %c0_i32 = arith.constant 0 : i32
    %c0_i32_0 = arith.constant 0 : i32
    %c0_i32_1 = arith.constant 0 : i32
    return %c0_i32, %c0_i32_0, %arg0 : i32, i32, i32
  }
  func.func @transform_1(%arg0: i32) -> (i32, i32) {
    %c0_i32 = arith.constant 0 : i32
    %c0_i32_0 = arith.constant 0 : i32
    %c0_i32_1 = arith.constant 0 : i32
    return %c0_i32, %c0_i32_0 : i32, i32
  }
  func.func @transform_2(%arg0: i32) -> (i32, i32) {
    %c0_i32 = arith.constant 0 : i32
    %c0_i32_0 = arith.constant 0 : i32
    return %c0_i32, %arg0 : i32, i32
  }
}

module attributes {stable_mosaic.version = 11 : i64} {
  func.func @fc_kernel(%arg0: i32, %arg1: memref<20x2x256xf32, #tpu.memory_space<vmem>>, %arg2: memref<20x256x10xf32, #tpu.memory_space<vmem>>, %arg3: memref<1x10xf32, #tpu.memory_space<vmem>>, %arg4: memref<2x10xf32, #tpu.memory_space<vmem>>) attributes {dimension_semantics = [#tpu.dimension_semantics<parallel>], iteration_bounds = array<i64: 1>, scalar_prefetch = 0 : i64, scratch_operands = 0 : i64, tpu.core_type = #tpu.core_type<tc>, window_params = [{transform_indices = @transform_0, window_bounds = array<i64: 20, 2, 256>}, {pipeline_mode = #tpu.pipeline_mode<synchronous>, transform_indices = @transform_1, window_bounds = array<i64: 20, 256, 10>}, {pipeline_mode = #tpu.pipeline_mode<synchronous>, transform_indices = @transform_2, window_bounds = array<i64: 1, 10>}, {transform_indices = @transform_3, window_bounds = array<i64: 2, 10>}]} {
    %cst = arith.constant 0.000000e+00 : f32
    %0 = vector.broadcast %cst : f32 to vector<2x10xf32>
    %c0 = arith.constant 0 : index
    %c0_0 = arith.constant 0 : index
    %c0_1 = arith.constant 0 : index
    %1 = vector.load %arg1[%c0, %c0_0, %c0_1] : memref<20x2x256xf32, #tpu.memory_space<vmem>>, vector<1x2x256xf32>
    %2 = vector.shape_cast %1 : vector<1x2x256xf32> to vector<2x256xf32>
    %c0_2 = arith.constant 0 : index
    %c0_3 = arith.constant 0 : index
    %c0_4 = arith.constant 0 : index
    %3 = vector.load %arg2[%c0_2, %c0_3, %c0_4] : memref<20x256x10xf32, #tpu.memory_space<vmem>>, vector<1x256x10xf32>
    %4 = vector.shape_cast %3 : vector<1x256x10xf32> to vector<256x10xf32>
    %cst_5 = arith.constant dense<0.000000e+00> : vector<2x10xf32>
    %5 = tpu.matmul %2, %4, %cst_5 {dimension_numbers = #tpu.dot_dimension_numbers<[1], [0], [0], [1], [0, 0, 1, 1], [], []>} : vector<2x256xf32>, vector<256x10xf32>, vector<2x10xf32> -> vector<2x10xf32>
    %6 = arith.addf %0, %5 : vector<2x10xf32>
    %c1 = arith.constant 1 : index
    %c0_6 = arith.constant 0 : index
    %c0_7 = arith.constant 0 : index
    %7 = vector.load %arg1[%c1, %c0_6, %c0_7] : memref<20x2x256xf32, #tpu.memory_space<vmem>>, vector<1x2x256xf32>
    %8 = vector.shape_cast %7 : vector<1x2x256xf32> to vector<2x256xf32>
    %c1_8 = arith.constant 1 : index
    %c0_9 = arith.constant 0 : index
    %c0_10 = arith.constant 0 : index
    %9 = vector.load %arg2[%c1_8, %c0_9, %c0_10] : memref<20x256x10xf32, #tpu.memory_space<vmem>>, vector<1x256x10xf32>
    %10 = vector.shape_cast %9 : vector<1x256x10xf32> to vector<256x10xf32>
    %cst_11 = arith.constant dense<0.000000e+00> : vector<2x10xf32>
    %11 = tpu.matmul %8, %10, %cst_11 {dimension_numbers = #tpu.dot_dimension_numbers<[1], [0], [0], [1], [0, 0, 1, 1], [], []>} : vector<2x256xf32>, vector<256x10xf32>, vector<2x10xf32> -> vector<2x10xf32>
    %12 = arith.addf %6, %11 : vector<2x10xf32>
    %c2 = arith.constant 2 : index
    %c0_12 = arith.constant 0 : index
    %c0_13 = arith.constant 0 : index
    %13 = vector.load %arg1[%c2, %c0_12, %c0_13] : memref<20x2x256xf32, #tpu.memory_space<vmem>>, vector<1x2x256xf32>
    %14 = vector.shape_cast %13 : vector<1x2x256xf32> to vector<2x256xf32>
    %c2_14 = arith.constant 2 : index
    %c0_15 = arith.constant 0 : index
    %c0_16 = arith.constant 0 : index
    %15 = vector.load %arg2[%c2_14, %c0_15, %c0_16] : memref<20x256x10xf32, #tpu.memory_space<vmem>>, vector<1x256x10xf32>
    %16 = vector.shape_cast %15 : vector<1x256x10xf32> to vector<256x10xf32>
    %cst_17 = arith.constant dense<0.000000e+00> : vector<2x10xf32>
    %17 = tpu.matmul %14, %16, %cst_17 {dimension_numbers = #tpu.dot_dimension_numbers<[1], [0], [0], [1], [0, 0, 1, 1], [], []>} : vector<2x256xf32>, vector<256x10xf32>, vector<2x10xf32> -> vector<2x10xf32>
    %18 = arith.addf %12, %17 : vector<2x10xf32>
    %c3 = arith.constant 3 : index
    %c0_18 = arith.constant 0 : index
    %c0_19 = arith.constant 0 : index
    %19 = vector.load %arg1[%c3, %c0_18, %c0_19] : memref<20x2x256xf32, #tpu.memory_space<vmem>>, vector<1x2x256xf32>
    %20 = vector.shape_cast %19 : vector<1x2x256xf32> to vector<2x256xf32>
    %c3_20 = arith.constant 3 : index
    %c0_21 = arith.constant 0 : index
    %c0_22 = arith.constant 0 : index
    %21 = vector.load %arg2[%c3_20, %c0_21, %c0_22] : memref<20x256x10xf32, #tpu.memory_space<vmem>>, vector<1x256x10xf32>
    %22 = vector.shape_cast %21 : vector<1x256x10xf32> to vector<256x10xf32>
    %cst_23 = arith.constant dense<0.000000e+00> : vector<2x10xf32>
    %23 = tpu.matmul %20, %22, %cst_23 {dimension_numbers = #tpu.dot_dimension_numbers<[1], [0], [0], [1], [0, 0, 1, 1], [], []>} : vector<2x256xf32>, vector<256x10xf32>, vector<2x10xf32> -> vector<2x10xf32>
    %24 = arith.addf %18, %23 : vector<2x10xf32>
    %c4 = arith.constant 4 : index
    %c0_24 = arith.constant 0 : index
    %c0_25 = arith.constant 0 : index
    %25 = vector.load %arg1[%c4, %c0_24, %c0_25] : memref<20x2x256xf32, #tpu.memory_space<vmem>>, vector<1x2x256xf32>
    %26 = vector.shape_cast %25 : vector<1x2x256xf32> to vector<2x256xf32>
    %c4_26 = arith.constant 4 : index
    %c0_27 = arith.constant 0 : index
    %c0_28 = arith.constant 0 : index
    %27 = vector.load %arg2[%c4_26, %c0_27, %c0_28] : memref<20x256x10xf32, #tpu.memory_space<vmem>>, vector<1x256x10xf32>
    %28 = vector.shape_cast %27 : vector<1x256x10xf32> to vector<256x10xf32>
    %cst_29 = arith.constant dense<0.000000e+00> : vector<2x10xf32>
    %29 = tpu.matmul %26, %28, %cst_29 {dimension_numbers = #tpu.dot_dimension_numbers<[1], [0], [0], [1], [0, 0, 1, 1], [], []>} : vector<2x256xf32>, vector<256x10xf32>, vector<2x10xf32> -> vector<2x10xf32>
    %30 = arith.addf %24, %29 : vector<2x10xf32>
    %c5 = arith.constant 5 : index
    %c0_30 = arith.constant 0 : index
    %c0_31 = arith.constant 0 : index
    %31 = vector.load %arg1[%c5, %c0_30, %c0_31] : memref<20x2x256xf32, #tpu.memory_space<vmem>>, vector<1x2x256xf32>
    %32 = vector.shape_cast %31 : vector<1x2x256xf32> to vector<2x256xf32>
    %c5_32 = arith.constant 5 : index
    %c0_33 = arith.constant 0 : index
    %c0_34 = arith.constant 0 : index
    %33 = vector.load %arg2[%c5_32, %c0_33, %c0_34] : memref<20x256x10xf32, #tpu.memory_space<vmem>>, vector<1x256x10xf32>
    %34 = vector.shape_cast %33 : vector<1x256x10xf32> to vector<256x10xf32>
    %cst_35 = arith.constant dense<0.000000e+00> : vector<2x10xf32>
    %35 = tpu.matmul %32, %34, %cst_35 {dimension_numbers = #tpu.dot_dimension_numbers<[1], [0], [0], [1], [0, 0, 1, 1], [], []>} : vector<2x256xf32>, vector<256x10xf32>, vector<2x10xf32> -> vector<2x10xf32>
    %36 = arith.addf %30, %35 : vector<2x10xf32>
    %c6 = arith.constant 6 : index
    %c0_36 = arith.constant 0 : index
    %c0_37 = arith.constant 0 : index
    %37 = vector.load %arg1[%c6, %c0_36, %c0_37] : memref<20x2x256xf32, #tpu.memory_space<vmem>>, vector<1x2x256xf32>
    %38 = vector.shape_cast %37 : vector<1x2x256xf32> to vector<2x256xf32>
    %c6_38 = arith.constant 6 : index
    %c0_39 = arith.constant 0 : index
    %c0_40 = arith.constant 0 : index
    %39 = vector.load %arg2[%c6_38, %c0_39, %c0_40] : memref<20x256x10xf32, #tpu.memory_space<vmem>>, vector<1x256x10xf32>
    %40 = vector.shape_cast %39 : vector<1x256x10xf32> to vector<256x10xf32>
    %cst_41 = arith.constant dense<0.000000e+00> : vector<2x10xf32>
    %41 = tpu.matmul %38, %40, %cst_41 {dimension_numbers = #tpu.dot_dimension_numbers<[1], [0], [0], [1], [0, 0, 1, 1], [], []>} : vector<2x256xf32>, vector<256x10xf32>, vector<2x10xf32> -> vector<2x10xf32>
    %42 = arith.addf %36, %41 : vector<2x10xf32>
    %c7 = arith.constant 7 : index
    %c0_42 = arith.constant 0 : index
    %c0_43 = arith.constant 0 : index
    %43 = vector.load %arg1[%c7, %c0_42, %c0_43] : memref<20x2x256xf32, #tpu.memory_space<vmem>>, vector<1x2x256xf32>
    %44 = vector.shape_cast %43 : vector<1x2x256xf32> to vector<2x256xf32>
    %c7_44 = arith.constant 7 : index
    %c0_45 = arith.constant 0 : index
    %c0_46 = arith.constant 0 : index
    %45 = vector.load %arg2[%c7_44, %c0_45, %c0_46] : memref<20x256x10xf32, #tpu.memory_space<vmem>>, vector<1x256x10xf32>
    %46 = vector.shape_cast %45 : vector<1x256x10xf32> to vector<256x10xf32>
    %cst_47 = arith.constant dense<0.000000e+00> : vector<2x10xf32>
    %47 = tpu.matmul %44, %46, %cst_47 {dimension_numbers = #tpu.dot_dimension_numbers<[1], [0], [0], [1], [0, 0, 1, 1], [], []>} : vector<2x256xf32>, vector<256x10xf32>, vector<2x10xf32> -> vector<2x10xf32>
    %48 = arith.addf %42, %47 : vector<2x10xf32>
    %c8 = arith.constant 8 : index
    %c0_48 = arith.constant 0 : index
    %c0_49 = arith.constant 0 : index
    %49 = vector.load %arg1[%c8, %c0_48, %c0_49] : memref<20x2x256xf32, #tpu.memory_space<vmem>>, vector<1x2x256xf32>
    %50 = vector.shape_cast %49 : vector<1x2x256xf32> to vector<2x256xf32>
    %c8_50 = arith.constant 8 : index
    %c0_51 = arith.constant 0 : index
    %c0_52 = arith.constant 0 : index
    %51 = vector.load %arg2[%c8_50, %c0_51, %c0_52] : memref<20x256x10xf32, #tpu.memory_space<vmem>>, vector<1x256x10xf32>
    %52 = vector.shape_cast %51 : vector<1x256x10xf32> to vector<256x10xf32>
    %cst_53 = arith.constant dense<0.000000e+00> : vector<2x10xf32>
    %53 = tpu.matmul %50, %52, %cst_53 {dimension_numbers = #tpu.dot_dimension_numbers<[1], [0], [0], [1], [0, 0, 1, 1], [], []>} : vector<2x256xf32>, vector<256x10xf32>, vector<2x10xf32> -> vector<2x10xf32>
    %54 = arith.addf %48, %53 : vector<2x10xf32>
    %c9 = arith.constant 9 : index
    %c0_54 = arith.constant 0 : index
    %c0_55 = arith.constant 0 : index
    %55 = vector.load %arg1[%c9, %c0_54, %c0_55] : memref<20x2x256xf32, #tpu.memory_space<vmem>>, vector<1x2x256xf32>
    %56 = vector.shape_cast %55 : vector<1x2x256xf32> to vector<2x256xf32>
    %c9_56 = arith.constant 9 : index
    %c0_57 = arith.constant 0 : index
    %c0_58 = arith.constant 0 : index
    %57 = vector.load %arg2[%c9_56, %c0_57, %c0_58] : memref<20x256x10xf32, #tpu.memory_space<vmem>>, vector<1x256x10xf32>
    %58 = vector.shape_cast %57 : vector<1x256x10xf32> to vector<256x10xf32>
    %cst_59 = arith.constant dense<0.000000e+00> : vector<2x10xf32>
    %59 = tpu.matmul %56, %58, %cst_59 {dimension_numbers = #tpu.dot_dimension_numbers<[1], [0], [0], [1], [0, 0, 1, 1], [], []>} : vector<2x256xf32>, vector<256x10xf32>, vector<2x10xf32> -> vector<2x10xf32>
    %60 = arith.addf %54, %59 : vector<2x10xf32>
    %c10 = arith.constant 10 : index
    %c0_60 = arith.constant 0 : index
    %c0_61 = arith.constant 0 : index
    %61 = vector.load %arg1[%c10, %c0_60, %c0_61] : memref<20x2x256xf32, #tpu.memory_space<vmem>>, vector<1x2x256xf32>
    %62 = vector.shape_cast %61 : vector<1x2x256xf32> to vector<2x256xf32>
    %c10_62 = arith.constant 10 : index
    %c0_63 = arith.constant 0 : index
    %c0_64 = arith.constant 0 : index
    %63 = vector.load %arg2[%c10_62, %c0_63, %c0_64] : memref<20x256x10xf32, #tpu.memory_space<vmem>>, vector<1x256x10xf32>
    %64 = vector.shape_cast %63 : vector<1x256x10xf32> to vector<256x10xf32>
    %cst_65 = arith.constant dense<0.000000e+00> : vector<2x10xf32>
    %65 = tpu.matmul %62, %64, %cst_65 {dimension_numbers = #tpu.dot_dimension_numbers<[1], [0], [0], [1], [0, 0, 1, 1], [], []>} : vector<2x256xf32>, vector<256x10xf32>, vector<2x10xf32> -> vector<2x10xf32>
    %66 = arith.addf %60, %65 : vector<2x10xf32>
    %c11 = arith.constant 11 : index
    %c0_66 = arith.constant 0 : index
    %c0_67 = arith.constant 0 : index
    %67 = vector.load %arg1[%c11, %c0_66, %c0_67] : memref<20x2x256xf32, #tpu.memory_space<vmem>>, vector<1x2x256xf32>
    %68 = vector.shape_cast %67 : vector<1x2x256xf32> to vector<2x256xf32>
    %c11_68 = arith.constant 11 : index
    %c0_69 = arith.constant 0 : index
    %c0_70 = arith.constant 0 : index
    %69 = vector.load %arg2[%c11_68, %c0_69, %c0_70] : memref<20x256x10xf32, #tpu.memory_space<vmem>>, vector<1x256x10xf32>
    %70 = vector.shape_cast %69 : vector<1x256x10xf32> to vector<256x10xf32>
    %cst_71 = arith.constant dense<0.000000e+00> : vector<2x10xf32>
    %71 = tpu.matmul %68, %70, %cst_71 {dimension_numbers = #tpu.dot_dimension_numbers<[1], [0], [0], [1], [0, 0, 1, 1], [], []>} : vector<2x256xf32>, vector<256x10xf32>, vector<2x10xf32> -> vector<2x10xf32>
    %72 = arith.addf %66, %71 : vector<2x10xf32>
    %c12 = arith.constant 12 : index
    %c0_72 = arith.constant 0 : index
    %c0_73 = arith.constant 0 : index
    %73 = vector.load %arg1[%c12, %c0_72, %c0_73] : memref<20x2x256xf32, #tpu.memory_space<vmem>>, vector<1x2x256xf32>
    %74 = vector.shape_cast %73 : vector<1x2x256xf32> to vector<2x256xf32>
    %c12_74 = arith.constant 12 : index
    %c0_75 = arith.constant 0 : index
    %c0_76 = arith.constant 0 : index
    %75 = vector.load %arg2[%c12_74, %c0_75, %c0_76] : memref<20x256x10xf32, #tpu.memory_space<vmem>>, vector<1x256x10xf32>
    %76 = vector.shape_cast %75 : vector<1x256x10xf32> to vector<256x10xf32>
    %cst_77 = arith.constant dense<0.000000e+00> : vector<2x10xf32>
    %77 = tpu.matmul %74, %76, %cst_77 {dimension_numbers = #tpu.dot_dimension_numbers<[1], [0], [0], [1], [0, 0, 1, 1], [], []>} : vector<2x256xf32>, vector<256x10xf32>, vector<2x10xf32> -> vector<2x10xf32>
    %78 = arith.addf %72, %77 : vector<2x10xf32>
    %c13 = arith.constant 13 : index
    %c0_78 = arith.constant 0 : index
    %c0_79 = arith.constant 0 : index
    %79 = vector.load %arg1[%c13, %c0_78, %c0_79] : memref<20x2x256xf32, #tpu.memory_space<vmem>>, vector<1x2x256xf32>
    %80 = vector.shape_cast %79 : vector<1x2x256xf32> to vector<2x256xf32>
    %c13_80 = arith.constant 13 : index
    %c0_81 = arith.constant 0 : index
    %c0_82 = arith.constant 0 : index
    %81 = vector.load %arg2[%c13_80, %c0_81, %c0_82] : memref<20x256x10xf32, #tpu.memory_space<vmem>>, vector<1x256x10xf32>
    %82 = vector.shape_cast %81 : vector<1x256x10xf32> to vector<256x10xf32>
    %cst_83 = arith.constant dense<0.000000e+00> : vector<2x10xf32>
    %83 = tpu.matmul %80, %82, %cst_83 {dimension_numbers = #tpu.dot_dimension_numbers<[1], [0], [0], [1], [0, 0, 1, 1], [], []>} : vector<2x256xf32>, vector<256x10xf32>, vector<2x10xf32> -> vector<2x10xf32>
    %84 = arith.addf %78, %83 : vector<2x10xf32>
    %c14 = arith.constant 14 : index
    %c0_84 = arith.constant 0 : index
    %c0_85 = arith.constant 0 : index
    %85 = vector.load %arg1[%c14, %c0_84, %c0_85] : memref<20x2x256xf32, #tpu.memory_space<vmem>>, vector<1x2x256xf32>
    %86 = vector.shape_cast %85 : vector<1x2x256xf32> to vector<2x256xf32>
    %c14_86 = arith.constant 14 : index
    %c0_87 = arith.constant 0 : index
    %c0_88 = arith.constant 0 : index
    %87 = vector.load %arg2[%c14_86, %c0_87, %c0_88] : memref<20x256x10xf32, #tpu.memory_space<vmem>>, vector<1x256x10xf32>
    %88 = vector.shape_cast %87 : vector<1x256x10xf32> to vector<256x10xf32>
    %cst_89 = arith.constant dense<0.000000e+00> : vector<2x10xf32>
    %89 = tpu.matmul %86, %88, %cst_89 {dimension_numbers = #tpu.dot_dimension_numbers<[1], [0], [0], [1], [0, 0, 1, 1], [], []>} : vector<2x256xf32>, vector<256x10xf32>, vector<2x10xf32> -> vector<2x10xf32>
    %90 = arith.addf %84, %89 : vector<2x10xf32>
    %c15 = arith.constant 15 : index
    %c0_90 = arith.constant 0 : index
    %c0_91 = arith.constant 0 : index
    %91 = vector.load %arg1[%c15, %c0_90, %c0_91] : memref<20x2x256xf32, #tpu.memory_space<vmem>>, vector<1x2x256xf32>
    %92 = vector.shape_cast %91 : vector<1x2x256xf32> to vector<2x256xf32>
    %c15_92 = arith.constant 15 : index
    %c0_93 = arith.constant 0 : index
    %c0_94 = arith.constant 0 : index
    %93 = vector.load %arg2[%c15_92, %c0_93, %c0_94] : memref<20x256x10xf32, #tpu.memory_space<vmem>>, vector<1x256x10xf32>
    %94 = vector.shape_cast %93 : vector<1x256x10xf32> to vector<256x10xf32>
    %cst_95 = arith.constant dense<0.000000e+00> : vector<2x10xf32>
    %95 = tpu.matmul %92, %94, %cst_95 {dimension_numbers = #tpu.dot_dimension_numbers<[1], [0], [0], [1], [0, 0, 1, 1], [], []>} : vector<2x256xf32>, vector<256x10xf32>, vector<2x10xf32> -> vector<2x10xf32>
    %96 = arith.addf %90, %95 : vector<2x10xf32>
    %c16 = arith.constant 16 : index
    %c0_96 = arith.constant 0 : index
    %c0_97 = arith.constant 0 : index
    %97 = vector.load %arg1[%c16, %c0_96, %c0_97] : memref<20x2x256xf32, #tpu.memory_space<vmem>>, vector<1x2x256xf32>
    %98 = vector.shape_cast %97 : vector<1x2x256xf32> to vector<2x256xf32>
    %c16_98 = arith.constant 16 : index
    %c0_99 = arith.constant 0 : index
    %c0_100 = arith.constant 0 : index
    %99 = vector.load %arg2[%c16_98, %c0_99, %c0_100] : memref<20x256x10xf32, #tpu.memory_space<vmem>>, vector<1x256x10xf32>
    %100 = vector.shape_cast %99 : vector<1x256x10xf32> to vector<256x10xf32>
    %cst_101 = arith.constant dense<0.000000e+00> : vector<2x10xf32>
    %101 = tpu.matmul %98, %100, %cst_101 {dimension_numbers = #tpu.dot_dimension_numbers<[1], [0], [0], [1], [0, 0, 1, 1], [], []>} : vector<2x256xf32>, vector<256x10xf32>, vector<2x10xf32> -> vector<2x10xf32>
    %102 = arith.addf %96, %101 : vector<2x10xf32>
    %c17 = arith.constant 17 : index
    %c0_102 = arith.constant 0 : index
    %c0_103 = arith.constant 0 : index
    %103 = vector.load %arg1[%c17, %c0_102, %c0_103] : memref<20x2x256xf32, #tpu.memory_space<vmem>>, vector<1x2x256xf32>
    %104 = vector.shape_cast %103 : vector<1x2x256xf32> to vector<2x256xf32>
    %c17_104 = arith.constant 17 : index
    %c0_105 = arith.constant 0 : index
    %c0_106 = arith.constant 0 : index
    %105 = vector.load %arg2[%c17_104, %c0_105, %c0_106] : memref<20x256x10xf32, #tpu.memory_space<vmem>>, vector<1x256x10xf32>
    %106 = vector.shape_cast %105 : vector<1x256x10xf32> to vector<256x10xf32>
    %cst_107 = arith.constant dense<0.000000e+00> : vector<2x10xf32>
    %107 = tpu.matmul %104, %106, %cst_107 {dimension_numbers = #tpu.dot_dimension_numbers<[1], [0], [0], [1], [0, 0, 1, 1], [], []>} : vector<2x256xf32>, vector<256x10xf32>, vector<2x10xf32> -> vector<2x10xf32>
    %108 = arith.addf %102, %107 : vector<2x10xf32>
    %c18 = arith.constant 18 : index
    %c0_108 = arith.constant 0 : index
    %c0_109 = arith.constant 0 : index
    %109 = vector.load %arg1[%c18, %c0_108, %c0_109] : memref<20x2x256xf32, #tpu.memory_space<vmem>>, vector<1x2x256xf32>
    %110 = vector.shape_cast %109 : vector<1x2x256xf32> to vector<2x256xf32>
    %c18_110 = arith.constant 18 : index
    %c0_111 = arith.constant 0 : index
    %c0_112 = arith.constant 0 : index
    %111 = vector.load %arg2[%c18_110, %c0_111, %c0_112] : memref<20x256x10xf32, #tpu.memory_space<vmem>>, vector<1x256x10xf32>
    %112 = vector.shape_cast %111 : vector<1x256x10xf32> to vector<256x10xf32>
    %cst_113 = arith.constant dense<0.000000e+00> : vector<2x10xf32>
    %113 = tpu.matmul %110, %112, %cst_113 {dimension_numbers = #tpu.dot_dimension_numbers<[1], [0], [0], [1], [0, 0, 1, 1], [], []>} : vector<2x256xf32>, vector<256x10xf32>, vector<2x10xf32> -> vector<2x10xf32>
    %114 = arith.addf %108, %113 : vector<2x10xf32>
    %c19 = arith.constant 19 : index
    %c0_114 = arith.constant 0 : index
    %c0_115 = arith.constant 0 : index
    %115 = vector.load %arg1[%c19, %c0_114, %c0_115] : memref<20x2x256xf32, #tpu.memory_space<vmem>>, vector<1x2x256xf32>
    %116 = vector.shape_cast %115 : vector<1x2x256xf32> to vector<2x256xf32>
    %c19_116 = arith.constant 19 : index
    %c0_117 = arith.constant 0 : index
    %c0_118 = arith.constant 0 : index
    %117 = vector.load %arg2[%c19_116, %c0_117, %c0_118] : memref<20x256x10xf32, #tpu.memory_space<vmem>>, vector<1x256x10xf32>
    %118 = vector.shape_cast %117 : vector<1x256x10xf32> to vector<256x10xf32>
    %cst_119 = arith.constant dense<0.000000e+00> : vector<2x10xf32>
    %119 = tpu.matmul %116, %118, %cst_119 {dimension_numbers = #tpu.dot_dimension_numbers<[1], [0], [0], [1], [0, 0, 1, 1], [], []>} : vector<2x256xf32>, vector<256x10xf32>, vector<2x10xf32> -> vector<2x10xf32>
    %120 = arith.addf %114, %119 : vector<2x10xf32>
    %c0_120 = arith.constant 0 : index
    %c0_121 = arith.constant 0 : index
    %121 = vector.load %arg3[%c0_120, %c0_121] : memref<1x10xf32, #tpu.memory_space<vmem>>, vector<1x10xf32>
    %122 = vector.broadcast %121 : vector<1x10xf32> to vector<2x10xf32>
    %123 = arith.addf %120, %122 : vector<2x10xf32>
    %c0_122 = arith.constant 0 : index
    %c0_123 = arith.constant 0 : index
    %124 = vector.load %arg4[%c0_122, %c0_123] : memref<2x10xf32, #tpu.memory_space<vmem>>, vector<2x10xf32>
    tpu.vector_store %arg4[%c0_122, %c0_123], %123 {strides = array<i32>} : memref<2x10xf32, #tpu.memory_space<vmem>>, vector<2x10xf32>,
    return
  }
  func.func @transform_0(%arg0: i32) -> (i32, i32, i32) {
    %c0_i32 = arith.constant 0 : i32
    %c0_i32_0 = arith.constant 0 : i32
    %c0_i32_1 = arith.constant 0 : i32
    return %c0_i32, %arg0, %c0_i32_0 : i32, i32, i32
  }
  func.func @transform_1(%arg0: i32) -> (i32, i32, i32) {
    %c0_i32 = arith.constant 0 : i32
    %c0_i32_0 = arith.constant 0 : i32
    %c0_i32_1 = arith.constant 0 : i32
    %c0_i32_2 = arith.constant 0 : i32
    return %c0_i32, %c0_i32_0, %c0_i32_1 : i32, i32, i32
  }
  func.func @transform_2(%arg0: i32) -> (i32, i32) {
    %c0_i32 = arith.constant 0 : i32
    %c0_i32_0 = arith.constant 0 : i32
    %c0_i32_1 = arith.constant 0 : i32
    return %c0_i32, %c0_i32_0 : i32, i32
  }
  func.func @transform_3(%arg0: i32) -> (i32, i32) {
    %c0_i32 = arith.constant 0 : i32
    %c0_i32_0 = arith.constant 0 : i32
    return %arg0, %c0_i32 : i32, i32
  }
}

</mosaic_0001>

<llo_original>
// kernel: model_forward.2
$region0: #{model_forward.2}
  #allocation0 [shape = 'u32[]', space=smem, size = 0x4, offset = 0x4, fixed_abs, tag = 'smem constant byte address 0x4 - core index']
  #allocation1 [shape = 'u32[144,128]{1,0:T(1,128)}', space=vmem, size = 0x12000, scoped, tag = 'internal scratch']
  %s0 = inlined_call_operand.vmem [shape: bf16[4,32,512], index: 0, kind: input, shape index: {}]
  %s1 = inlined_call_operand.vmem [shape: bf16[20,32], index: 1, kind: input, shape index: {}]
  %s2 = inlined_call_operand.vmem [shape: f32[20,512], index: 2, kind: output, shape index: {}]
  %s3 = sld [smem:[#allocation0]]
  $region98: #{model_forward.2} parent=0
    _
  %s5 = ssub.s32 1, %s3
  %s6 = scalar_select 0, %s5, %s3
  $region1: #{model_forward.2} parent=0
    #allocation2 [shape = 'u8[131072]{0}', space=vmem, size = 0x20000, scoped, tag = 'input window, operand 0']
    #allocation3 [shape = 'u8[49152]{0}', space=vmem, size = 0xc000, scoped, tag = 'output window, operand 0']
    loop: start=0, step=1, limit=4
    $region2: #{model_forward.2} parent=1 // loop_pre_header
      _
    $region3: #{model_forward.2} parent=1 // loop_header
      %s8 = sphi 0, %s12
      %p9 = scmp.ge.s32.totalorder %s8, 4
      %s18 = sphi 0, %s20
      %s21 = sphi 0, %s18
      %s22 = sphi 0, %s21
      %s38 = sphi 0, %s22
      %s42 = sphi 0, %s42
      %s44 = sphi 0, %s42
      %s45 = sphi 0, %s44
      %s59 = sphi 0, %s45
      %s65 = sphi 0, %s67
      %s68 = sphi 0, %s65
      %s69 = sphi 0, %s68
      %s85 = sphi 0, %s69
    $region4: #{model_forward.2} parent=1 // loop_header_branch
      %11 = sbr.rel (%p9) target = $region8
    $region5: #{model_forward.2} parent=1 // loop_body
      %s13 = ssub.s32 %s8, 1
      %s14 = ssub.s32 %s8, 2
      %s15 = sadd.s32 %s8, 1
      %s16 = ssub.s32 %s8, %s15
      %p17 = scmp.eq.s32.totalorder %s16, 0
      %s19 = sadd.s32 %s18, 1
      %s20 = scalar_select %p17, %s18, %s19
      %p23 = pneg %p17
      %p24 = scmp.eq.s32.totalorder %s8, 1
      %p25 = por %p23, %p24
      %p26 = scmp.ne.s32.totalorder %s18, %s21
      %p27 = scmp.eq.s32.totalorder %s8, 0
      %p28 = por %p26, %p27
      %p29 = scmp.ne.s32.totalorder %s18, %s21
      %p30 = scmp.eq.s32.totalorder %s13, 1
      %p31 = por %p29, %p30
      %p32 = scmp.ne.s32.totalorder %s21, %s22
      %p33 = scmp.eq.s32.totalorder %s13, 0
      %p34 = por %p32, %p33
      %p35 = scmp.ne.s32.totalorder %s21, %s22
      %p36 = scmp.eq.s32.totalorder %s14, 1
      %p37 = por %p35, %p36
      %p39 = scmp.ne.s32.totalorder %s22, %s38
      %p40 = scmp.eq.s32.totalorder %s14, 0
      %p41 = por %p39, %p40
      %s43 = sadd.s32 %s42, 1
      %p46 = scmp.eq.s32.totalorder %s8, 1
      %p47 = scmp.ne.s32.totalorder %s42, %s44
      %p48 = scmp.eq.s32.totalorder %s8, 0
      %p49 = por %p47, %p48
      %p50 = scmp.ne.s32.totalorder %s42, %s44
      %p51 = scmp.eq.s32.totalorder %s13, 1
      %p52 = por %p50, %p51
      %p53 = scmp.ne.s32.totalorder %s44, %s45
      %p54 = scmp.eq.s32.totalorder %s13, 0
      %p55 = por %p53, %p54
      %p56 = scmp.ne.s32.totalorder %s44, %s45
      %p57 = scmp.eq.s32.totalorder %s14, 1
      %p58 = por %p56, %p57
      %p60 = scmp.ne.s32.totalorder %s45, %s59
      %p61 = scmp.eq.s32.totalorder %s14, 0
      %p62 = por %p60, %p61
      %s63 = ssub.s32 %s8, %s15
      %p64 = scmp.eq.s32.totalorder %s63, 0
      %s66 = sadd.s32 %s65, 1
      %s67 = scalar_select %p64, %s65, %s66
      %p70 = pneg %p64
      %p71 = scmp.eq.s32.totalorder %s8, 1
      %p72 = por %p70, %p71
      %p73 = scmp.ne.s32.totalorder %s65, %s68
      %p74 = scmp.eq.s32.totalorder %s8, 0
      %p75 = por %p73, %p74
      %p76 = scmp.ne.s32.totalorder %s65, %s68
      %p77 = scmp.eq.s32.totalorder %s13, 1
      %p78 = por %p76, %p77
      %p79 = scmp.ne.s32.totalorder %s68, %s69
      %p80 = scmp.eq.s32.totalorder %s13, 0
      %p81 = por %p79, %p80
      %p82 = scmp.ne.s32.totalorder %s68, %s69
      %p83 = scmp.eq.s32.totalorder %s14, 1
      %p84 = por %p82, %p83
      %p86 = scmp.ne.s32.totalorder %s69, %s85
      %p87 = scmp.eq.s32.totalorder %s14, 0
      %p88 = por %p86, %p87
      %p89 = scmp.le.s32.totalorder 1, %s8
      %p90 = scmp.lt.s32.totalorder %s8, 3
      %p91 = pnand %p89, %p90
      %p92 = pneg %p91
      // Predicated region
      $region9: #{model_forward.2} parent=5 // pred_check
        _
      $region10: #{model_forward.2} parent=5 // pred_check_branch
        %94 = sbr.rel (%p91) target = $region12
      $region11: #{model_forward.2} parent=5 // pred_region
        %s95 = ssub.s32 %s8, 1
        // Predicated region
        $region13: #{model_forward.2} parent=11 // pred_check
          %p96 = pneg %p55
        $region14: #{model_forward.2} parent=11 // pred_check_branch
          %98 = sbr.rel (%p96) target = $region16
        $region15: #{model_forward.2} parent=11 // pred_region
          _
        $region16: #{model_forward.2} parent=11 // pred_fallthru
          _
      $region12: #{model_forward.2} parent=5 // pred_fallthru
        _
      %p99 = scmp.lt.s32.totalorder %s8, 2
      // Predicated region
      $region17: #{model_forward.2} parent=5 // pred_check
        %p100 = pneg %p99
      $region18: #{model_forward.2} parent=5 // pred_check_branch
        %102 = sbr.rel (%p100) target = $region20
      $region19: #{model_forward.2} parent=5 // pred_region
        // Predicated region
        $region21: #{model_forward.2} parent=19 // pred_check
          %p103 = pneg %p28
        $region22: #{model_forward.2} parent=19 // pred_check_branch
          %105 = sbr.rel (%p103) target = $region24
        $region23: #{model_forward.2} parent=19 // pred_region
          %s106 = sand.u32 %s18, 1
          %s107 = sand.u32 %s18, 1
          %s108 = smul.addr %s107, 128
          %s109 = scalar_lea.vmem [#allocation2], %s108
          %s110 = smul.u32 2, %s8
          %s111 = smul.addr %s110, 4
          %s112 = scalar_lea.vmem %s0, %s111
          // Predicated region
          $region25: #{model_forward.2} parent=23 // pred_check
            _
          $region26: #{model_forward.2} parent=23 // pred_check_branch
            %114 = sbr.rel (0) target = $region28
          $region27: #{model_forward.2} parent=23 // pred_region
            // Predicated region
            $region29: #{model_forward.2} parent=27 // pred_check
              _
            $region30: #{model_forward.2} parent=27 // pred_check_branch
              %116 = sbr.rel (0) target = $region32
            $region31: #{model_forward.2} parent=27 // pred_region
              // Predicated region
              $region44: #{model_forward.2} parent=31 // pred_check
                _
              $region45: #{model_forward.2} parent=31 // pred_check_branch
                %162 = sbr.rel (0) target = $region47
              $region46: #{model_forward.2} parent=31 // pred_region
                loop: start=0, step=1, limit=1
                $region48: #{model_forward.2} parent=46 // loop_pre_header
                  _
                $region49: #{model_forward.2} parent=46 // loop_header
                  %s164 = sphi 0, %s168
                  %p165 = scmp.ge.s32.totalorder %s164, 1
                  %s169 = sphi %s112, %s112
                  %s170 = sphi %s109, %s109
                $region50: #{model_forward.2} parent=46 // loop_header_branch
                  %167 = sbr.rel (%p165) target = $region54
                $region51: #{model_forward.2} parent=46 // loop_body
                  %v171 = vld [vmem:[%s169] sm:$0xff]
                  %172 = vst [vmem:[%s170] sm:$0xff] %v171
                  %v173 = vld [vmem:[%s169 + $0x10] sm:$0xff]
                  %174 = vst [vmem:[%s170 + $0x8] sm:$0xff] %v173
                  %v175 = vld [vmem:[%s169 + $0x20] sm:$0xff]
                  %176 = vst [vmem:[%s170 + $0x10] sm:$0xff] %v175
                  %v177 = vld [vmem:[%s169 + $0x30] sm:$0xff]
                  %178 = vst [vmem:[%s170 + $0x18] sm:$0xff] %v177
                  %v179 = vld [vmem:[%s169 + $0x40] sm:$0xff]
                  %180 = vst [vmem:[%s170 + $0x20] sm:$0xff] %v179
                  %v181 = vld [vmem:[%s169 + $0x50] sm:$0xff]
                  %182 = vst [vmem:[%s170 + $0x28] sm:$0xff] %v181
                  %v183 = vld [vmem:[%s169 + $0x60] sm:$0xff]
                  %184 = vst [vmem:[%s170 + $0x30] sm:$0xff] %v183
                  %v185 = vld [vmem:[%s169 + $0x70] sm:$0xff]
                  %186 = vst [vmem:[%s170 + $0x38] sm:$0xff] %v185
                  %v187 = vld [vmem:[%s169 + $0x80] sm:$0xff]
                  %188 = vst [vmem:[%s170 + $0x40] sm:$0xff] %v187
                  %v189 = vld [vmem:[%s169 + $0x90] sm:$0xff]
                  %190 = vst [vmem:[%s170 + $0x48] sm:$0xff] %v189
                  %v191 = vld [vmem:[%s169 + $0xa0] sm:$0xff]
                  %192 = vst [vmem:[%s170 + $0x50] sm:$0xff] %v191
                  %v193 = vld [vmem:[%s169 + $0xb0] sm:$0xff]
                  %194 = vst [vmem:[%s170 + $0x58] sm:$0xff] %v193
                  %v195 = vld [vmem:[%s169 + $0xc0] sm:$0xff]
                  %196 = vst [vmem:[%s170 + $0x60] sm:$0xff] %v195
                  %v197 = vld [vmem:[%s169 + $0xd0] sm:$0xff]
                  %198 = vst [vmem:[%s170 + $0x68] sm:$0xff] %v197
                  %v199 = vld [vmem:[%s169 + $0xe0] sm:$0xff]
                  %200 = vst [vmem:[%s170 + $0x70] sm:$0xff] %v199
                  %v201 = vld [vmem:[%s169 + $0xf0] sm:$0xff]
                  %202 = vst [vmem:[%s170 + $0x78] sm:$0xff] %v201
                $region52: #{model_forward.2} parent=46 // loop_footer
                  %s168 = sadd.s32 1, %s164
                $region53: #{model_forward.2} parent=46 // loop_footer_branch
                  %163 = sbr.rel target = $region49
                $region54: #{model_forward.2} parent=46 // loop_exit
                  _
              $region47: #{model_forward.2} parent=31 // pred_fallthru
                _
              // Predicated region
              $region55: #{model_forward.2} parent=31 // pred_check
                _
              $region56: #{model_forward.2} parent=31 // pred_check_branch
                %204 = sbr.rel target = $region58
              $region57: #{model_forward.2} parent=31 // pred_region
                _
              $region58: #{model_forward.2} parent=31 // pred_fallthru
                _
            $region32: #{model_forward.2} parent=27 // pred_fallthru
              _
            // Predicated region
            $region33: #{model_forward.2} parent=27 // pred_check
              _
            $region34: #{model_forward.2} parent=27 // pred_check_branch
              %118 = sbr.rel target = $region36
            $region35: #{model_forward.2} parent=27 // pred_region
              %s120 = ssub.s32 256, 1
              loop: start=0, step=1, limit=1
              $region37: #{model_forward.2} parent=35 // loop_pre_header
                _
              $region38: #{model_forward.2} parent=35 // loop_header
                %s122 = sphi 0, %s126
                %p123 = scmp.ge.s32.totalorder %s122, 1
                %s127 = sphi %s112, %s112
                %s128 = sphi %s109, %s109
              $region39: #{model_forward.2} parent=35 // loop_header_branch
                %125 = sbr.rel (%p123) target = $region43
              $region40: #{model_forward.2} parent=35 // loop_body
                %v129 = vld [vmem:[%s127] sm:%s120]
                %130 = vst [vmem:[%s128] sm:%s120] %v129
                %v131 = vld [vmem:[%s127 + $0x10] sm:%s120]
                %132 = vst [vmem:[%s128 + $0x8] sm:%s120] %v131
                %v133 = vld [vmem:[%s127 + $0x20] sm:%s120]
                %134 = vst [vmem:[%s128 + $0x10] sm:%s120] %v133
                %v135 = vld [vmem:[%s127 + $0x30] sm:%s120]
                %136 = vst [vmem:[%s128 + $0x18] sm:%s120] %v135
                %v137 = vld [vmem:[%s127 + $0x40] sm:%s120]
                %138 = vst [vmem:[%s128 + $0x20] sm:%s120] %v137
                %v139 = vld [vmem:[%s127 + $0x50] sm:%s120]
                %140 = vst [vmem:[%s128 + $0x28] sm:%s120] %v139
                %v141 = vld [vmem:[%s127 + $0x60] sm:%s120]
                %142 = vst [vmem:[%s128 + $0x30] sm:%s120] %v141
                %v143 = vld [vmem:[%s127 + $0x70] sm:%s120]
                %144 = vst [vmem:[%s128 + $0x38] sm:%s120] %v143
                %v145 = vld [vmem:[%s127 + $0x80] sm:%s120]
                %146 = vst [vmem:[%s128 + $0x40] sm:%s120] %v145
                %v147 = vld [vmem:[%s127 + $0x90] sm:%s120]
                %148 = vst [vmem:[%s128 + $0x48] sm:%s120] %v147
                %v149 = vld [vmem:[%s127 + $0xa0] sm:%s120]
                %150 = vst [vmem:[%s128 + $0x50] sm:%s120] %v149
                %v151 = vld [vmem:[%s127 + $0xb0] sm:%s120]
                %152 = vst [vmem:[%s128 + $0x58] sm:%s120] %v151
                %v153 = vld [vmem:[%s127 + $0xc0] sm:%s120]
                %154 = vst [vmem:[%s128 + $0x60] sm:%s120] %v153
                %v155 = vld [vmem:[%s127 + $0xd0] sm:%s120]
                %156 = vst [vmem:[%s128 + $0x68] sm:%s120] %v155
                %v157 = vld [vmem:[%s127 + $0xe0] sm:%s120]
                %158 = vst [vmem:[%s128 + $0x70] sm:%s120] %v157
                %v159 = vld [vmem:[%s127 + $0xf0] sm:%s120]
                %160 = vst [vmem:[%s128 + $0x78] sm:%s120] %v159
              $region41: #{model_forward.2} parent=35 // loop_footer
                %s126 = sadd.s32 1, %s122
              $region42: #{model_forward.2} parent=35 // loop_footer_branch
                %121 = sbr.rel target = $region38
              $region43: #{model_forward.2} parent=35 // loop_exit
                _
            $region36: #{model_forward.2} parent=27 // pred_fallthru
              _
          $region28: #{model_forward.2} parent=23 // pred_fallthru
            _
          %205 = vnop
        $region24: #{model_forward.2} parent=19 // pred_fallthru
          _
      $region20: #{model_forward.2} parent=5 // pred_fallthru
        _
      %p206 = scmp.le.s32.totalorder 1, %s8
      %p207 = scmp.lt.s32.totalorder %s8, 3
      %p208 = pnand %p206, %p207
      %p209 = pneg %p208
      // Predicated region
      $region59: #{model_forward.2} parent=5 // pred_check
        _
      $region60: #{model_forward.2} parent=5 // pred_check_branch
        %211 = sbr.rel (%p208) target = $region62
      $region61: #{model_forward.2} parent=5 // pred_region
        %s212 = ssub.s32 %s8, 1
        %s213 = sand.u32 %s21, 1
        %s214 = sand.u32 %s21, 1
        %s215 = smul.addr %s214, 128
        %s216 = scalar_lea.vmem [#allocation2], %s215
        // Predicated region
        $region63: #{model_forward.2} parent=61 // pred_check
          %p217 = pneg %p34
        $region64: #{model_forward.2} parent=61 // pred_check_branch
          %219 = sbr.rel (%p217) target = $region66
        $region65: #{model_forward.2} parent=61 // pred_region
          _
        $region66: #{model_forward.2} parent=61 // pred_fallthru
          _
        %s220 = sand.u32 %s21, 1
        %s221 = sand.u32 %s21, 1
        %s222 = smul.addr %s221, 128
        %s223 = scalar_lea.vmem [#allocation2], %s222
        %p224 = pneg %p34
        %p225 = pneg %p31
        %p226 = pneg %p55
        %p227 = pneg %p52
        %p228 = pneg %p81
        %p229 = pneg %p78
        %s230 = sand.u32 %s68, 1
        %s231 = sand.u32 %s68, 1
        %s232 = smul.addr %s231, 48
        %s233 = scalar_lea.vmem [#allocation3], %s232
        %s234 = smul.u32 2, %s13
        %s235 = smul.u32 2, %s13
        %v237 = vld [vmem:[%s1] sm:$0xf]
        %v238 = vld [vmem:[%s1 + $0x4] sm:$0xf]
        %v239 = vld [vmem:[%s1 + $0x8] sm:$0x3]
        %v240 = vld [vmem:[%s216] sm:$0xff]
        %v241 = vld [vmem:[%s216 + $0x8] sm:$0xff]
        %v242 = vld [vmem:[%s216 + $0x10] sm:$0xff]
        %v243 = vld [vmem:[%s216 + $0x18] sm:$0xff]
        %v247 = vunpack.c.l.b16 %v237
        %v248 = vunpack.c.l.b16 %v238
        %v249 = vunpack.c.l.b16 %v239
        %v250 = vpack.c.b16 %v248, %v247
        %v251 = vpack.c.b16 %v249, %v249
        %v256 = vunpack.c.l.b16 %v240
        %v257 = vunpack.c.h.b16 %v240
        %v258 = vunpack.c.l.b16 %v241
        %v259 = vunpack.c.h.b16 %v241
        %v260 = vunpack.c.l.b16 %v242
        %v261 = vunpack.c.h.b16 %v242
        %v262 = vunpack.c.l.b16 %v243
        %v263 = vunpack.c.h.b16 %v243
        %v264 = vpack.c.b16 %v258, %v256
        %v265 = vpack.c.b16 %v259, %v257
        %v266 = vpack.c.b16 %v262, %v260
        %v267 = vpack.c.b16 %v263, %v261
        %vm272 = vcmask 261120
        %v274 = vsel %vm272, %v250, 0
        %v277 = vsel %vm272, %v251, 0
        %279 = vmatprep.subr.bf16.mxu0 0
        %280 = vmatpush1.bf16.msra.mxu0 0
        %281 = vmatprep.subr.bf16.mxu0 0
        %282 = vmatpush1.bf16.msra.mxu0 0
        %283 = vmatprep.subr.bf16.mxu0 0
        %284 = vmatpush1.bf16.msra.mxu0 0
        %285 = vmatprep.subr.bf16.mxu0 0
        %286 = vmatpush1.bf16.msra.mxu0 0
        %287 = vmatprep.subr.bf16.mxu0 0
        %288 = vmatpush1.bf16.msra.mxu0 0
        %289 = vmatprep.subr.bf16.mxu0 0
        %290 = vmatpush1.bf16.msra.mxu0 0
        %291 = vmatprep.subr.bf16.mxu0 %v267
        %292 = vmatpush1.bf16.msra.mxu0 %v266
        %293 = vmatprep.subr.bf16.mxu0 %v265
        %294 = vmatpush1.bf16.msra.mxu0 %v264
        %295 = vmatprep.subr.bf16.mxu0 0
        %296 = vmatpush2.bf16.msra.mxu0 0
        %297 = vmatprep.subr.bf16.mxu0 0
        %298 = vmatpush2.bf16.msra.mxu0 0
        %299 = vmatprep.subr.bf16.mxu0 0
        %300 = vmatpush2.bf16.msra.mxu0 0
        %301 = vmatprep.subr.bf16.mxu0 0
        %302 = vmatpush2.bf16.msra.mxu0 0
        %303 = vmatprep.subr.bf16.mxu0 0
        %304 = vmatpush2.bf16.msra.mxu0 0
        %305 = vmatprep.subr.bf16.mxu0 0
        %306 = vmatpush2.bf16.msra.mxu0 0
        %307 = vmatprep.subr.bf16.mxu0 0
        %308 = vmatpush2.bf16.msra.mxu0 0
        %309 = vmatprep.subr.bf16.mxu0 0
        %310 = vmatpush2.bf16.msra.mxu0 0
        %311 = vmatprep.mubr.bf16.mxu0 0
        %312 = vmatmul.mubr.bf16.gmra.mxu0 %v274
        %v313 = vpop.f32.mrf.mxu0
        %v314 = vadd.f32 0.0, %v313
        %v315 = vpop.f32.mrf.mxu0
        %v316 = vadd.f32 0.0, %v315
        %v317 = vpop.f32.mrf.mxu0
        %v318 = vadd.f32 0.0, %v317
        %v319 = vpop.f32.mrf.mxu0
        %v320 = vadd.f32 0.0, %v319
        %321 = vmatprep.mubr.bf16.mxu0 0
        %322 = vmatmul.mubr.bf16.gmra.mxu0 %v277
        %v323 = vpop.f32.mrf.mxu0
        %v324 = vadd.f32 0.0, %v323
        %v325 = vpop.f32.mrf.mxu0
        %v326 = vadd.f32 0.0, %v325
        %v327 = vpop.f32.mrf.mxu0
        %v328 = vpop.f32.mrf.mxu0
        %329 = vdwg.mxu0
        %s330 = scalar_lea.vmem %s216, 32 [#allocation2]
        %v331 = vld [vmem:[%s330] sm:$0xff]
        %v332 = vld [vmem:[%s330 + $0x8] sm:$0xff]
        %v333 = vld [vmem:[%s330 + $0x10] sm:$0xff]
        %v334 = vld [vmem:[%s330 + $0x18] sm:$0xff]
        %v339 = vunpack.c.l.b16 %v331
        %v340 = vunpack.c.h.b16 %v331
        %v341 = vunpack.c.l.b16 %v332
        %v342 = vunpack.c.h.b16 %v332
        %v343 = vunpack.c.l.b16 %v333
        %v344 = vunpack.c.h.b16 %v333
        %v345 = vunpack.c.l.b16 %v334
        %v346 = vunpack.c.h.b16 %v334
        %v347 = vpack.c.b16 %v341, %v339
        %v348 = vpack.c.b16 %v342, %v340
        %v349 = vpack.c.b16 %v345, %v343
        %v350 = vpack.c.b16 %v346, %v344
        %355 = vmatprep.subr.bf16.mxu0 0
        %356 = vmatpush1.bf16.msra.mxu0 0
        %357 = vmatprep.subr.bf16.mxu0 0
        %358 = vmatpush1.bf16.msra.mxu0 0
        %359 = vmatprep.subr.bf16.mxu0 0
        %360 = vmatpush1.bf16.msra.mxu0 0
        %361 = vmatprep.subr.bf16.mxu0 0
        %362 = vmatpush1.bf16.msra.mxu0 0
        %363 = vmatprep.subr.bf16.mxu0 0
        %364 = vmatpush1.bf16.msra.mxu0 0
        %365 = vmatprep.subr.bf16.mxu0 0
        %366 = vmatpush1.bf16.msra.mxu0 0
        %367 = vmatprep.subr.bf16.mxu0 %v350
        %368 = vmatpush1.bf16.msra.mxu0 %v349
        %369 = vmatprep.subr.bf16.mxu0 %v348
        %370 = vmatpush1.bf16.msra.mxu0 %v347
        %371 = vmatprep.subr.bf16.mxu0 0
        %372 = vmatpush2.bf16.msra.mxu0 0
        %373 = vmatprep.subr.bf16.mxu0 0
        %374 = vmatpush2.bf16.msra.mxu0 0
        %375 = vmatprep.subr.bf16.mxu0 0
        %376 = vmatpush2.bf16.msra.mxu0 0
        %377 = vmatprep.subr.bf16.mxu0 0
        %378 = vmatpush2.bf16.msra.mxu0 0
        %379 = vmatprep.subr.bf16.mxu0 0
        %380 = vmatpush2.bf16.msra.mxu0 0
        %381 = vmatprep.subr.bf16.mxu0 0
        %382 = vmatpush2.bf16.msra.mxu0 0
        %383 = vmatprep.subr.bf16.mxu0 0
        %384 = vmatpush2.bf16.msra.mxu0 0
        %385 = vmatprep.subr.bf16.mxu0 0
        %386 = vmatpush2.bf16.msra.mxu0 0
        %387 = vmatprep.mubr.bf16.mxu0 0
        %388 = vmatmul.mubr.bf16.gmra.mxu0 %v274
        %v389 = vpop.f32.mrf.mxu0
        %v390 = vadd.f32 0.0, %v389
        %v391 = vpop.f32.mrf.mxu0
        %v392 = vadd.f32 0.0, %v391
        %v393 = vpop.f32.mrf.mxu0
        %v394 = vadd.f32 0.0, %v393
        %v395 = vpop.f32.mrf.mxu0
        %v396 = vadd.f32 0.0, %v395
        %397 = vmatprep.mubr.bf16.mxu0 0
        %398 = vmatmul.mubr.bf16.gmra.mxu0 %v277
        %v399 = vpop.f32.mrf.mxu0
        %v400 = vadd.f32 0.0, %v399
        %v401 = vpop.f32.mrf.mxu0
        %v402 = vadd.f32 0.0, %v401
        %v403 = vpop.f32.mrf.mxu0
        %v404 = vpop.f32.mrf.mxu0
        %405 = vdwg.mxu0
        %v406 = vmax.f32 %v314, %v390
        %v407 = vmax.f32 %v316, %v392
        %v408 = vmax.f32 %v318, %v394
        %v409 = vmax.f32 %v320, %v396
        %v410 = vmax.f32 %v324, %v400
        %v411 = vmax.f32 %v326, %v402
        %s412 = scalar_lea.vmem %s216, 64 [#allocation2]
        %v413 = vld [vmem:[%s412] sm:$0xff]
        %v414 = vld [vmem:[%s412 + $0x8] sm:$0xff]
        %v415 = vld [vmem:[%s412 + $0x10] sm:$0xff]
        %v416 = vld [vmem:[%s412 + $0x18] sm:$0xff]
        %v421 = vunpack.c.l.b16 %v413
        %v422 = vunpack.c.h.b16 %v413
        %v423 = vunpack.c.l.b16 %v414
        %v424 = vunpack.c.h.b16 %v414
        %v425 = vunpack.c.l.b16 %v415
        %v426 = vunpack.c.h.b16 %v415
        %v427 = vunpack.c.l.b16 %v416
        %v428 = vunpack.c.h.b16 %v416
        %v429 = vpack.c.b16 %v423, %v421
        %v430 = vpack.c.b16 %v424, %v422
        %v431 = vpack.c.b16 %v427, %v425
        %v432 = vpack.c.b16 %v428, %v426
        %437 = vmatprep.subr.bf16.mxu0 0
        %438 = vmatpush1.bf16.msra.mxu0 0
        %439 = vmatprep.subr.bf16.mxu0 0
        %440 = vmatpush1.bf16.msra.mxu0 0
        %441 = vmatprep.subr.bf16.mxu0 0
        %442 = vmatpush1.bf16.msra.mxu0 0
        %443 = vmatprep.subr.bf16.mxu0 0
        %444 = vmatpush1.bf16.msra.mxu0 0
        %445 = vmatprep.subr.bf16.mxu0 0
        %446 = vmatpush1.bf16.msra.mxu0 0
        %447 = vmatprep.subr.bf16.mxu0 0
        %448 = vmatpush1.bf16.msra.mxu0 0
        %449 = vmatprep.subr.bf16.mxu0 %v432
        %450 = vmatpush1.bf16.msra.mxu0 %v431
        %451 = vmatprep.subr.bf16.mxu0 %v430
        %452 = vmatpush1.bf16.msra.mxu0 %v429
        %453 = vmatprep.subr.bf16.mxu0 0
        %454 = vmatpush2.bf16.msra.mxu0 0
        %455 = vmatprep.subr.bf16.mxu0 0
        %456 = vmatpush2.bf16.msra.mxu0 0
        %457 = vmatprep.subr.bf16.mxu0 0
        %458 = vmatpush2.bf16.msra.mxu0 0
        %459 = vmatprep.subr.bf16.mxu0 0
        %460 = vmatpush2.bf16.msra.mxu0 0
        %461 = vmatprep.subr.bf16.mxu0 0
        %462 = vmatpush2.bf16.msra.mxu0 0
        %463 = vmatprep.subr.bf16.mxu0 0
        %464 = vmatpush2.bf16.msra.mxu0 0
        %465 = vmatprep.subr.bf16.mxu0 0
        %466 = vmatpush2.bf16.msra.mxu0 0
        %467 = vmatprep.subr.bf16.mxu0 0
        %468 = vmatpush2.bf16.msra.mxu0 0
        %469 = vmatprep.mubr.bf16.mxu0 0
        %470 = vmatmul.mubr.bf16.gmra.mxu0 %v274
        %v471 = vpop.f32.mrf.mxu0
        %v472 = vadd.f32 0.0, %v471
        %v473 = vpop.f32.mrf.mxu0
        %v474 = vadd.f32 0.0, %v473
        %v475 = vpop.f32.mrf.mxu0
        %v476 = vadd.f32 0.0, %v475
        %v477 = vpop.f32.mrf.mxu0
        %v478 = vadd.f32 0.0, %v477
        %479 = vmatprep.mubr.bf16.mxu0 0
        %480 = vmatmul.mubr.bf16.gmra.mxu0 %v277
        %v481 = vpop.f32.mrf.mxu0
        %v482 = vadd.f32 0.0, %v481
        %v483 = vpop.f32.mrf.mxu0
        %v484 = vadd.f32 0.0, %v483
        %v485 = vpop.f32.mrf.mxu0
        %v486 = vpop.f32.mrf.mxu0
        %487 = vdwg.mxu0
        %v488 = vmax.f32 %v406, %v472
        %v489 = vmax.f32 %v407, %v474
        %v490 = vmax.f32 %v408, %v476
        %v491 = vmax.f32 %v409, %v478
        %v492 = vmax.f32 %v410, %v482
        %v493 = vmax.f32 %v411, %v484
        %s494 = scalar_lea.vmem %s216, 96 [#allocation2]
        %v495 = vld [vmem:[%s494] sm:$0xff]
        %v496 = vld [vmem:[%s494 + $0x8] sm:$0xff]
        %v497 = vld [vmem:[%s494 + $0x10] sm:$0xff]
        %v498 = vld [vmem:[%s494 + $0x18] sm:$0xff]
        %v503 = vunpack.c.l.b16 %v495
        %v504 = vunpack.c.h.b16 %v495
        %v505 = vunpack.c.l.b16 %v496
        %v506 = vunpack.c.h.b16 %v496
        %v507 = vunpack.c.l.b16 %v497
        %v508 = vunpack.c.h.b16 %v497
        %v509 = vunpack.c.l.b16 %v498
        %v510 = vunpack.c.h.b16 %v498
        %v511 = vpack.c.b16 %v505, %v503
        %v512 = vpack.c.b16 %v506, %v504
        %v513 = vpack.c.b16 %v509, %v507
        %v514 = vpack.c.b16 %v510, %v508
        %519 = vmatprep.subr.bf16.mxu0 0
        %520 = vmatpush1.bf16.msra.mxu0 0
        %521 = vmatprep.subr.bf16.mxu0 0
        %522 = vmatpush1.bf16.msra.mxu0 0
        %523 = vmatprep.subr.bf16.mxu0 0
        %524 = vmatpush1.bf16.msra.mxu0 0
        %525 = vmatprep.subr.bf16.mxu0 0
        %526 = vmatpush1.bf16.msra.mxu0 0
        %527 = vmatprep.subr.bf16.mxu0 0
        %528 = vmatpush1.bf16.msra.mxu0 0
        %529 = vmatprep.subr.bf16.mxu0 0
        %530 = vmatpush1.bf16.msra.mxu0 0
        %531 = vmatprep.subr.bf16.mxu0 %v514
        %532 = vmatpush1.bf16.msra.mxu0 %v513
        %533 = vmatprep.subr.bf16.mxu0 %v512
        %534 = vmatpush1.bf16.msra.mxu0 %v511
        %535 = vmatprep.subr.bf16.mxu0 0
        %536 = vmatpush2.bf16.msra.mxu0 0
        %537 = vmatprep.subr.bf16.mxu0 0
        %538 = vmatpush2.bf16.msra.mxu0 0
        %539 = vmatprep.subr.bf16.mxu0 0
        %540 = vmatpush2.bf16.msra.mxu0 0
        %541 = vmatprep.subr.bf16.mxu0 0
        %542 = vmatpush2.bf16.msra.mxu0 0
        %543 = vmatprep.subr.bf16.mxu0 0
        %544 = vmatpush2.bf16.msra.mxu0 0
        %545 = vmatprep.subr.bf16.mxu0 0
        %546 = vmatpush2.bf16.msra.mxu0 0
        %547 = vmatprep.subr.bf16.mxu0 0
        %548 = vmatpush2.bf16.msra.mxu0 0
        %549 = vmatprep.subr.bf16.mxu0 0
        %550 = vmatpush2.bf16.msra.mxu0 0
        %551 = vmatprep.mubr.bf16.mxu0 0
        %552 = vmatmul.mubr.bf16.gmra.mxu0 %v274
        %v553 = vpop.f32.mrf.mxu0
        %v554 = vadd.f32 0.0, %v553
        %v555 = vpop.f32.mrf.mxu0
        %v556 = vadd.f32 0.0, %v555
        %v557 = vpop.f32.mrf.mxu0
        %v558 = vadd.f32 0.0, %v557
        %v559 = vpop.f32.mrf.mxu0
        %v560 = vadd.f32 0.0, %v559
        %561 = vmatprep.mubr.bf16.mxu0 0
        %562 = vmatmul.mubr.bf16.gmra.mxu0 %v277
        %v563 = vpop.f32.mrf.mxu0
        %v564 = vadd.f32 0.0, %v563
        %v565 = vpop.f32.mrf.mxu0
        %v566 = vadd.f32 0.0, %v565
        %v567 = vpop.f32.mrf.mxu0
        %v568 = vpop.f32.mrf.mxu0
        %569 = vdwg.mxu0
        %v570 = vmax.f32 %v488, %v554
        %v571 = vmax.f32 %v489, %v556
        %v572 = vmax.f32 %v490, %v558
        %v573 = vmax.f32 %v491, %v560
        %v574 = vmax.f32 %v492, %v564
        %v575 = vmax.f32 %v493, %v566
        %v576 = vmax.f32 %v570, 0.0
        %v577 = vmax.f32 %v571, 0.0
        %v578 = vmax.f32 %v572, 0.0
        %v579 = vmax.f32 %v573, 0.0
        %v580 = vmax.f32 %v574, 0.0
        %v581 = vmax.f32 %v575, 0.0
        %582 = vst [vmem:[%s233] sm:$0xff] %v576
        %583 = vst [vmem:[%s233 + $0x8] sm:$0xff] %v577
        %584 = vst [vmem:[%s233 + $0x10] sm:$0xff] %v578
        %585 = vst [vmem:[%s233 + $0x18] sm:$0xff] %v579
        %586 = vst [vmem:[%s233 + $0x20] sm:$0xf] %v580
        %587 = vst [vmem:[%s233 + $0x28] sm:$0xf] %v581
        %s588 = sand.u32 %s68, 1
        %s589 = sand.u32 %s68, 1
        %s590 = smul.addr %s589, 48
        %s591 = scalar_lea.vmem [#allocation3], %s590
        // Predicated region
        $region67: #{model_forward.2} parent=61 // pred_check
          %p592 = pneg %p78
        $region68: #{model_forward.2} parent=61 // pred_check_branch
          %594 = sbr.rel (%p592) target = $region70
        $region69: #{model_forward.2} parent=61 // pred_region
          %s595 = smul.u32 2, %s13
          %s596 = smul.addr %s595, 8
          %s597 = scalar_lea.vmem %s2, %s596
          // Predicated region
          $region71: #{model_forward.2} parent=69 // pred_check
            _
          $region72: #{model_forward.2} parent=69 // pred_check_branch
            %599 = sbr.rel (0) target = $region74
          $region73: #{model_forward.2} parent=69 // pred_region
            // Predicated region
            $region75: #{model_forward.2} parent=73 // pred_check
              _
            $region76: #{model_forward.2} parent=73 // pred_check_branch
              %601 = sbr.rel (0) target = $region78
            $region77: #{model_forward.2} parent=73 // pred_region
              loop: start=0, step=1, limit=1
              $region79: #{model_forward.2} parent=77 // loop_pre_header
                _
              $region80: #{model_forward.2} parent=77 // loop_header
                %s603 = sphi 0, %s607
                %p604 = scmp.ge.s32.totalorder %s603, 1
                %s608 = sphi %s591, %s591
                %s609 = sphi %s597, %s597
              $region81: #{model_forward.2} parent=77 // loop_header_branch
                %606 = sbr.rel (%p604) target = $region85
              $region82: #{model_forward.2} parent=77 // loop_body
                %v610 = vld [vmem:[%s608] sm:$0xff]
                %611 = vst [vmem:[%s609] sm:$0xff] %v610
                %v612 = vld [vmem:[%s608 + $0x8] sm:$0xff]
                %613 = vst [vmem:[%s609 + $0x8] sm:$0xff] %v612
                %v614 = vld [vmem:[%s608 + $0x10] sm:$0xff]
                %615 = vst [vmem:[%s609 + $0x20] sm:$0xff] %v614
                %v616 = vld [vmem:[%s608 + $0x18] sm:$0xff]
                %617 = vst [vmem:[%s609 + $0x28] sm:$0xff] %v616
                %v618 = vld [vmem:[%s608 + $0x20] sm:$0xff]
                %619 = vst [vmem:[%s609 + $0x40] sm:$0xff] %v618
                %v620 = vld [vmem:[%s608 + $0x28] sm:$0xff]
                %621 = vst [vmem:[%s609 + $0x48] sm:$0xff] %v620
              $region83: #{model_forward.2} parent=77 // loop_footer
                %s607 = sadd.s32 1, %s603
              $region84: #{model_forward.2} parent=77 // loop_footer_branch
                %602 = sbr.rel target = $region80
              $region85: #{model_forward.2} parent=77 // loop_exit
                _
            $region78: #{model_forward.2} parent=73 // pred_fallthru
              _
            // Predicated region
            $region86: #{model_forward.2} parent=73 // pred_check
              _
            $region87: #{model_forward.2} parent=73 // pred_check_branch
              %623 = sbr.rel target = $region89
            $region88: #{model_forward.2} parent=73 // pred_region
              _
            $region89: #{model_forward.2} parent=73 // pred_fallthru
              _
          $region74: #{model_forward.2} parent=69 // pred_fallthru
            _
          %624 = vnop
        $region70: #{model_forward.2} parent=61 // pred_fallthru
          _
      $region62: #{model_forward.2} parent=5 // pred_fallthru
        _
      %p625 = scmp.le.s32.totalorder 2, %s8
      // Predicated region
      $region90: #{model_forward.2} parent=5 // pred_check
        %p626 = pneg %p625
      $region91: #{model_forward.2} parent=5 // pred_check_branch
        %628 = sbr.rel (%p626) target = $region93
      $region92: #{model_forward.2} parent=5 // pred_region
        %s629 = ssub.s32 %s8, 2
        // Predicated region
        $region94: #{model_forward.2} parent=92 // pred_check
          %p630 = pneg %p84
        $region95: #{model_forward.2} parent=92 // pred_check_branch
          %632 = sbr.rel (%p630) target = $region97
        $region96: #{model_forward.2} parent=92 // pred_region
          %s633 = sand.u32 %s69, 1
          %s634 = sand.u32 %s69, 1
          %s635 = smul.addr %s634, 48
          %s636 = scalar_lea.vmem [#allocation3], %s635
        $region97: #{model_forward.2} parent=92 // pred_fallthru
          _
      $region93: #{model_forward.2} parent=5 // pred_fallthru
        _
    $region6: #{model_forward.2} parent=1 // loop_footer
      %s12 = sadd.s32 1, %s8
    $region7: #{model_forward.2} parent=1 // loop_footer_branch
      %7 = sbr.rel target = $region3
    $region8: #{model_forward.2} parent=1 // loop_exit
      _

// kernel: model_forward.3
$region0: #{model_forward.3}
  #allocation0 [shape = 'u32[]', space=smem, size = 0x4, offset = 0x4, fixed_abs, tag = 'smem constant byte address 0x4 - core index']
  #allocation1 [shape = 'u32[144,128]{1,0:T(1,128)}', space=vmem, size = 0x12000, scoped, tag = 'internal scratch']
  %s0 = inlined_call_operand.vmem [shape: f32[20,2,256], index: 0, kind: input, shape index: {}]
  %s1 = inlined_call_operand.vmem [shape: f32[20,256,10], index: 1, kind: input, shape index: {}]
  %s2 = inlined_call_operand.vmem [shape: f32[1,10], index: 2, kind: input, shape index: {}]
  %s3 = inlined_call_operand.hbm [shape: f32[2,10], index: 3, kind: output, shape index: {}]
  %s4 = sld [smem:[#allocation0]]
  $region22: #{model_forward.3} parent=0
    _
  %s6 = ssub.s32 1, %s4
  %s7 = scalar_select 0, %s6, %s4
  $region1: #{model_forward.3} parent=0
    #allocation2 [shape = 'u8[1024]{0}', space=vmem, size = 0x400, scoped, tag = 'output window, operand 0, single buffered']
    #allocation3 [shape = 's32[1]{0}', space=sflag, size = 0x4, scoped, tag = 'scoped memory for model_forward.3']
    %8 = vsyncpa [#allocation3], 0
    // Predicated region
    $region2: #{model_forward.3} parent=1 // pred_check
      _
    $region3: #{model_forward.3} parent=1 // pred_check_branch
      %10 = sbr.rel (0) target = $region5
    $region4: #{model_forward.3} parent=1 // pred_region
      _
    $region5: #{model_forward.3} parent=1 // pred_fallthru
      _
    // Predicated region
    $region6: #{model_forward.3} parent=1 // pred_check
      _
    $region7: #{model_forward.3} parent=1 // pred_check_branch
      %12 = sbr.rel (0) target = $region9
    $region8: #{model_forward.3} parent=1 // pred_region
      _
    $region9: #{model_forward.3} parent=1 // pred_fallthru
      _
    // Predicated region
    $region10: #{model_forward.3} parent=1 // pred_check
      _
    $region11: #{model_forward.3} parent=1 // pred_check_branch
      %14 = sbr.rel (0) target = $region13
    $region12: #{model_forward.3} parent=1 // pred_region
      _
    $region13: #{model_forward.3} parent=1 // pred_fallthru
      _
    %v15 = vld [vmem:[%s0] sm:$0xf]
    %v16 = vld [vmem:[%s1] sm:$0xff]
    %v17 = vld [vmem:[%s1 + $0x8] sm:$0xff]
    %v18 = vld [vmem:[%s1 + $0x10] sm:$0xff]
    %v19 = vld [vmem:[%s1 + $0x18] sm:$0xff]
    %v20 = vld [vmem:[%s1 + $0x20] sm:$0xff]
    %v21 = vld [vmem:[%s1 + $0x28] sm:$0xff]
    %v22 = vld [vmem:[%s1 + $0x30] sm:$0xff]
    %v23 = vld [vmem:[%s1 + $0x38] sm:$0xff]
    %v24 = vld [vmem:[%s1 + $0x40] sm:$0xff]
    %v25 = vld [vmem:[%s1 + $0x48] sm:$0xff]
    %v26 = vld [vmem:[%s1 + $0x50] sm:$0xff]
    %v27 = vld [vmem:[%s1 + $0x58] sm:$0xff]
    %v28 = vld [vmem:[%s1 + $0x60] sm:$0xff]
    %v29 = vld [vmem:[%s1 + $0x68] sm:$0xff]
    %v30 = vld [vmem:[%s1 + $0x70] sm:$0xff]
    %v31 = vld [vmem:[%s1 + $0x78] sm:$0xff]
    %v32 = vld [vmem:[%s1 + $0x80] sm:$0xff]
    %v33 = vld [vmem:[%s1 + $0x88] sm:$0xff]
    %v34 = vld [vmem:[%s1 + $0x90] sm:$0xff]
    %v35 = vld [vmem:[%s1 + $0x98] sm:$0xff]
    %v36 = vld [vmem:[%s1 + $0xa0] sm:$0xff]
    %v37 = vld [vmem:[%s1 + $0xa8] sm:$0xff]
    %v38 = vld [vmem:[%s1 + $0xb0] sm:$0xff]
    %v39 = vld [vmem:[%s1 + $0xb8] sm:$0xff]
    %v40 = vld [vmem:[%s1 + $0xc0] sm:$0xff]
    %v41 = vld [vmem:[%s1 + $0xc8] sm:$0xff]
    %v42 = vld [vmem:[%s1 + $0xd0] sm:$0xff]
    %v43 = vld [vmem:[%s1 + $0xd8] sm:$0xff]
    %v44 = vld [vmem:[%s1 + $0xe0] sm:$0xff]
    %v45 = vld [vmem:[%s1 + $0xe8] sm:$0xff]
    %v46 = vld [vmem:[%s1 + $0xf0] sm:$0xff]
    %v47 = vld [vmem:[%s1 + $0xf8] sm:$0xff]
    %s48 = scalar_lea.vmem %s0, 4
    %v49 = vld [vmem:[%s48] sm:$0xf]
    %s50 = scalar_lea.vmem %s1, 256
    %v51 = vld [vmem:[%s50] sm:$0xff]
    %v52 = vld [vmem:[%s50 + $0x8] sm:$0xff]
    %v53 = vld [vmem:[%s50 + $0x10] sm:$0xff]
    %v54 = vld [vmem:[%s50 + $0x18] sm:$0xff]
    %v55 = vld [vmem:[%s50 + $0x20] sm:$0xff]
    %v56 = vld [vmem:[%s50 + $0x28] sm:$0xff]
    %v57 = vld [vmem:[%s50 + $0x30] sm:$0xff]
    %v58 = vld [vmem:[%s50 + $0x38] sm:$0xff]
    %v59 = vld [vmem:[%s50 + $0x40] sm:$0xff]
    %v60 = vld [vmem:[%s50 + $0x48] sm:$0xff]
    %v61 = vld [vmem:[%s50 + $0x50] sm:$0xff]
    %v62 = vld [vmem:[%s50 + $0x58] sm:$0xff]
    %v63 = vld [vmem:[%s50 + $0x60] sm:$0xff]
    %v64 = vld [vmem:[%s50 + $0x68] sm:$0xff]
    %v65 = vld [vmem:[%s50 + $0x70] sm:$0xff]
    %v66 = vld [vmem:[%s50 + $0x78] sm:$0xff]
    %v67 = vld [vmem:[%s50 + $0x80] sm:$0xff]
    %v68 = vld [vmem:[%s50 + $0x88] sm:$0xff]
    %v69 = vld [vmem:[%s50 + $0x90] sm:$0xff]
    %v70 = vld [vmem:[%s50 + $0x98] sm:$0xff]
    %v71 = vld [vmem:[%s50 + $0xa0] sm:$0xff]
    %v72 = vld [vmem:[%s50 + $0xa8] sm:$0xff]
    %v73 = vld [vmem:[%s50 + $0xb0] sm:$0xff]
    %v74 = vld [vmem:[%s50 + $0xb8] sm:$0xff]
    %v75 = vld [vmem:[%s50 + $0xc0] sm:$0xff]
    %v76 = vld [vmem:[%s50 + $0xc8] sm:$0xff]
    %v77 = vld [vmem:[%s50 + $0xd0] sm:$0xff]
    %v78 = vld [vmem:[%s50 + $0xd8] sm:$0xff]
    %v79 = vld [vmem:[%s50 + $0xe0] sm:$0xff]
    %v80 = vld [vmem:[%s50 + $0xe8] sm:$0xff]
    %v81 = vld [vmem:[%s50 + $0xf0] sm:$0xff]
    %v82 = vld [vmem:[%s50 + $0xf8] sm:$0xff]
    %v85 = vunpack.c.l.s4 1983009808
    %v86 = vunpack.c.0.s8 %v85
    %v87 = vlaneseq
    %v88 = vshrl.u32 %v87, 7
    %v89 = vsub.s32 %v86, %v88
    %v90 = vrot.slane %v49, %v89
    %v91 = vcombine.high %v90, %v90
    %94 = vmatprep.subr.mxu0 0.0
    %95 = vmatpush1.msra.mxu0 %v66
    %96 = vmatprep.subr.mxu0 0.0
    %97 = vmatpush1.msra.mxu0 %v65
    %98 = vmatprep.subr.mxu0 0.0
    %99 = vmatpush1.msra.mxu0 %v64
    %100 = vmatprep.subr.mxu0 0.0
    %101 = vmatpush1.msra.mxu0 %v63
    %102 = vmatprep.subr.mxu0 0.0
    %103 = vmatpush1.msra.mxu0 %v62
    %104 = vmatprep.subr.mxu0 0.0
    %105 = vmatpush1.msra.mxu0 %v61
    %106 = vmatprep.subr.mxu0 0.0
    %107 = vmatpush1.msra.mxu0 %v60
    %108 = vmatprep.subr.mxu0 0.0
    %109 = vmatpush1.msra.mxu0 %v59
    %110 = vmatprep.subr.mxu0 0.0
    %111 = vmatpush1.msra.mxu0 %v58
    %112 = vmatprep.subr.mxu0 0.0
    %113 = vmatpush1.msra.mxu0 %v57
    %114 = vmatprep.subr.mxu0 0.0
    %115 = vmatpush1.msra.mxu0 %v56
    %116 = vmatprep.subr.mxu0 0.0
    %117 = vmatpush1.msra.mxu0 %v55
    %118 = vmatprep.subr.mxu0 0.0
    %119 = vmatpush1.msra.mxu0 %v54
    %120 = vmatprep.subr.mxu0 0.0
    %121 = vmatpush1.msra.mxu0 %v53
    %122 = vmatprep.subr.mxu0 0.0
    %123 = vmatpush1.msra.mxu0 %v52
    %124 = vmatprep.subr.mxu0 0.0
    %125 = vmatpush1.msra.mxu0 %v51
    %126 = vmatprep.subr.mxu0 0.0
    %127 = vmatpush2.msra.mxu0 %v82
    %128 = vmatprep.subr.mxu0 0.0
    %129 = vmatpush2.msra.mxu0 %v81
    %130 = vmatprep.subr.mxu0 0.0
    %131 = vmatpush2.msra.mxu0 %v80
    %132 = vmatprep.subr.mxu0 0.0
    %133 = vmatpush2.msra.mxu0 %v79
    %134 = vmatprep.subr.mxu0 0.0
    %135 = vmatpush2.msra.mxu0 %v78
    %136 = vmatprep.subr.mxu0 0.0
    %137 = vmatpush2.msra.mxu0 %v77
    %138 = vmatprep.subr.mxu0 0.0
    %139 = vmatpush2.msra.mxu0 %v76
    %140 = vmatprep.subr.mxu0 0.0
    %141 = vmatpush2.msra.mxu0 %v75
    %142 = vmatprep.subr.mxu0 0.0
    %143 = vmatpush2.msra.mxu0 %v74
    %144 = vmatprep.subr.mxu0 0.0
    %145 = vmatpush2.msra.mxu0 %v73
    %146 = vmatprep.subr.mxu0 0.0
    %147 = vmatpush2.msra.mxu0 %v72
    %148 = vmatprep.subr.mxu0 0.0
    %149 = vmatpush2.msra.mxu0 %v71
    %150 = vmatprep.subr.mxu0 0.0
    %151 = vmatpush2.msra.mxu0 %v70
    %152 = vmatprep.subr.mxu0 0.0
    %153 = vmatpush2.msra.mxu0 %v69
    %154 = vmatprep.subr.mxu0 0.0
    %155 = vmatpush2.msra.mxu0 %v68
    %156 = vmatprep.subr.mxu0 0.0
    %157 = vmatpush2.msra.mxu0 %v67
    %158 = vmatprep.mubr.f32.mxu0 %v91
    %159 = vmatmul.mubr.f32.gmra.mxu0 %v90
    %v160 = vpop.f32.mrf.mxu0
    %v161 = vadd.f32 0.0, %v160
    %v162 = vpop.f32.mrf.mxu0
    %163 = vdwg.mxu0
    %v166 = vunpack.c.l.s4 1983009808
    %v167 = vunpack.c.0.s8 %v166
    %v168 = vlaneseq
    %v169 = vshrl.u32 %v168, 7
    %v170 = vsub.s32 %v167, %v169
    %v171 = vrot.slane %v15, %v170
    %v172 = vcombine.high %v171, %v171
    %175 = vmatprep.subr.mxu0 0.0
    %176 = vmatpush1.msra.mxu0 %v31
    %177 = vmatprep.subr.mxu0 0.0
    %178 = vmatpush1.msra.mxu0 %v30
    %179 = vmatprep.subr.mxu0 0.0
    %180 = vmatpush1.msra.mxu0 %v29
    %181 = vmatprep.subr.mxu0 0.0
    %182 = vmatpush1.msra.mxu0 %v28
    %183 = vmatprep.subr.mxu0 0.0
    %184 = vmatpush1.msra.mxu0 %v27
    %185 = vmatprep.subr.mxu0 0.0
    %186 = vmatpush1.msra.mxu0 %v26
    %187 = vmatprep.subr.mxu0 0.0
    %188 = vmatpush1.msra.mxu0 %v25
    %189 = vmatprep.subr.mxu0 0.0
    %190 = vmatpush1.msra.mxu0 %v24
    %191 = vmatprep.subr.mxu0 0.0
    %192 = vmatpush1.msra.mxu0 %v23
    %193 = vmatprep.subr.mxu0 0.0
    %194 = vmatpush1.msra.mxu0 %v22
    %195 = vmatprep.subr.mxu0 0.0
    %196 = vmatpush1.msra.mxu0 %v21
    %197 = vmatprep.subr.mxu0 0.0
    %198 = vmatpush1.msra.mxu0 %v20
    %199 = vmatprep.subr.mxu0 0.0
    %200 = vmatpush1.msra.mxu0 %v19
    %201 = vmatprep.subr.mxu0 0.0
    %202 = vmatpush1.msra.mxu0 %v18
    %203 = vmatprep.subr.mxu0 0.0
    %204 = vmatpush1.msra.mxu0 %v17
    %205 = vmatprep.subr.mxu0 0.0
    %206 = vmatpush1.msra.mxu0 %v16
    %207 = vmatprep.subr.mxu0 0.0
    %208 = vmatpush2.msra.mxu0 %v47
    %209 = vmatprep.subr.mxu0 0.0
    %210 = vmatpush2.msra.mxu0 %v46
    %211 = vmatprep.subr.mxu0 0.0
    %212 = vmatpush2.msra.mxu0 %v45
    %213 = vmatprep.subr.mxu0 0.0
    %214 = vmatpush2.msra.mxu0 %v44
    %215 = vmatprep.subr.mxu0 0.0
    %216 = vmatpush2.msra.mxu0 %v43
    %217 = vmatprep.subr.mxu0 0.0
    %218 = vmatpush2.msra.mxu0 %v42
    %219 = vmatprep.subr.mxu0 0.0
    %220 = vmatpush2.msra.mxu0 %v41
    %221 = vmatprep.subr.mxu0 0.0
    %222 = vmatpush2.msra.mxu0 %v40
    %223 = vmatprep.subr.mxu0 0.0
    %224 = vmatpush2.msra.mxu0 %v39
    %225 = vmatprep.subr.mxu0 0.0
    %226 = vmatpush2.msra.mxu0 %v38
    %227 = vmatprep.subr.mxu0 0.0
    %228 = vmatpush2.msra.mxu0 %v37
    %229 = vmatprep.subr.mxu0 0.0
    %230 = vmatpush2.msra.mxu0 %v36
    %231 = vmatprep.subr.mxu0 0.0
    %232 = vmatpush2.msra.mxu0 %v35
    %233 = vmatprep.subr.mxu0 0.0
    %234 = vmatpush2.msra.mxu0 %v34
    %235 = vmatprep.subr.mxu0 0.0
    %236 = vmatpush2.msra.mxu0 %v33
    %237 = vmatprep.subr.mxu0 0.0
    %238 = vmatpush2.msra.mxu0 %v32
    %239 = vmatprep.mubr.f32.mxu0 %v172
    %240 = vmatmul.mubr.f32.gmra.mxu0 %v171
    %v241 = vpop.f32.mrf.mxu0
    %v242 = vadd.f32 %v161, %v241
    %v243 = vpop.f32.mrf.mxu0
    %244 = vdwg.mxu0
    %s245 = scalar_lea.vmem %s0, 8
    %v246 = vld [vmem:[%s245] sm:$0xf]
    %s247 = scalar_lea.vmem %s1, 512
    %v248 = vld [vmem:[%s247] sm:$0xff]
    %v249 = vld [vmem:[%s247 + $0x8] sm:$0xff]
    %v250 = vld [vmem:[%s247 + $0x10] sm:$0xff]
    %v251 = vld [vmem:[%s247 + $0x18] sm:$0xff]
    %v252 = vld [vmem:[%s247 + $0x20] sm:$0xff]
    %v253 = vld [vmem:[%s247 + $0x28] sm:$0xff]
    %v254 = vld [vmem:[%s247 + $0x30] sm:$0xff]
    %v255 = vld [vmem:[%s247 + $0x38] sm:$0xff]
    %v256 = vld [vmem:[%s247 + $0x40] sm:$0xff]
    %v257 = vld [vmem:[%s247 + $0x48] sm:$0xff]
    %v258 = vld [vmem:[%s247 + $0x50] sm:$0xff]
    %v259 = vld [vmem:[%s247 + $0x58] sm:$0xff]
    %v260 = vld [vmem:[%s247 + $0x60] sm:$0xff]
    %v261 = vld [vmem:[%s247 + $0x68] sm:$0xff]
    %v262 = vld [vmem:[%s247 + $0x70] sm:$0xff]
    %v263 = vld [vmem:[%s247 + $0x78] sm:$0xff]
    %v264 = vld [vmem:[%s247 + $0x80] sm:$0xff]
    %v265 = vld [vmem:[%s247 + $0x88] sm:$0xff]
    %v266 = vld [vmem:[%s247 + $0x90] sm:$0xff]
    %v267 = vld [vmem:[%s247 + $0x98] sm:$0xff]
    %v268 = vld [vmem:[%s247 + $0xa0] sm:$0xff]
    %v269 = vld [vmem:[%s247 + $0xa8] sm:$0xff]
    %v270 = vld [vmem:[%s247 + $0xb0] sm:$0xff]
    %v271 = vld [vmem:[%s247 + $0xb8] sm:$0xff]
    %v272 = vld [vmem:[%s247 + $0xc0] sm:$0xff]
    %v273 = vld [vmem:[%s247 + $0xc8] sm:$0xff]
    %v274 = vld [vmem:[%s247 + $0xd0] sm:$0xff]
    %v275 = vld [vmem:[%s247 + $0xd8] sm:$0xff]
    %v276 = vld [vmem:[%s247 + $0xe0] sm:$0xff]
    %v277 = vld [vmem:[%s247 + $0xe8] sm:$0xff]
    %v278 = vld [vmem:[%s247 + $0xf0] sm:$0xff]
    %v279 = vld [vmem:[%s247 + $0xf8] sm:$0xff]
    %v282 = vunpack.c.l.s4 1983009808
    %v283 = vunpack.c.0.s8 %v282
    %v284 = vlaneseq
    %v285 = vshrl.u32 %v284, 7
    %v286 = vsub.s32 %v283, %v285
    %v287 = vrot.slane %v246, %v286
    %v288 = vcombine.high %v287, %v287
    %291 = vmatprep.subr.mxu0 0.0
    %292 = vmatpush1.msra.mxu0 %v263
    %293 = vmatprep.subr.mxu0 0.0
    %294 = vmatpush1.msra.mxu0 %v262
    %295 = vmatprep.subr.mxu0 0.0
    %296 = vmatpush1.msra.mxu0 %v261
    %297 = vmatprep.subr.mxu0 0.0
    %298 = vmatpush1.msra.mxu0 %v260
    %299 = vmatprep.subr.mxu0 0.0
    %300 = vmatpush1.msra.mxu0 %v259
    %301 = vmatprep.subr.mxu0 0.0
    %302 = vmatpush1.msra.mxu0 %v258
    %303 = vmatprep.subr.mxu0 0.0
    %304 = vmatpush1.msra.mxu0 %v257
    %305 = vmatprep.subr.mxu0 0.0
    %306 = vmatpush1.msra.mxu0 %v256
    %307 = vmatprep.subr.mxu0 0.0
    %308 = vmatpush1.msra.mxu0 %v255
    %309 = vmatprep.subr.mxu0 0.0
    %310 = vmatpush1.msra.mxu0 %v254
    %311 = vmatprep.subr.mxu0 0.0
    %312 = vmatpush1.msra.mxu0 %v253
    %313 = vmatprep.subr.mxu0 0.0
    %314 = vmatpush1.msra.mxu0 %v252
    %315 = vmatprep.subr.mxu0 0.0
    %316 = vmatpush1.msra.mxu0 %v251
    %317 = vmatprep.subr.mxu0 0.0
    %318 = vmatpush1.msra.mxu0 %v250
    %319 = vmatprep.subr.mxu0 0.0
    %320 = vmatpush1.msra.mxu0 %v249
    %321 = vmatprep.subr.mxu0 0.0
    %322 = vmatpush1.msra.mxu0 %v248
    %323 = vmatprep.subr.mxu0 0.0
    %324 = vmatpush2.msra.mxu0 %v279
    %325 = vmatprep.subr.mxu0 0.0
    %326 = vmatpush2.msra.mxu0 %v278
    %327 = vmatprep.subr.mxu0 0.0
    %328 = vmatpush2.msra.mxu0 %v277
    %329 = vmatprep.subr.mxu0 0.0
    %330 = vmatpush2.msra.mxu0 %v276
    %331 = vmatprep.subr.mxu0 0.0
    %332 = vmatpush2.msra.mxu0 %v275
    %333 = vmatprep.subr.mxu0 0.0
    %334 = vmatpush2.msra.mxu0 %v274
    %335 = vmatprep.subr.mxu0 0.0
    %336 = vmatpush2.msra.mxu0 %v273
    %337 = vmatprep.subr.mxu0 0.0
    %338 = vmatpush2.msra.mxu0 %v272
    %339 = vmatprep.subr.mxu0 0.0
    %340 = vmatpush2.msra.mxu0 %v271
    %341 = vmatprep.subr.mxu0 0.0
    %342 = vmatpush2.msra.mxu0 %v270
    %343 = vmatprep.subr.mxu0 0.0
    %344 = vmatpush2.msra.mxu0 %v269
    %345 = vmatprep.subr.mxu0 0.0
    %346 = vmatpush2.msra.mxu0 %v268
    %347 = vmatprep.subr.mxu0 0.0
    %348 = vmatpush2.msra.mxu0 %v267
    %349 = vmatprep.subr.mxu0 0.0
    %350 = vmatpush2.msra.mxu0 %v266
    %351 = vmatprep.subr.mxu0 0.0
    %352 = vmatpush2.msra.mxu0 %v265
    %353 = vmatprep.subr.mxu0 0.0
    %354 = vmatpush2.msra.mxu0 %v264
    %355 = vmatprep.mubr.f32.mxu0 %v288
    %356 = vmatmul.mubr.f32.gmra.mxu0 %v287
    %v357 = vpop.f32.mrf.mxu0
    %v358 = vadd.f32 0.0, %v357
    %v359 = vpop.f32.mrf.mxu0
    %360 = vdwg.mxu0
    %v361 = vadd.f32 %v242, %v358
    %s362 = scalar_lea.vmem %s0, 12
    %v363 = vld [vmem:[%s362] sm:$0xf]
    %s364 = scalar_lea.vmem %s1, 768
    %v365 = vld [vmem:[%s364] sm:$0xff]
    %v366 = vld [vmem:[%s364 + $0x8] sm:$0xff]
    %v367 = vld [vmem:[%s364 + $0x10] sm:$0xff]
    %v368 = vld [vmem:[%s364 + $0x18] sm:$0xff]
    %v369 = vld [vmem:[%s364 + $0x20] sm:$0xff]
    %v370 = vld [vmem:[%s364 + $0x28] sm:$0xff]
    %v371 = vld [vmem:[%s364 + $0x30] sm:$0xff]
    %v372 = vld [vmem:[%s364 + $0x38] sm:$0xff]
    %v373 = vld [vmem:[%s364 + $0x40] sm:$0xff]
    %v374 = vld [vmem:[%s364 + $0x48] sm:$0xff]
    %v375 = vld [vmem:[%s364 + $0x50] sm:$0xff]
    %v376 = vld [vmem:[%s364 + $0x58] sm:$0xff]
    %v377 = vld [vmem:[%s364 + $0x60] sm:$0xff]
    %v378 = vld [vmem:[%s364 + $0x68] sm:$0xff]
    %v379 = vld [vmem:[%s364 + $0x70] sm:$0xff]
    %v380 = vld [vmem:[%s364 + $0x78] sm:$0xff]
    %v381 = vld [vmem:[%s364 + $0x80] sm:$0xff]
    %v382 = vld [vmem:[%s364 + $0x88] sm:$0xff]
    %v383 = vld [vmem:[%s364 + $0x90] sm:$0xff]
    %v384 = vld [vmem:[%s364 + $0x98] sm:$0xff]
    %v385 = vld [vmem:[%s364 + $0xa0] sm:$0xff]
    %v386 = vld [vmem:[%s364 + $0xa8] sm:$0xff]
    %v387 = vld [vmem:[%s364 + $0xb0] sm:$0xff]
    %v388 = vld [vmem:[%s364 + $0xb8] sm:$0xff]
    %v389 = vld [vmem:[%s364 + $0xc0] sm:$0xff]
    %v390 = vld [vmem:[%s364 + $0xc8] sm:$0xff]
    %v391 = vld [vmem:[%s364 + $0xd0] sm:$0xff]
    %v392 = vld [vmem:[%s364 + $0xd8] sm:$0xff]
    %v393 = vld [vmem:[%s364 + $0xe0] sm:$0xff]
    %v394 = vld [vmem:[%s364 + $0xe8] sm:$0xff]
    %v395 = vld [vmem:[%s364 + $0xf0] sm:$0xff]
    %v396 = vld [vmem:[%s364 + $0xf8] sm:$0xff]
    %v399 = vunpack.c.l.s4 1983009808
    %v400 = vunpack.c.0.s8 %v399
    %v401 = vlaneseq
    %v402 = vshrl.u32 %v401, 7
    %v403 = vsub.s32 %v400, %v402
    %v404 = vrot.slane %v363, %v403
    %v405 = vcombine.high %v404, %v404
    %408 = vmatprep.subr.mxu0 0.0
    %409 = vmatpush1.msra.mxu0 %v380
    %410 = vmatprep.subr.mxu0 0.0
    %411 = vmatpush1.msra.mxu0 %v379
    %412 = vmatprep.subr.mxu0 0.0
    %413 = vmatpush1.msra.mxu0 %v378
    %414 = vmatprep.subr.mxu0 0.0
    %415 = vmatpush1.msra.mxu0 %v377
    %416 = vmatprep.subr.mxu0 0.0
    %417 = vmatpush1.msra.mxu0 %v376
    %418 = vmatprep.subr.mxu0 0.0
    %419 = vmatpush1.msra.mxu0 %v375
    %420 = vmatprep.subr.mxu0 0.0
    %421 = vmatpush1.msra.mxu0 %v374
    %422 = vmatprep.subr.mxu0 0.0
    %423 = vmatpush1.msra.mxu0 %v373
    %424 = vmatprep.subr.mxu0 0.0
    %425 = vmatpush1.msra.mxu0 %v372
    %426 = vmatprep.subr.mxu0 0.0
    %427 = vmatpush1.msra.mxu0 %v371
    %428 = vmatprep.subr.mxu0 0.0
    %429 = vmatpush1.msra.mxu0 %v370
    %430 = vmatprep.subr.mxu0 0.0
    %431 = vmatpush1.msra.mxu0 %v369
    %432 = vmatprep.subr.mxu0 0.0
    %433 = vmatpush1.msra.mxu0 %v368
    %434 = vmatprep.subr.mxu0 0.0
    %435 = vmatpush1.msra.mxu0 %v367
    %436 = vmatprep.subr.mxu0 0.0
    %437 = vmatpush1.msra.mxu0 %v366
    %438 = vmatprep.subr.mxu0 0.0
    %439 = vmatpush1.msra.mxu0 %v365
    %440 = vmatprep.subr.mxu0 0.0
    %441 = vmatpush2.msra.mxu0 %v396
    %442 = vmatprep.subr.mxu0 0.0
    %443 = vmatpush2.msra.mxu0 %v395
    %444 = vmatprep.subr.mxu0 0.0
    %445 = vmatpush2.msra.mxu0 %v394
    %446 = vmatprep.subr.mxu0 0.0
    %447 = vmatpush2.msra.mxu0 %v393
    %448 = vmatprep.subr.mxu0 0.0
    %449 = vmatpush2.msra.mxu0 %v392
    %450 = vmatprep.subr.mxu0 0.0
    %451 = vmatpush2.msra.mxu0 %v391
    %452 = vmatprep.subr.mxu0 0.0
    %453 = vmatpush2.msra.mxu0 %v390
    %454 = vmatprep.subr.mxu0 0.0
    %455 = vmatpush2.msra.mxu0 %v389
    %456 = vmatprep.subr.mxu0 0.0
    %457 = vmatpush2.msra.mxu0 %v388
    %458 = vmatprep.subr.mxu0 0.0
    %459 = vmatpush2.msra.mxu0 %v387
    %460 = vmatprep.subr.mxu0 0.0
    %461 = vmatpush2.msra.mxu0 %v386
    %462 = vmatprep.subr.mxu0 0.0
    %463 = vmatpush2.msra.mxu0 %v385
    %464 = vmatprep.subr.mxu0 0.0
    %465 = vmatpush2.msra.mxu0 %v384
    %466 = vmatprep.subr.mxu0 0.0
    %467 = vmatpush2.msra.mxu0 %v383
    %468 = vmatprep.subr.mxu0 0.0
    %469 = vmatpush2.msra.mxu0 %v382
    %470 = vmatprep.subr.mxu0 0.0
    %471 = vmatpush2.msra.mxu0 %v381
    %472 = vmatprep.mubr.f32.mxu0 %v405
    %473 = vmatmul.mubr.f32.gmra.mxu0 %v404
    %v474 = vpop.f32.mrf.mxu0
    %v475 = vadd.f32 0.0, %v474
    %v476 = vpop.f32.mrf.mxu0
    %477 = vdwg.mxu0
    %v478 = vadd.f32 %v361, %v475
    %s479 = scalar_lea.vmem %s0, 16
    %v480 = vld [vmem:[%s479] sm:$0xf]
    %s481 = scalar_lea.vmem %s1, 1024
    %v482 = vld [vmem:[%s481] sm:$0xff]
    %v483 = vld [vmem:[%s481 + $0x8] sm:$0xff]
    %v484 = vld [vmem:[%s481 + $0x10] sm:$0xff]
    %v485 = vld [vmem:[%s481 + $0x18] sm:$0xff]
    %v486 = vld [vmem:[%s481 + $0x20] sm:$0xff]
    %v487 = vld [vmem:[%s481 + $0x28] sm:$0xff]
    %v488 = vld [vmem:[%s481 + $0x30] sm:$0xff]
    %v489 = vld [vmem:[%s481 + $0x38] sm:$0xff]
    %v490 = vld [vmem:[%s481 + $0x40] sm:$0xff]
    %v491 = vld [vmem:[%s481 + $0x48] sm:$0xff]
    %v492 = vld [vmem:[%s481 + $0x50] sm:$0xff]
    %v493 = vld [vmem:[%s481 + $0x58] sm:$0xff]
    %v494 = vld [vmem:[%s481 + $0x60] sm:$0xff]
    %v495 = vld [vmem:[%s481 + $0x68] sm:$0xff]
    %v496 = vld [vmem:[%s481 + $0x70] sm:$0xff]
    %v497 = vld [vmem:[%s481 + $0x78] sm:$0xff]
    %v498 = vld [vmem:[%s481 + $0x80] sm:$0xff]
    %v499 = vld [vmem:[%s481 + $0x88] sm:$0xff]
    %v500 = vld [vmem:[%s481 + $0x90] sm:$0xff]
    %v501 = vld [vmem:[%s481 + $0x98] sm:$0xff]
    %v502 = vld [vmem:[%s481 + $0xa0] sm:$0xff]
    %v503 = vld [vmem:[%s481 + $0xa8] sm:$0xff]
    %v504 = vld [vmem:[%s481 + $0xb0] sm:$0xff]
    %v505 = vld [vmem:[%s481 + $0xb8] sm:$0xff]
    %v506 = vld [vmem:[%s481 + $0xc0] sm:$0xff]
    %v507 = vld [vmem:[%s481 + $0xc8] sm:$0xff]
    %v508 = vld [vmem:[%s481 + $0xd0] sm:$0xff]
    %v509 = vld [vmem:[%s481 + $0xd8] sm:$0xff]
    %v510 = vld [vmem:[%s481 + $0xe0] sm:$0xff]
    %v511 = vld [vmem:[%s481 + $0xe8] sm:$0xff]
    %v512 = vld [vmem:[%s481 + $0xf0] sm:$0xff]
    %v513 = vld [vmem:[%s481 + $0xf8] sm:$0xff]
    %v516 = vunpack.c.l.s4 1983009808
    %v517 = vunpack.c.0.s8 %v516
    %v518 = vlaneseq
    %v519 = vshrl.u32 %v518, 7
    %v520 = vsub.s32 %v517, %v519
    %v521 = vrot.slane %v480, %v520
    %v522 = vcombine.high %v521, %v521
    %525 = vmatprep.subr.mxu0 0.0
    %526 = vmatpush1.msra.mxu0 %v497
    %527 = vmatprep.subr.mxu0 0.0
    %528 = vmatpush1.msra.mxu0 %v496
    %529 = vmatprep.subr.mxu0 0.0
    %530 = vmatpush1.msra.mxu0 %v495
    %531 = vmatprep.subr.mxu0 0.0
    %532 = vmatpush1.msra.mxu0 %v494
    %533 = vmatprep.subr.mxu0 0.0
    %534 = vmatpush1.msra.mxu0 %v493
    %535 = vmatprep.subr.mxu0 0.0
    %536 = vmatpush1.msra.mxu0 %v492
    %537 = vmatprep.subr.mxu0 0.0
    %538 = vmatpush1.msra.mxu0 %v491
    %539 = vmatprep.subr.mxu0 0.0
    %540 = vmatpush1.msra.mxu0 %v490
    %541 = vmatprep.subr.mxu0 0.0
    %542 = vmatpush1.msra.mxu0 %v489
    %543 = vmatprep.subr.mxu0 0.0
    %544 = vmatpush1.msra.mxu0 %v488
    %545 = vmatprep.subr.mxu0 0.0
    %546 = vmatpush1.msra.mxu0 %v487
    %547 = vmatprep.subr.mxu0 0.0
    %548 = vmatpush1.msra.mxu0 %v486
    %549 = vmatprep.subr.mxu0 0.0
    %550 = vmatpush1.msra.mxu0 %v485
    %551 = vmatprep.subr.mxu0 0.0
    %552 = vmatpush1.msra.mxu0 %v484
    %553 = vmatprep.subr.mxu0 0.0
    %554 = vmatpush1.msra.mxu0 %v483
    %555 = vmatprep.subr.mxu0 0.0
    %556 = vmatpush1.msra.mxu0 %v482
    %557 = vmatprep.subr.mxu0 0.0
    %558 = vmatpush2.msra.mxu0 %v513
    %559 = vmatprep.subr.mxu0 0.0
    %560 = vmatpush2.msra.mxu0 %v512
    %561 = vmatprep.subr.mxu0 0.0
    %562 = vmatpush2.msra.mxu0 %v511
    %563 = vmatprep.subr.mxu0 0.0
    %564 = vmatpush2.msra.mxu0 %v510
    %565 = vmatprep.subr.mxu0 0.0
    %566 = vmatpush2.msra.mxu0 %v509
    %567 = vmatprep.subr.mxu0 0.0
    %568 = vmatpush2.msra.mxu0 %v508
    %569 = vmatprep.subr.mxu0 0.0
    %570 = vmatpush2.msra.mxu0 %v507
    %571 = vmatprep.subr.mxu0 0.0
    %572 = vmatpush2.msra.mxu0 %v506
    %573 = vmatprep.subr.mxu0 0.0
    %574 = vmatpush2.msra.mxu0 %v505
    %575 = vmatprep.subr.mxu0 0.0
    %576 = vmatpush2.msra.mxu0 %v504
    %577 = vmatprep.subr.mxu0 0.0
    %578 = vmatpush2.msra.mxu0 %v503
    %579 = vmatprep.subr.mxu0 0.0
    %580 = vmatpush2.msra.mxu0 %v502
    %581 = vmatprep.subr.mxu0 0.0
    %582 = vmatpush2.msra.mxu0 %v501
    %583 = vmatprep.subr.mxu0 0.0
    %584 = vmatpush2.msra.mxu0 %v500
    %585 = vmatprep.subr.mxu0 0.0
    %586 = vmatpush2.msra.mxu0 %v499
    %587 = vmatprep.subr.mxu0 0.0
    %588 = vmatpush2.msra.mxu0 %v498
    %589 = vmatprep.mubr.f32.mxu0 %v522
    %590 = vmatmul.mubr.f32.gmra.mxu0 %v521
    %v591 = vpop.f32.mrf.mxu0
    %v592 = vadd.f32 0.0, %v591
    %v593 = vpop.f32.mrf.mxu0
    %594 = vdwg.mxu0
    %v595 = vadd.f32 %v478, %v592
    %s596 = scalar_lea.vmem %s0, 20
    %v597 = vld [vmem:[%s596] sm:$0xf]
    %s598 = scalar_lea.vmem %s1, 1280
    %v599 = vld [vmem:[%s598] sm:$0xff]
    %v600 = vld [vmem:[%s598 + $0x8] sm:$0xff]
    %v601 = vld [vmem:[%s598 + $0x10] sm:$0xff]
    %v602 = vld [vmem:[%s598 + $0x18] sm:$0xff]
    %v603 = vld [vmem:[%s598 + $0x20] sm:$0xff]
    %v604 = vld [vmem:[%s598 + $0x28] sm:$0xff]
    %v605 = vld [vmem:[%s598 + $0x30] sm:$0xff]
    %v606 = vld [vmem:[%s598 + $0x38] sm:$0xff]
    %v607 = vld [vmem:[%s598 + $0x40] sm:$0xff]
    %v608 = vld [vmem:[%s598 + $0x48] sm:$0xff]
    %v609 = vld [vmem:[%s598 + $0x50] sm:$0xff]
    %v610 = vld [vmem:[%s598 + $0x58] sm:$0xff]
    %v611 = vld [vmem:[%s598 + $0x60] sm:$0xff]
    %v612 = vld [vmem:[%s598 + $0x68] sm:$0xff]
    %v613 = vld [vmem:[%s598 + $0x70] sm:$0xff]
    %v614 = vld [vmem:[%s598 + $0x78] sm:$0xff]
    %v615 = vld [vmem:[%s598 + $0x80] sm:$0xff]
    %v616 = vld [vmem:[%s598 + $0x88] sm:$0xff]
    %v617 = vld [vmem:[%s598 + $0x90] sm:$0xff]
    %v618 = vld [vmem:[%s598 + $0x98] sm:$0xff]
    %v619 = vld [vmem:[%s598 + $0xa0] sm:$0xff]
    %v620 = vld [vmem:[%s598 + $0xa8] sm:$0xff]
    %v621 = vld [vmem:[%s598 + $0xb0] sm:$0xff]
    %v622 = vld [vmem:[%s598 + $0xb8] sm:$0xff]
    %v623 = vld [vmem:[%s598 + $0xc0] sm:$0xff]
    %v624 = vld [vmem:[%s598 + $0xc8] sm:$0xff]
    %v625 = vld [vmem:[%s598 + $0xd0] sm:$0xff]
    %v626 = vld [vmem:[%s598 + $0xd8] sm:$0xff]
    %v627 = vld [vmem:[%s598 + $0xe0] sm:$0xff]
    %v628 = vld [vmem:[%s598 + $0xe8] sm:$0xff]
    %v629 = vld [vmem:[%s598 + $0xf0] sm:$0xff]
    %v630 = vld [vmem:[%s598 + $0xf8] sm:$0xff]
    %v633 = vunpack.c.l.s4 1983009808
    %v634 = vunpack.c.0.s8 %v633
    %v635 = vlaneseq
    %v636 = vshrl.u32 %v635, 7
    %v637 = vsub.s32 %v634, %v636
    %v638 = vrot.slane %v597, %v637
    %v639 = vcombine.high %v638, %v638
    %642 = vmatprep.subr.mxu0 0.0
    %643 = vmatpush1.msra.mxu0 %v614
    %644 = vmatprep.subr.mxu0 0.0
    %645 = vmatpush1.msra.mxu0 %v613
    %646 = vmatprep.subr.mxu0 0.0
    %647 = vmatpush1.msra.mxu0 %v612
    %648 = vmatprep.subr.mxu0 0.0
    %649 = vmatpush1.msra.mxu0 %v611
    %650 = vmatprep.subr.mxu0 0.0
    %651 = vmatpush1.msra.mxu0 %v610
    %652 = vmatprep.subr.mxu0 0.0
    %653 = vmatpush1.msra.mxu0 %v609
    %654 = vmatprep.subr.mxu0 0.0
    %655 = vmatpush1.msra.mxu0 %v608
    %656 = vmatprep.subr.mxu0 0.0
    %657 = vmatpush1.msra.mxu0 %v607
    %658 = vmatprep.subr.mxu0 0.0
    %659 = vmatpush1.msra.mxu0 %v606
    %660 = vmatprep.subr.mxu0 0.0
    %661 = vmatpush1.msra.mxu0 %v605
    %662 = vmatprep.subr.mxu0 0.0
    %663 = vmatpush1.msra.mxu0 %v604
    %664 = vmatprep.subr.mxu0 0.0
    %665 = vmatpush1.msra.mxu0 %v603
    %666 = vmatprep.subr.mxu0 0.0
    %667 = vmatpush1.msra.mxu0 %v602
    %668 = vmatprep.subr.mxu0 0.0
    %669 = vmatpush1.msra.mxu0 %v601
    %670 = vmatprep.subr.mxu0 0.0
    %671 = vmatpush1.msra.mxu0 %v600
    %672 = vmatprep.subr.mxu0 0.0
    %673 = vmatpush1.msra.mxu0 %v599
    %674 = vmatprep.subr.mxu0 0.0
    %675 = vmatpush2.msra.mxu0 %v630
    %676 = vmatprep.subr.mxu0 0.0
    %677 = vmatpush2.msra.mxu0 %v629
    %678 = vmatprep.subr.mxu0 0.0
    %679 = vmatpush2.msra.mxu0 %v628
    %680 = vmatprep.subr.mxu0 0.0
    %681 = vmatpush2.msra.mxu0 %v627
    %682 = vmatprep.subr.mxu0 0.0
    %683 = vmatpush2.msra.mxu0 %v626
    %684 = vmatprep.subr.mxu0 0.0
    %685 = vmatpush2.msra.mxu0 %v625
    %686 = vmatprep.subr.mxu0 0.0
    %687 = vmatpush2.msra.mxu0 %v624
    %688 = vmatprep.subr.mxu0 0.0
    %689 = vmatpush2.msra.mxu0 %v623
    %690 = vmatprep.subr.mxu0 0.0
    %691 = vmatpush2.msra.mxu0 %v622
    %692 = vmatprep.subr.mxu0 0.0
    %693 = vmatpush2.msra.mxu0 %v621
    %694 = vmatprep.subr.mxu0 0.0
    %695 = vmatpush2.msra.mxu0 %v620
    %696 = vmatprep.subr.mxu0 0.0
    %697 = vmatpush2.msra.mxu0 %v619
    %698 = vmatprep.subr.mxu0 0.0
    %699 = vmatpush2.msra.mxu0 %v618
    %700 = vmatprep.subr.mxu0 0.0
    %701 = vmatpush2.msra.mxu0 %v617
    %702 = vmatprep.subr.mxu0 0.0
    %703 = vmatpush2.msra.mxu0 %v616
    %704 = vmatprep.subr.mxu0 0.0
    %705 = vmatpush2.msra.mxu0 %v615
    %706 = vmatprep.mubr.f32.mxu0 %v639
    %707 = vmatmul.mubr.f32.gmra.mxu0 %v638
    %v708 = vpop.f32.mrf.mxu0
    %v709 = vadd.f32 0.0, %v708
    %v710 = vpop.f32.mrf.mxu0
    %711 = vdwg.mxu0
    %v712 = vadd.f32 %v595, %v709
    %s713 = scalar_lea.vmem %s0, 24
    %v714 = vld [vmem:[%s713] sm:$0xf]
    %s715 = scalar_lea.vmem %s1, 1536
    %v716 = vld [vmem:[%s715] sm:$0xff]
    %v717 = vld [vmem:[%s715 + $0x8] sm:$0xff]
    %v718 = vld [vmem:[%s715 + $0x10] sm:$0xff]
    %v719 = vld [vmem:[%s715 + $0x18] sm:$0xff]
    %v720 = vld [vmem:[%s715 + $0x20] sm:$0xff]
    %v721 = vld [vmem:[%s715 + $0x28] sm:$0xff]
    %v722 = vld [vmem:[%s715 + $0x30] sm:$0xff]
    %v723 = vld [vmem:[%s715 + $0x38] sm:$0xff]
    %v724 = vld [vmem:[%s715 + $0x40] sm:$0xff]
    %v725 = vld [vmem:[%s715 + $0x48] sm:$0xff]
    %v726 = vld [vmem:[%s715 + $0x50] sm:$0xff]
    %v727 = vld [vmem:[%s715 + $0x58] sm:$0xff]
    %v728 = vld [vmem:[%s715 + $0x60] sm:$0xff]
    %v729 = vld [vmem:[%s715 + $0x68] sm:$0xff]
    %v730 = vld [vmem:[%s715 + $0x70] sm:$0xff]
    %v731 = vld [vmem:[%s715 + $0x78] sm:$0xff]
    %v732 = vld [vmem:[%s715 + $0x80] sm:$0xff]
    %v733 = vld [vmem:[%s715 + $0x88] sm:$0xff]
    %v734 = vld [vmem:[%s715 + $0x90] sm:$0xff]
    %v735 = vld [vmem:[%s715 + $0x98] sm:$0xff]
    %v736 = vld [vmem:[%s715 + $0xa0] sm:$0xff]
    %v737 = vld [vmem:[%s715 + $0xa8] sm:$0xff]
    %v738 = vld [vmem:[%s715 + $0xb0] sm:$0xff]
    %v739 = vld [vmem:[%s715 + $0xb8] sm:$0xff]
    %v740 = vld [vmem:[%s715 + $0xc0] sm:$0xff]
    %v741 = vld [vmem:[%s715 + $0xc8] sm:$0xff]
    %v742 = vld [vmem:[%s715 + $0xd0] sm:$0xff]
    %v743 = vld [vmem:[%s715 + $0xd8] sm:$0xff]
    %v744 = vld [vmem:[%s715 + $0xe0] sm:$0xff]
    %v745 = vld [vmem:[%s715 + $0xe8] sm:$0xff]
    %v746 = vld [vmem:[%s715 + $0xf0] sm:$0xff]
    %v747 = vld [vmem:[%s715 + $0xf8] sm:$0xff]
    %v750 = vunpack.c.l.s4 1983009808
    %v751 = vunpack.c.0.s8 %v750
    %v752 = vlaneseq
    %v753 = vshrl.u32 %v752, 7
    %v754 = vsub.s32 %v751, %v753
    %v755 = vrot.slane %v714, %v754
    %v756 = vcombine.high %v755, %v755
    %759 = vmatprep.subr.mxu0 0.0
    %760 = vmatpush1.msra.mxu0 %v731
    %761 = vmatprep.subr.mxu0 0.0
    %762 = vmatpush1.msra.mxu0 %v730
    %763 = vmatprep.subr.mxu0 0.0
    %764 = vmatpush1.msra.mxu0 %v729
    %765 = vmatprep.subr.mxu0 0.0
    %766 = vmatpush1.msra.mxu0 %v728
    %767 = vmatprep.subr.mxu0 0.0
    %768 = vmatpush1.msra.mxu0 %v727
    %769 = vmatprep.subr.mxu0 0.0
    %770 = vmatpush1.msra.mxu0 %v726
    %771 = vmatprep.subr.mxu0 0.0
    %772 = vmatpush1.msra.mxu0 %v725
    %773 = vmatprep.subr.mxu0 0.0
    %774 = vmatpush1.msra.mxu0 %v724
    %775 = vmatprep.subr.mxu0 0.0
    %776 = vmatpush1.msra.mxu0 %v723
    %777 = vmatprep.subr.mxu0 0.0
    %778 = vmatpush1.msra.mxu0 %v722
    %779 = vmatprep.subr.mxu0 0.0
    %780 = vmatpush1.msra.mxu0 %v721
    %781 = vmatprep.subr.mxu0 0.0
    %782 = vmatpush1.msra.mxu0 %v720
    %783 = vmatprep.subr.mxu0 0.0
    %784 = vmatpush1.msra.mxu0 %v719
    %785 = vmatprep.subr.mxu0 0.0
    %786 = vmatpush1.msra.mxu0 %v718
    %787 = vmatprep.subr.mxu0 0.0
    %788 = vmatpush1.msra.mxu0 %v717
    %789 = vmatprep.subr.mxu0 0.0
    %790 = vmatpush1.msra.mxu0 %v716
    %791 = vmatprep.subr.mxu0 0.0
    %792 = vmatpush2.msra.mxu0 %v747
    %793 = vmatprep.subr.mxu0 0.0
    %794 = vmatpush2.msra.mxu0 %v746
    %795 = vmatprep.subr.mxu0 0.0
    %796 = vmatpush2.msra.mxu0 %v745
    %797 = vmatprep.subr.mxu0 0.0
    %798 = vmatpush2.msra.mxu0 %v744
    %799 = vmatprep.subr.mxu0 0.0
    %800 = vmatpush2.msra.mxu0 %v743
    %801 = vmatprep.subr.mxu0 0.0
    %802 = vmatpush2.msra.mxu0 %v742
    %803 = vmatprep.subr.mxu0 0.0
    %804 = vmatpush2.msra.mxu0 %v741
    %805 = vmatprep.subr.mxu0 0.0
    %806 = vmatpush2.msra.mxu0 %v740
    %807 = vmatprep.subr.mxu0 0.0
    %808 = vmatpush2.msra.mxu0 %v739
    %809 = vmatprep.subr.mxu0 0.0
    %810 = vmatpush2.msra.mxu0 %v738
    %811 = vmatprep.subr.mxu0 0.0
    %812 = vmatpush2.msra.mxu0 %v737
    %813 = vmatprep.subr.mxu0 0.0
    %814 = vmatpush2.msra.mxu0 %v736
    %815 = vmatprep.subr.mxu0 0.0
    %816 = vmatpush2.msra.mxu0 %v735
    %817 = vmatprep.subr.mxu0 0.0
    %818 = vmatpush2.msra.mxu0 %v734
    %819 = vmatprep.subr.mxu0 0.0
    %820 = vmatpush2.msra.mxu0 %v733
    %821 = vmatprep.subr.mxu0 0.0
    %822 = vmatpush2.msra.mxu0 %v732
    %823 = vmatprep.mubr.f32.mxu0 %v756
    %824 = vmatmul.mubr.f32.gmra.mxu0 %v755
    %v825 = vpop.f32.mrf.mxu0
    %v826 = vadd.f32 0.0, %v825
    %v827 = vpop.f32.mrf.mxu0
    %828 = vdwg.mxu0
    %v829 = vadd.f32 %v712, %v826
    %s830 = scalar_lea.vmem %s0, 28
    %v831 = vld [vmem:[%s830] sm:$0xf]
    %s832 = scalar_lea.vmem %s1, 1792
    %v833 = vld [vmem:[%s832] sm:$0xff]
    %v834 = vld [vmem:[%s832 + $0x8] sm:$0xff]
    %v835 = vld [vmem:[%s832 + $0x10] sm:$0xff]
    %v836 = vld [vmem:[%s832 + $0x18] sm:$0xff]
    %v837 = vld [vmem:[%s832 + $0x20] sm:$0xff]
    %v838 = vld [vmem:[%s832 + $0x28] sm:$0xff]
    %v839 = vld [vmem:[%s832 + $0x30] sm:$0xff]
    %v840 = vld [vmem:[%s832 + $0x38] sm:$0xff]
    %v841 = vld [vmem:[%s832 + $0x40] sm:$0xff]
    %v842 = vld [vmem:[%s832 + $0x48] sm:$0xff]
    %v843 = vld [vmem:[%s832 + $0x50] sm:$0xff]
    %v844 = vld [vmem:[%s832 + $0x58] sm:$0xff]
    %v845 = vld [vmem:[%s832 + $0x60] sm:$0xff]
    %v846 = vld [vmem:[%s832 + $0x68] sm:$0xff]
    %v847 = vld [vmem:[%s832 + $0x70] sm:$0xff]
    %v848 = vld [vmem:[%s832 + $0x78] sm:$0xff]
    %v849 = vld [vmem:[%s832 + $0x80] sm:$0xff]
    %v850 = vld [vmem:[%s832 + $0x88] sm:$0xff]
    %v851 = vld [vmem:[%s832 + $0x90] sm:$0xff]
    %v852 = vld [vmem:[%s832 + $0x98] sm:$0xff]
    %v853 = vld [vmem:[%s832 + $0xa0] sm:$0xff]
    %v854 = vld [vmem:[%s832 + $0xa8] sm:$0xff]
    %v855 = vld [vmem:[%s832 + $0xb0] sm:$0xff]
    %v856 = vld [vmem:[%s832 + $0xb8] sm:$0xff]
    %v857 = vld [vmem:[%s832 + $0xc0] sm:$0xff]
    %v858 = vld [vmem:[%s832 + $0xc8] sm:$0xff]
    %v859 = vld [vmem:[%s832 + $0xd0] sm:$0xff]
    %v860 = vld [vmem:[%s832 + $0xd8] sm:$0xff]
    %v861 = vld [vmem:[%s832 + $0xe0] sm:$0xff]
    %v862 = vld [vmem:[%s832 + $0xe8] sm:$0xff]
    %v863 = vld [vmem:[%s832 + $0xf0] sm:$0xff]
    %v864 = vld [vmem:[%s832 + $0xf8] sm:$0xff]
    %v867 = vunpack.c.l.s4 1983009808
    %v868 = vunpack.c.0.s8 %v867
    %v869 = vlaneseq
    %v870 = vshrl.u32 %v869, 7
    %v871 = vsub.s32 %v868, %v870
    %v872 = vrot.slane %v831, %v871
    %v873 = vcombine.high %v872, %v872
    %876 = vmatprep.subr.mxu0 0.0
    %877 = vmatpush1.msra.mxu0 %v848
    %878 = vmatprep.subr.mxu0 0.0
    %879 = vmatpush1.msra.mxu0 %v847
    %880 = vmatprep.subr.mxu0 0.0
    %881 = vmatpush1.msra.mxu0 %v846
    %882 = vmatprep.subr.mxu0 0.0
    %883 = vmatpush1.msra.mxu0 %v845
    %884 = vmatprep.subr.mxu0 0.0
    %885 = vmatpush1.msra.mxu0 %v844
    %886 = vmatprep.subr.mxu0 0.0
    %887 = vmatpush1.msra.mxu0 %v843
    %888 = vmatprep.subr.mxu0 0.0
    %889 = vmatpush1.msra.mxu0 %v842
    %890 = vmatprep.subr.mxu0 0.0
    %891 = vmatpush1.msra.mxu0 %v841
    %892 = vmatprep.subr.mxu0 0.0
    %893 = vmatpush1.msra.mxu0 %v840
    %894 = vmatprep.subr.mxu0 0.0
    %895 = vmatpush1.msra.mxu0 %v839
    %896 = vmatprep.subr.mxu0 0.0
    %897 = vmatpush1.msra.mxu0 %v838
    %898 = vmatprep.subr.mxu0 0.0
    %899 = vmatpush1.msra.mxu0 %v837
    %900 = vmatprep.subr.mxu0 0.0
    %901 = vmatpush1.msra.mxu0 %v836
    %902 = vmatprep.subr.mxu0 0.0
    %903 = vmatpush1.msra.mxu0 %v835
    %904 = vmatprep.subr.mxu0 0.0
    %905 = vmatpush1.msra.mxu0 %v834
    %906 = vmatprep.subr.mxu0 0.0
    %907 = vmatpush1.msra.mxu0 %v833
    %908 = vmatprep.subr.mxu0 0.0
    %909 = vmatpush2.msra.mxu0 %v864
    %910 = vmatprep.subr.mxu0 0.0
    %911 = vmatpush2.msra.mxu0 %v863
    %912 = vmatprep.subr.mxu0 0.0
    %913 = vmatpush2.msra.mxu0 %v862
    %914 = vmatprep.subr.mxu0 0.0
    %915 = vmatpush2.msra.mxu0 %v861
    %916 = vmatprep.subr.mxu0 0.0
    %917 = vmatpush2.msra.mxu0 %v860
    %918 = vmatprep.subr.mxu0 0.0
    %919 = vmatpush2.msra.mxu0 %v859
    %920 = vmatprep.subr.mxu0 0.0
    %921 = vmatpush2.msra.mxu0 %v858
    %922 = vmatprep.subr.mxu0 0.0
    %923 = vmatpush2.msra.mxu0 %v857
    %924 = vmatprep.subr.mxu0 0.0
    %925 = vmatpush2.msra.mxu0 %v856
    %926 = vmatprep.subr.mxu0 0.0
    %927 = vmatpush2.msra.mxu0 %v855
    %928 = vmatprep.subr.mxu0 0.0
    %929 = vmatpush2.msra.mxu0 %v854
    %930 = vmatprep.subr.mxu0 0.0
    %931 = vmatpush2.msra.mxu0 %v853
    %932 = vmatprep.subr.mxu0 0.0
    %933 = vmatpush2.msra.mxu0 %v852
    %934 = vmatprep.subr.mxu0 0.0
    %935 = vmatpush2.msra.mxu0 %v851
    %936 = vmatprep.subr.mxu0 0.0
    %937 = vmatpush2.msra.mxu0 %v850
    %938 = vmatprep.subr.mxu0 0.0
    %939 = vmatpush2.msra.mxu0 %v849
    %940 = vmatprep.mubr.f32.mxu0 %v873
    %941 = vmatmul.mubr.f32.gmra.mxu0 %v872
    %v942 = vpop.f32.mrf.mxu0
    %v943 = vadd.f32 0.0, %v942
    %v944 = vpop.f32.mrf.mxu0
    %945 = vdwg.mxu0
    %v946 = vadd.f32 %v829, %v943
    %s947 = scalar_lea.vmem %s0, 32
    %v948 = vld [vmem:[%s947] sm:$0xf]
    %s949 = scalar_lea.vmem %s1, 2048
    %v950 = vld [vmem:[%s949] sm:$0xff]
    %v951 = vld [vmem:[%s949 + $0x8] sm:$0xff]
    %v952 = vld [vmem:[%s949 + $0x10] sm:$0xff]
    %v953 = vld [vmem:[%s949 + $0x18] sm:$0xff]
    %v954 = vld [vmem:[%s949 + $0x20] sm:$0xff]
    %v955 = vld [vmem:[%s949 + $0x28] sm:$0xff]
    %v956 = vld [vmem:[%s949 + $0x30] sm:$0xff]
    %v957 = vld [vmem:[%s949 + $0x38] sm:$0xff]
    %v958 = vld [vmem:[%s949 + $0x40] sm:$0xff]
    %v959 = vld [vmem:[%s949 + $0x48] sm:$0xff]
    %v960 = vld [vmem:[%s949 + $0x50] sm:$0xff]
    %v961 = vld [vmem:[%s949 + $0x58] sm:$0xff]
    %v962 = vld [vmem:[%s949 + $0x60] sm:$0xff]
    %v963 = vld [vmem:[%s949 + $0x68] sm:$0xff]
    %v964 = vld [vmem:[%s949 + $0x70] sm:$0xff]
    %v965 = vld [vmem:[%s949 + $0x78] sm:$0xff]
    %v966 = vld [vmem:[%s949 + $0x80] sm:$0xff]
    %v967 = vld [vmem:[%s949 + $0x88] sm:$0xff]
    %v968 = vld [vmem:[%s949 + $0x90] sm:$0xff]
    %v969 = vld [vmem:[%s949 + $0x98] sm:$0xff]
    %v970 = vld [vmem:[%s949 + $0xa0] sm:$0xff]
    %v971 = vld [vmem:[%s949 + $0xa8] sm:$0xff]
    %v972 = vld [vmem:[%s949 + $0xb0] sm:$0xff]
    %v973 = vld [vmem:[%s949 + $0xb8] sm:$0xff]
    %v974 = vld [vmem:[%s949 + $0xc0] sm:$0xff]
    %v975 = vld [vmem:[%s949 + $0xc8] sm:$0xff]
    %v976 = vld [vmem:[%s949 + $0xd0] sm:$0xff]
    %v977 = vld [vmem:[%s949 + $0xd8] sm:$0xff]
    %v978 = vld [vmem:[%s949 + $0xe0] sm:$0xff]
    %v979 = vld [vmem:[%s949 + $0xe8] sm:$0xff]
    %v980 = vld [vmem:[%s949 + $0xf0] sm:$0xff]
    %v981 = vld [vmem:[%s949 + $0xf8] sm:$0xff]
    %v984 = vunpack.c.l.s4 1983009808
    %v985 = vunpack.c.0.s8 %v984
    %v986 = vlaneseq
    %v987 = vshrl.u32 %v986, 7
    %v988 = vsub.s32 %v985, %v987
    %v989 = vrot.slane %v948, %v988
    %v990 = vcombine.high %v989, %v989
    %993 = vmatprep.subr.mxu0 0.0
    %994 = vmatpush1.msra.mxu0 %v965
    %995 = vmatprep.subr.mxu0 0.0
    %996 = vmatpush1.msra.mxu0 %v964
    %997 = vmatprep.subr.mxu0 0.0
    %998 = vmatpush1.msra.mxu0 %v963
    %999 = vmatprep.subr.mxu0 0.0
    %1000 = vmatpush1.msra.mxu0 %v962
    %1001 = vmatprep.subr.mxu0 0.0
    %1002 = vmatpush1.msra.mxu0 %v961
    %1003 = vmatprep.subr.mxu0 0.0
    %1004 = vmatpush1.msra.mxu0 %v960
    %1005 = vmatprep.subr.mxu0 0.0
    %1006 = vmatpush1.msra.mxu0 %v959
    %1007 = vmatprep.subr.mxu0 0.0
    %1008 = vmatpush1.msra.mxu0 %v958
    %1009 = vmatprep.subr.mxu0 0.0
    %1010 = vmatpush1.msra.mxu0 %v957
    %1011 = vmatprep.subr.mxu0 0.0
    %1012 = vmatpush1.msra.mxu0 %v956
    %1013 = vmatprep.subr.mxu0 0.0
    %1014 = vmatpush1.msra.mxu0 %v955
    %1015 = vmatprep.subr.mxu0 0.0
    %1016 = vmatpush1.msra.mxu0 %v954
    %1017 = vmatprep.subr.mxu0 0.0
    %1018 = vmatpush1.msra.mxu0 %v953
    %1019 = vmatprep.subr.mxu0 0.0
    %1020 = vmatpush1.msra.mxu0 %v952
    %1021 = vmatprep.subr.mxu0 0.0
    %1022 = vmatpush1.msra.mxu0 %v951
    %1023 = vmatprep.subr.mxu0 0.0
    %1024 = vmatpush1.msra.mxu0 %v950
    %1025 = vmatprep.subr.mxu0 0.0
    %1026 = vmatpush2.msra.mxu0 %v981
    %1027 = vmatprep.subr.mxu0 0.0
    %1028 = vmatpush2.msra.mxu0 %v980
    %1029 = vmatprep.subr.mxu0 0.0
    %1030 = vmatpush2.msra.mxu0 %v979
    %1031 = vmatprep.subr.mxu0 0.0
    %1032 = vmatpush2.msra.mxu0 %v978
    %1033 = vmatprep.subr.mxu0 0.0
    %1034 = vmatpush2.msra.mxu0 %v977
    %1035 = vmatprep.subr.mxu0 0.0
    %1036 = vmatpush2.msra.mxu0 %v976
    %1037 = vmatprep.subr.mxu0 0.0
    %1038 = vmatpush2.msra.mxu0 %v975
    %1039 = vmatprep.subr.mxu0 0.0
    %1040 = vmatpush2.msra.mxu0 %v974
    %1041 = vmatprep.subr.mxu0 0.0
    %1042 = vmatpush2.msra.mxu0 %v973
    %1043 = vmatprep.subr.mxu0 0.0
    %1044 = vmatpush2.msra.mxu0 %v972
    %1045 = vmatprep.subr.mxu0 0.0
    %1046 = vmatpush2.msra.mxu0 %v971
    %1047 = vmatprep.subr.mxu0 0.0
    %1048 = vmatpush2.msra.mxu0 %v970
    %1049 = vmatprep.subr.mxu0 0.0
    %1050 = vmatpush2.msra.mxu0 %v969
    %1051 = vmatprep.subr.mxu0 0.0
    %1052 = vmatpush2.msra.mxu0 %v968
    %1053 = vmatprep.subr.mxu0 0.0
    %1054 = vmatpush2.msra.mxu0 %v967
    %1055 = vmatprep.subr.mxu0 0.0
    %1056 = vmatpush2.msra.mxu0 %v966
    %1057 = vmatprep.mubr.f32.mxu0 %v990
    %1058 = vmatmul.mubr.f32.gmra.mxu0 %v989
    %v1059 = vpop.f32.mrf.mxu0
    %v1060 = vadd.f32 0.0, %v1059
    %v1061 = vpop.f32.mrf.mxu0
    %1062 = vdwg.mxu0
    %v1063 = vadd.f32 %v946, %v1060
    %s1064 = scalar_lea.vmem %s0, 36
    %v1065 = vld [vmem:[%s1064] sm:$0xf]
    %s1066 = scalar_lea.vmem %s1, 2304
    %v1067 = vld [vmem:[%s1066] sm:$0xff]
    %v1068 = vld [vmem:[%s1066 + $0x8] sm:$0xff]
    %v1069 = vld [vmem:[%s1066 + $0x10] sm:$0xff]
    %v1070 = vld [vmem:[%s1066 + $0x18] sm:$0xff]
    %v1071 = vld [vmem:[%s1066 + $0x20] sm:$0xff]
    %v1072 = vld [vmem:[%s1066 + $0x28] sm:$0xff]
    %v1073 = vld [vmem:[%s1066 + $0x30] sm:$0xff]
    %v1074 = vld [vmem:[%s1066 + $0x38] sm:$0xff]
    %v1075 = vld [vmem:[%s1066 + $0x40] sm:$0xff]
    %v1076 = vld [vmem:[%s1066 + $0x48] sm:$0xff]
    %v1077 = vld [vmem:[%s1066 + $0x50] sm:$0xff]
    %v1078 = vld [vmem:[%s1066 + $0x58] sm:$0xff]
    %v1079 = vld [vmem:[%s1066 + $0x60] sm:$0xff]
    %v1080 = vld [vmem:[%s1066 + $0x68] sm:$0xff]
    %v1081 = vld [vmem:[%s1066 + $0x70] sm:$0xff]
    %v1082 = vld [vmem:[%s1066 + $0x78] sm:$0xff]
    %v1083 = vld [vmem:[%s1066 + $0x80] sm:$0xff]
    %v1084 = vld [vmem:[%s1066 + $0x88] sm:$0xff]
    %v1085 = vld [vmem:[%s1066 + $0x90] sm:$0xff]
    %v1086 = vld [vmem:[%s1066 + $0x98] sm:$0xff]
    %v1087 = vld [vmem:[%s1066 + $0xa0] sm:$0xff]
    %v1088 = vld [vmem:[%s1066 + $0xa8] sm:$0xff]
    %v1089 = vld [vmem:[%s1066 + $0xb0] sm:$0xff]
    %v1090 = vld [vmem:[%s1066 + $0xb8] sm:$0xff]
    %v1091 = vld [vmem:[%s1066 + $0xc0] sm:$0xff]
    %v1092 = vld [vmem:[%s1066 + $0xc8] sm:$0xff]
    %v1093 = vld [vmem:[%s1066 + $0xd0] sm:$0xff]
    %v1094 = vld [vmem:[%s1066 + $0xd8] sm:$0xff]
    %v1095 = vld [vmem:[%s1066 + $0xe0] sm:$0xff]
    %v1096 = vld [vmem:[%s1066 + $0xe8] sm:$0xff]
    %v1097 = vld [vmem:[%s1066 + $0xf0] sm:$0xff]
    %v1098 = vld [vmem:[%s1066 + $0xf8] sm:$0xff]
    %v1101 = vunpack.c.l.s4 1983009808
    %v1102 = vunpack.c.0.s8 %v1101
    %v1103 = vlaneseq
    %v1104 = vshrl.u32 %v1103, 7
    %v1105 = vsub.s32 %v1102, %v1104
    %v1106 = vrot.slane %v1065, %v1105
    %v1107 = vcombine.high %v1106, %v1106
    %1110 = vmatprep.subr.mxu0 0.0
    %1111 = vmatpush1.msra.mxu0 %v1082
    %1112 = vmatprep.subr.mxu0 0.0
    %1113 = vmatpush1.msra.mxu0 %v1081
    %1114 = vmatprep.subr.mxu0 0.0
    %1115 = vmatpush1.msra.mxu0 %v1080
    %1116 = vmatprep.subr.mxu0 0.0
    %1117 = vmatpush1.msra.mxu0 %v1079
    %1118 = vmatprep.subr.mxu0 0.0
    %1119 = vmatpush1.msra.mxu0 %v1078
    %1120 = vmatprep.subr.mxu0 0.0
    %1121 = vmatpush1.msra.mxu0 %v1077
    %1122 = vmatprep.subr.mxu0 0.0
    %1123 = vmatpush1.msra.mxu0 %v1076
    %1124 = vmatprep.subr.mxu0 0.0
    %1125 = vmatpush1.msra.mxu0 %v1075
    %1126 = vmatprep.subr.mxu0 0.0
    %1127 = vmatpush1.msra.mxu0 %v1074
    %1128 = vmatprep.subr.mxu0 0.0
    %1129 = vmatpush1.msra.mxu0 %v1073
    %1130 = vmatprep.subr.mxu0 0.0
    %1131 = vmatpush1.msra.mxu0 %v1072
    %1132 = vmatprep.subr.mxu0 0.0
    %1133 = vmatpush1.msra.mxu0 %v1071
    %1134 = vmatprep.subr.mxu0 0.0
    %1135 = vmatpush1.msra.mxu0 %v1070
    %1136 = vmatprep.subr.mxu0 0.0
    %1137 = vmatpush1.msra.mxu0 %v1069
    %1138 = vmatprep.subr.mxu0 0.0
    %1139 = vmatpush1.msra.mxu0 %v1068
    %1140 = vmatprep.subr.mxu0 0.0
    %1141 = vmatpush1.msra.mxu0 %v1067
    %1142 = vmatprep.subr.mxu0 0.0
    %1143 = vmatpush2.msra.mxu0 %v1098
    %1144 = vmatprep.subr.mxu0 0.0
    %1145 = vmatpush2.msra.mxu0 %v1097
    %1146 = vmatprep.subr.mxu0 0.0
    %1147 = vmatpush2.msra.mxu0 %v1096
    %1148 = vmatprep.subr.mxu0 0.0
    %1149 = vmatpush2.msra.mxu0 %v1095
    %1150 = vmatprep.subr.mxu0 0.0
    %1151 = vmatpush2.msra.mxu0 %v1094
    %1152 = vmatprep.subr.mxu0 0.0
    %1153 = vmatpush2.msra.mxu0 %v1093
    %1154 = vmatprep.subr.mxu0 0.0
    %1155 = vmatpush2.msra.mxu0 %v1092
    %1156 = vmatprep.subr.mxu0 0.0
    %1157 = vmatpush2.msra.mxu0 %v1091
    %1158 = vmatprep.subr.mxu0 0.0
    %1159 = vmatpush2.msra.mxu0 %v1090
    %1160 = vmatprep.subr.mxu0 0.0
    %1161 = vmatpush2.msra.mxu0 %v1089
    %1162 = vmatprep.subr.mxu0 0.0
    %1163 = vmatpush2.msra.mxu0 %v1088
    %1164 = vmatprep.subr.mxu0 0.0
    %1165 = vmatpush2.msra.mxu0 %v1087
    %1166 = vmatprep.subr.mxu0 0.0
    %1167 = vmatpush2.msra.mxu0 %v1086
    %1168 = vmatprep.subr.mxu0 0.0
    %1169 = vmatpush2.msra.mxu0 %v1085
    %1170 = vmatprep.subr.mxu0 0.0
    %1171 = vmatpush2.msra.mxu0 %v1084
    %1172 = vmatprep.subr.mxu0 0.0
    %1173 = vmatpush2.msra.mxu0 %v1083
    %1174 = vmatprep.mubr.f32.mxu0 %v1107
    %1175 = vmatmul.mubr.f32.gmra.mxu0 %v1106
    %v1176 = vpop.f32.mrf.mxu0
    %v1177 = vadd.f32 0.0, %v1176
    %v1178 = vpop.f32.mrf.mxu0
    %1179 = vdwg.mxu0
    %v1180 = vadd.f32 %v1063, %v1177
    %s1181 = scalar_lea.vmem %s0, 40
    %v1182 = vld [vmem:[%s1181] sm:$0xf]
    %s1183 = scalar_lea.vmem %s1, 2560
    %v1184 = vld [vmem:[%s1183] sm:$0xff]
    %v1185 = vld [vmem:[%s1183 + $0x8] sm:$0xff]
    %v1186 = vld [vmem:[%s1183 + $0x10] sm:$0xff]
    %v1187 = vld [vmem:[%s1183 + $0x18] sm:$0xff]
    %v1188 = vld [vmem:[%s1183 + $0x20] sm:$0xff]
    %v1189 = vld [vmem:[%s1183 + $0x28] sm:$0xff]
    %v1190 = vld [vmem:[%s1183 + $0x30] sm:$0xff]
    %v1191 = vld [vmem:[%s1183 + $0x38] sm:$0xff]
    %v1192 = vld [vmem:[%s1183 + $0x40] sm:$0xff]
    %v1193 = vld [vmem:[%s1183 + $0x48] sm:$0xff]
    %v1194 = vld [vmem:[%s1183 + $0x50] sm:$0xff]
    %v1195 = vld [vmem:[%s1183 + $0x58] sm:$0xff]
    %v1196 = vld [vmem:[%s1183 + $0x60] sm:$0xff]
    %v1197 = vld [vmem:[%s1183 + $0x68] sm:$0xff]
    %v1198 = vld [vmem:[%s1183 + $0x70] sm:$0xff]
    %v1199 = vld [vmem:[%s1183 + $0x78] sm:$0xff]
    %v1200 = vld [vmem:[%s1183 + $0x80] sm:$0xff]
    %v1201 = vld [vmem:[%s1183 + $0x88] sm:$0xff]
    %v1202 = vld [vmem:[%s1183 + $0x90] sm:$0xff]
    %v1203 = vld [vmem:[%s1183 + $0x98] sm:$0xff]
    %v1204 = vld [vmem:[%s1183 + $0xa0] sm:$0xff]
    %v1205 = vld [vmem:[%s1183 + $0xa8] sm:$0xff]
    %v1206 = vld [vmem:[%s1183 + $0xb0] sm:$0xff]
    %v1207 = vld [vmem:[%s1183 + $0xb8] sm:$0xff]
    %v1208 = vld [vmem:[%s1183 + $0xc0] sm:$0xff]
    %v1209 = vld [vmem:[%s1183 + $0xc8] sm:$0xff]
    %v1210 = vld [vmem:[%s1183 + $0xd0] sm:$0xff]
    %v1211 = vld [vmem:[%s1183 + $0xd8] sm:$0xff]
    %v1212 = vld [vmem:[%s1183 + $0xe0] sm:$0xff]
    %v1213 = vld [vmem:[%s1183 + $0xe8] sm:$0xff]
    %v1214 = vld [vmem:[%s1183 + $0xf0] sm:$0xff]
    %v1215 = vld [vmem:[%s1183 + $0xf8] sm:$0xff]
    %v1218 = vunpack.c.l.s4 1983009808
    %v1219 = vunpack.c.0.s8 %v1218
    %v1220 = vlaneseq
    %v1221 = vshrl.u32 %v1220, 7
    %v1222 = vsub.s32 %v1219, %v1221
    %v1223 = vrot.slane %v1182, %v1222
    %v1224 = vcombine.high %v1223, %v1223
    %1227 = vmatprep.subr.mxu0 0.0
    %1228 = vmatpush1.msra.mxu0 %v1199
    %1229 = vmatprep.subr.mxu0 0.0
    %1230 = vmatpush1.msra.mxu0 %v1198
    %1231 = vmatprep.subr.mxu0 0.0
    %1232 = vmatpush1.msra.mxu0 %v1197
    %1233 = vmatprep.subr.mxu0 0.0
    %1234 = vmatpush1.msra.mxu0 %v1196
    %1235 = vmatprep.subr.mxu0 0.0
    %1236 = vmatpush1.msra.mxu0 %v1195
    %1237 = vmatprep.subr.mxu0 0.0
    %1238 = vmatpush1.msra.mxu0 %v1194
    %1239 = vmatprep.subr.mxu0 0.0
    %1240 = vmatpush1.msra.mxu0 %v1193
    %1241 = vmatprep.subr.mxu0 0.0
    %1242 = vmatpush1.msra.mxu0 %v1192
    %1243 = vmatprep.subr.mxu0 0.0
    %1244 = vmatpush1.msra.mxu0 %v1191
    %1245 = vmatprep.subr.mxu0 0.0
    %1246 = vmatpush1.msra.mxu0 %v1190
    %1247 = vmatprep.subr.mxu0 0.0
    %1248 = vmatpush1.msra.mxu0 %v1189
    %1249 = vmatprep.subr.mxu0 0.0
    %1250 = vmatpush1.msra.mxu0 %v1188
    %1251 = vmatprep.subr.mxu0 0.0
    %1252 = vmatpush1.msra.mxu0 %v1187
    %1253 = vmatprep.subr.mxu0 0.0
    %1254 = vmatpush1.msra.mxu0 %v1186
    %1255 = vmatprep.subr.mxu0 0.0
    %1256 = vmatpush1.msra.mxu0 %v1185
    %1257 = vmatprep.subr.mxu0 0.0
    %1258 = vmatpush1.msra.mxu0 %v1184
    %1259 = vmatprep.subr.mxu0 0.0
    %1260 = vmatpush2.msra.mxu0 %v1215
    %1261 = vmatprep.subr.mxu0 0.0
    %1262 = vmatpush2.msra.mxu0 %v1214
    %1263 = vmatprep.subr.mxu0 0.0
    %1264 = vmatpush2.msra.mxu0 %v1213
    %1265 = vmatprep.subr.mxu0 0.0
    %1266 = vmatpush2.msra.mxu0 %v1212
    %1267 = vmatprep.subr.mxu0 0.0
    %1268 = vmatpush2.msra.mxu0 %v1211
    %1269 = vmatprep.subr.mxu0 0.0
    %1270 = vmatpush2.msra.mxu0 %v1210
    %1271 = vmatprep.subr.mxu0 0.0
    %1272 = vmatpush2.msra.mxu0 %v1209
    %1273 = vmatprep.subr.mxu0 0.0
    %1274 = vmatpush2.msra.mxu0 %v1208
    %1275 = vmatprep.subr.mxu0 0.0
    %1276 = vmatpush2.msra.mxu0 %v1207
    %1277 = vmatprep.subr.mxu0 0.0
    %1278 = vmatpush2.msra.mxu0 %v1206
    %1279 = vmatprep.subr.mxu0 0.0
    %1280 = vmatpush2.msra.mxu0 %v1205
    %1281 = vmatprep.subr.mxu0 0.0
    %1282 = vmatpush2.msra.mxu0 %v1204
    %1283 = vmatprep.subr.mxu0 0.0
    %1284 = vmatpush2.msra.mxu0 %v1203
    %1285 = vmatprep.subr.mxu0 0.0
    %1286 = vmatpush2.msra.mxu0 %v1202
    %1287 = vmatprep.subr.mxu0 0.0
    %1288 = vmatpush2.msra.mxu0 %v1201
    %1289 = vmatprep.subr.mxu0 0.0
    %1290 = vmatpush2.msra.mxu0 %v1200
    %1291 = vmatprep.mubr.f32.mxu0 %v1224
    %1292 = vmatmul.mubr.f32.gmra.mxu0 %v1223
    %v1293 = vpop.f32.mrf.mxu0
    %v1294 = vadd.f32 0.0, %v1293
    %v1295 = vpop.f32.mrf.mxu0
    %1296 = vdwg.mxu0
    %v1297 = vadd.f32 %v1180, %v1294
    %s1298 = scalar_lea.vmem %s0, 44
    %v1299 = vld [vmem:[%s1298] sm:$0xf]
    %s1300 = scalar_lea.vmem %s1, 2816
    %v1301 = vld [vmem:[%s1300] sm:$0xff]
    %v1302 = vld [vmem:[%s1300 + $0x8] sm:$0xff]
    %v1303 = vld [vmem:[%s1300 + $0x10] sm:$0xff]
    %v1304 = vld [vmem:[%s1300 + $0x18] sm:$0xff]
    %v1305 = vld [vmem:[%s1300 + $0x20] sm:$0xff]
    %v1306 = vld [vmem:[%s1300 + $0x28] sm:$0xff]
    %v1307 = vld [vmem:[%s1300 + $0x30] sm:$0xff]
    %v1308 = vld [vmem:[%s1300 + $0x38] sm:$0xff]
    %v1309 = vld [vmem:[%s1300 + $0x40] sm:$0xff]
    %v1310 = vld [vmem:[%s1300 + $0x48] sm:$0xff]
    %v1311 = vld [vmem:[%s1300 + $0x50] sm:$0xff]
    %v1312 = vld [vmem:[%s1300 + $0x58] sm:$0xff]
    %v1313 = vld [vmem:[%s1300 + $0x60] sm:$0xff]
    %v1314 = vld [vmem:[%s1300 + $0x68] sm:$0xff]
    %v1315 = vld [vmem:[%s1300 + $0x70] sm:$0xff]
    %v1316 = vld [vmem:[%s1300 + $0x78] sm:$0xff]
    %v1317 = vld [vmem:[%s1300 + $0x80] sm:$0xff]
    %v1318 = vld [vmem:[%s1300 + $0x88] sm:$0xff]
    %v1319 = vld [vmem:[%s1300 + $0x90] sm:$0xff]
    %v1320 = vld [vmem:[%s1300 + $0x98] sm:$0xff]
    %v1321 = vld [vmem:[%s1300 + $0xa0] sm:$0xff]
    %v1322 = vld [vmem:[%s1300 + $0xa8] sm:$0xff]
    %v1323 = vld [vmem:[%s1300 + $0xb0] sm:$0xff]
    %v1324 = vld [vmem:[%s1300 + $0xb8] sm:$0xff]
    %v1325 = vld [vmem:[%s1300 + $0xc0] sm:$0xff]
    %v1326 = vld [vmem:[%s1300 + $0xc8] sm:$0xff]
    %v1327 = vld [vmem:[%s1300 + $0xd0] sm:$0xff]
    %v1328 = vld [vmem:[%s1300 + $0xd8] sm:$0xff]
    %v1329 = vld [vmem:[%s1300 + $0xe0] sm:$0xff]
    %v1330 = vld [vmem:[%s1300 + $0xe8] sm:$0xff]
    %v1331 = vld [vmem:[%s1300 + $0xf0] sm:$0xff]
    %v1332 = vld [vmem:[%s1300 + $0xf8] sm:$0xff]
    %v1335 = vunpack.c.l.s4 1983009808
    %v1336 = vunpack.c.0.s8 %v1335
    %v1337 = vlaneseq
    %v1338 = vshrl.u32 %v1337, 7
    %v1339 = vsub.s32 %v1336, %v1338
    %v1340 = vrot.slane %v1299, %v1339
    %v1341 = vcombine.high %v1340, %v1340
    %1344 = vmatprep.subr.mxu0 0.0
    %1345 = vmatpush1.msra.mxu0 %v1316
    %1346 = vmatprep.subr.mxu0 0.0
    %1347 = vmatpush1.msra.mxu0 %v1315
    %1348 = vmatprep.subr.mxu0 0.0
    %1349 = vmatpush1.msra.mxu0 %v1314
    %1350 = vmatprep.subr.mxu0 0.0
    %1351 = vmatpush1.msra.mxu0 %v1313
    %1352 = vmatprep.subr.mxu0 0.0
    %1353 = vmatpush1.msra.mxu0 %v1312
    %1354 = vmatprep.subr.mxu0 0.0
    %1355 = vmatpush1.msra.mxu0 %v1311
    %1356 = vmatprep.subr.mxu0 0.0
    %1357 = vmatpush1.msra.mxu0 %v1310
    %1358 = vmatprep.subr.mxu0 0.0
    %1359 = vmatpush1.msra.mxu0 %v1309
    %1360 = vmatprep.subr.mxu0 0.0
    %1361 = vmatpush1.msra.mxu0 %v1308
    %1362 = vmatprep.subr.mxu0 0.0
    %1363 = vmatpush1.msra.mxu0 %v1307
    %1364 = vmatprep.subr.mxu0 0.0
    %1365 = vmatpush1.msra.mxu0 %v1306
    %1366 = vmatprep.subr.mxu0 0.0
    %1367 = vmatpush1.msra.mxu0 %v1305
    %1368 = vmatprep.subr.mxu0 0.0
    %1369 = vmatpush1.msra.mxu0 %v1304
    %1370 = vmatprep.subr.mxu0 0.0
    %1371 = vmatpush1.msra.mxu0 %v1303
    %1372 = vmatprep.subr.mxu0 0.0
    %1373 = vmatpush1.msra.mxu0 %v1302
    %1374 = vmatprep.subr.mxu0 0.0
    %1375 = vmatpush1.msra.mxu0 %v1301
    %1376 = vmatprep.subr.mxu0 0.0
    %1377 = vmatpush2.msra.mxu0 %v1332
    %1378 = vmatprep.subr.mxu0 0.0
    %1379 = vmatpush2.msra.mxu0 %v1331
    %1380 = vmatprep.subr.mxu0 0.0
    %1381 = vmatpush2.msra.mxu0 %v1330
    %1382 = vmatprep.subr.mxu0 0.0
    %1383 = vmatpush2.msra.mxu0 %v1329
    %1384 = vmatprep.subr.mxu0 0.0
    %1385 = vmatpush2.msra.mxu0 %v1328
    %1386 = vmatprep.subr.mxu0 0.0
    %1387 = vmatpush2.msra.mxu0 %v1327
    %1388 = vmatprep.subr.mxu0 0.0
    %1389 = vmatpush2.msra.mxu0 %v1326
    %1390 = vmatprep.subr.mxu0 0.0
    %1391 = vmatpush2.msra.mxu0 %v1325
    %1392 = vmatprep.subr.mxu0 0.0
    %1393 = vmatpush2.msra.mxu0 %v1324
    %1394 = vmatprep.subr.mxu0 0.0
    %1395 = vmatpush2.msra.mxu0 %v1323
    %1396 = vmatprep.subr.mxu0 0.0
    %1397 = vmatpush2.msra.mxu0 %v1322
    %1398 = vmatprep.subr.mxu0 0.0
    %1399 = vmatpush2.msra.mxu0 %v1321
    %1400 = vmatprep.subr.mxu0 0.0
    %1401 = vmatpush2.msra.mxu0 %v1320
    %1402 = vmatprep.subr.mxu0 0.0
    %1403 = vmatpush2.msra.mxu0 %v1319
    %1404 = vmatprep.subr.mxu0 0.0
    %1405 = vmatpush2.msra.mxu0 %v1318
    %1406 = vmatprep.subr.mxu0 0.0
    %1407 = vmatpush2.msra.mxu0 %v1317
    %1408 = vmatprep.mubr.f32.mxu0 %v1341
    %1409 = vmatmul.mubr.f32.gmra.mxu0 %v1340
    %v1410 = vpop.f32.mrf.mxu0
    %v1411 = vadd.f32 0.0, %v1410
    %v1412 = vpop.f32.mrf.mxu0
    %1413 = vdwg.mxu0
    %v1414 = vadd.f32 %v1297, %v1411
    %s1415 = scalar_lea.vmem %s0, 48
    %v1416 = vld [vmem:[%s1415] sm:$0xf]
    %s1417 = scalar_lea.vmem %s1, 3072
    %v1418 = vld [vmem:[%s1417] sm:$0xff]
    %v1419 = vld [vmem:[%s1417 + $0x8] sm:$0xff]
    %v1420 = vld [vmem:[%s1417 + $0x10] sm:$0xff]
    %v1421 = vld [vmem:[%s1417 + $0x18] sm:$0xff]
    %v1422 = vld [vmem:[%s1417 + $0x20] sm:$0xff]
    %v1423 = vld [vmem:[%s1417 + $0x28] sm:$0xff]
    %v1424 = vld [vmem:[%s1417 + $0x30] sm:$0xff]
    %v1425 = vld [vmem:[%s1417 + $0x38] sm:$0xff]
    %v1426 = vld [vmem:[%s1417 + $0x40] sm:$0xff]
    %v1427 = vld [vmem:[%s1417 + $0x48] sm:$0xff]
    %v1428 = vld [vmem:[%s1417 + $0x50] sm:$0xff]
    %v1429 = vld [vmem:[%s1417 + $0x58] sm:$0xff]
    %v1430 = vld [vmem:[%s1417 + $0x60] sm:$0xff]
    %v1431 = vld [vmem:[%s1417 + $0x68] sm:$0xff]
    %v1432 = vld [vmem:[%s1417 + $0x70] sm:$0xff]
    %v1433 = vld [vmem:[%s1417 + $0x78] sm:$0xff]
    %v1434 = vld [vmem:[%s1417 + $0x80] sm:$0xff]
    %v1435 = vld [vmem:[%s1417 + $0x88] sm:$0xff]
    %v1436 = vld [vmem:[%s1417 + $0x90] sm:$0xff]
    %v1437 = vld [vmem:[%s1417 + $0x98] sm:$0xff]
    %v1438 = vld [vmem:[%s1417 + $0xa0] sm:$0xff]
    %v1439 = vld [vmem:[%s1417 + $0xa8] sm:$0xff]
    %v1440 = vld [vmem:[%s1417 + $0xb0] sm:$0xff]
    %v1441 = vld [vmem:[%s1417 + $0xb8] sm:$0xff]
    %v1442 = vld [vmem:[%s1417 + $0xc0] sm:$0xff]
    %v1443 = vld [vmem:[%s1417 + $0xc8] sm:$0xff]
    %v1444 = vld [vmem:[%s1417 + $0xd0] sm:$0xff]
    %v1445 = vld [vmem:[%s1417 + $0xd8] sm:$0xff]
    %v1446 = vld [vmem:[%s1417 + $0xe0] sm:$0xff]
    %v1447 = vld [vmem:[%s1417 + $0xe8] sm:$0xff]
    %v1448 = vld [vmem:[%s1417 + $0xf0] sm:$0xff]
    %v1449 = vld [vmem:[%s1417 + $0xf8] sm:$0xff]
    %v1452 = vunpack.c.l.s4 1983009808
    %v1453 = vunpack.c.0.s8 %v1452
    %v1454 = vlaneseq
    %v1455 = vshrl.u32 %v1454, 7
    %v1456 = vsub.s32 %v1453, %v1455
    %v1457 = vrot.slane %v1416, %v1456
    %v1458 = vcombine.high %v1457, %v1457
    %1461 = vmatprep.subr.mxu0 0.0
    %1462 = vmatpush1.msra.mxu0 %v1433
    %1463 = vmatprep.subr.mxu0 0.0
    %1464 = vmatpush1.msra.mxu0 %v1432
    %1465 = vmatprep.subr.mxu0 0.0
    %1466 = vmatpush1.msra.mxu0 %v1431
    %1467 = vmatprep.subr.mxu0 0.0
    %1468 = vmatpush1.msra.mxu0 %v1430
    %1469 = vmatprep.subr.mxu0 0.0
    %1470 = vmatpush1.msra.mxu0 %v1429
    %1471 = vmatprep.subr.mxu0 0.0
    %1472 = vmatpush1.msra.mxu0 %v1428
    %1473 = vmatprep.subr.mxu0 0.0
    %1474 = vmatpush1.msra.mxu0 %v1427
    %1475 = vmatprep.subr.mxu0 0.0
    %1476 = vmatpush1.msra.mxu0 %v1426
    %1477 = vmatprep.subr.mxu0 0.0
    %1478 = vmatpush1.msra.mxu0 %v1425
    %1479 = vmatprep.subr.mxu0 0.0
    %1480 = vmatpush1.msra.mxu0 %v1424
    %1481 = vmatprep.subr.mxu0 0.0
    %1482 = vmatpush1.msra.mxu0 %v1423
    %1483 = vmatprep.subr.mxu0 0.0
    %1484 = vmatpush1.msra.mxu0 %v1422
    %1485 = vmatprep.subr.mxu0 0.0
    %1486 = vmatpush1.msra.mxu0 %v1421
    %1487 = vmatprep.subr.mxu0 0.0
    %1488 = vmatpush1.msra.mxu0 %v1420
    %1489 = vmatprep.subr.mxu0 0.0
    %1490 = vmatpush1.msra.mxu0 %v1419
    %1491 = vmatprep.subr.mxu0 0.0
    %1492 = vmatpush1.msra.mxu0 %v1418
    %1493 = vmatprep.subr.mxu0 0.0
    %1494 = vmatpush2.msra.mxu0 %v1449
    %1495 = vmatprep.subr.mxu0 0.0
    %1496 = vmatpush2.msra.mxu0 %v1448
    %1497 = vmatprep.subr.mxu0 0.0
    %1498 = vmatpush2.msra.mxu0 %v1447
    %1499 = vmatprep.subr.mxu0 0.0
    %1500 = vmatpush2.msra.mxu0 %v1446
    %1501 = vmatprep.subr.mxu0 0.0
    %1502 = vmatpush2.msra.mxu0 %v1445
    %1503 = vmatprep.subr.mxu0 0.0
    %1504 = vmatpush2.msra.mxu0 %v1444
    %1505 = vmatprep.subr.mxu0 0.0
    %1506 = vmatpush2.msra.mxu0 %v1443
    %1507 = vmatprep.subr.mxu0 0.0
    %1508 = vmatpush2.msra.mxu0 %v1442
    %1509 = vmatprep.subr.mxu0 0.0
    %1510 = vmatpush2.msra.mxu0 %v1441
    %1511 = vmatprep.subr.mxu0 0.0
    %1512 = vmatpush2.msra.mxu0 %v1440
    %1513 = vmatprep.subr.mxu0 0.0
    %1514 = vmatpush2.msra.mxu0 %v1439
    %1515 = vmatprep.subr.mxu0 0.0
    %1516 = vmatpush2.msra.mxu0 %v1438
    %1517 = vmatprep.subr.mxu0 0.0
    %1518 = vmatpush2.msra.mxu0 %v1437
    %1519 = vmatprep.subr.mxu0 0.0
    %1520 = vmatpush2.msra.mxu0 %v1436
    %1521 = vmatprep.subr.mxu0 0.0
    %1522 = vmatpush2.msra.mxu0 %v1435
    %1523 = vmatprep.subr.mxu0 0.0
    %1524 = vmatpush2.msra.mxu0 %v1434
    %1525 = vmatprep.mubr.f32.mxu0 %v1458
    %1526 = vmatmul.mubr.f32.gmra.mxu0 %v1457
    %v1527 = vpop.f32.mrf.mxu0
    %v1528 = vadd.f32 0.0, %v1527
    %v1529 = vpop.f32.mrf.mxu0
    %1530 = vdwg.mxu0
    %v1531 = vadd.f32 %v1414, %v1528
    %s1532 = scalar_lea.vmem %s0, 52
    %v1533 = vld [vmem:[%s1532] sm:$0xf]
    %s1534 = scalar_lea.vmem %s1, 3328
    %v1535 = vld [vmem:[%s1534] sm:$0xff]
    %v1536 = vld [vmem:[%s1534 + $0x8] sm:$0xff]
    %v1537 = vld [vmem:[%s1534 + $0x10] sm:$0xff]
    %v1538 = vld [vmem:[%s1534 + $0x18] sm:$0xff]
    %v1539 = vld [vmem:[%s1534 + $0x20] sm:$0xff]
    %v1540 = vld [vmem:[%s1534 + $0x28] sm:$0xff]
    %v1541 = vld [vmem:[%s1534 + $0x30] sm:$0xff]
    %v1542 = vld [vmem:[%s1534 + $0x38] sm:$0xff]
    %v1543 = vld [vmem:[%s1534 + $0x40] sm:$0xff]
    %v1544 = vld [vmem:[%s1534 + $0x48] sm:$0xff]
    %v1545 = vld [vmem:[%s1534 + $0x50] sm:$0xff]
    %v1546 = vld [vmem:[%s1534 + $0x58] sm:$0xff]
    %v1547 = vld [vmem:[%s1534 + $0x60] sm:$0xff]
    %v1548 = vld [vmem:[%s1534 + $0x68] sm:$0xff]
    %v1549 = vld [vmem:[%s1534 + $0x70] sm:$0xff]
    %v1550 = vld [vmem:[%s1534 + $0x78] sm:$0xff]
    %v1551 = vld [vmem:[%s1534 + $0x80] sm:$0xff]
    %v1552 = vld [vmem:[%s1534 + $0x88] sm:$0xff]
    %v1553 = vld [vmem:[%s1534 + $0x90] sm:$0xff]
    %v1554 = vld [vmem:[%s1534 + $0x98] sm:$0xff]
    %v1555 = vld [vmem:[%s1534 + $0xa0] sm:$0xff]
    %v1556 = vld [vmem:[%s1534 + $0xa8] sm:$0xff]
    %v1557 = vld [vmem:[%s1534 + $0xb0] sm:$0xff]
    %v1558 = vld [vmem:[%s1534 + $0xb8] sm:$0xff]
    %v1559 = vld [vmem:[%s1534 + $0xc0] sm:$0xff]
    %v1560 = vld [vmem:[%s1534 + $0xc8] sm:$0xff]
    %v1561 = vld [vmem:[%s1534 + $0xd0] sm:$0xff]
    %v1562 = vld [vmem:[%s1534 + $0xd8] sm:$0xff]
    %v1563 = vld [vmem:[%s1534 + $0xe0] sm:$0xff]
    %v1564 = vld [vmem:[%s1534 + $0xe8] sm:$0xff]
    %v1565 = vld [vmem:[%s1534 + $0xf0] sm:$0xff]
    %v1566 = vld [vmem:[%s1534 + $0xf8] sm:$0xff]
    %v1569 = vunpack.c.l.s4 1983009808
    %v1570 = vunpack.c.0.s8 %v1569
    %v1571 = vlaneseq
    %v1572 = vshrl.u32 %v1571, 7
    %v1573 = vsub.s32 %v1570, %v1572
    %v1574 = vrot.slane %v1533, %v1573
    %v1575 = vcombine.high %v1574, %v1574
    %1578 = vmatprep.subr.mxu0 0.0
    %1579 = vmatpush1.msra.mxu0 %v1550
    %1580 = vmatprep.subr.mxu0 0.0
    %1581 = vmatpush1.msra.mxu0 %v1549
    %1582 = vmatprep.subr.mxu0 0.0
    %1583 = vmatpush1.msra.mxu0 %v1548
    %1584 = vmatprep.subr.mxu0 0.0
    %1585 = vmatpush1.msra.mxu0 %v1547
    %1586 = vmatprep.subr.mxu0 0.0
    %1587 = vmatpush1.msra.mxu0 %v1546
    %1588 = vmatprep.subr.mxu0 0.0
    %1589 = vmatpush1.msra.mxu0 %v1545
    %1590 = vmatprep.subr.mxu0 0.0
    %1591 = vmatpush1.msra.mxu0 %v1544
    %1592 = vmatprep.subr.mxu0 0.0
    %1593 = vmatpush1.msra.mxu0 %v1543
    %1594 = vmatprep.subr.mxu0 0.0
    %1595 = vmatpush1.msra.mxu0 %v1542
    %1596 = vmatprep.subr.mxu0 0.0
    %1597 = vmatpush1.msra.mxu0 %v1541
    %1598 = vmatprep.subr.mxu0 0.0
    %1599 = vmatpush1.msra.mxu0 %v1540
    %1600 = vmatprep.subr.mxu0 0.0
    %1601 = vmatpush1.msra.mxu0 %v1539
    %1602 = vmatprep.subr.mxu0 0.0
    %1603 = vmatpush1.msra.mxu0 %v1538
    %1604 = vmatprep.subr.mxu0 0.0
    %1605 = vmatpush1.msra.mxu0 %v1537
    %1606 = vmatprep.subr.mxu0 0.0
    %1607 = vmatpush1.msra.mxu0 %v1536
    %1608 = vmatprep.subr.mxu0 0.0
    %1609 = vmatpush1.msra.mxu0 %v1535
    %1610 = vmatprep.subr.mxu0 0.0
    %1611 = vmatpush2.msra.mxu0 %v1566
    %1612 = vmatprep.subr.mxu0 0.0
    %1613 = vmatpush2.msra.mxu0 %v1565
    %1614 = vmatprep.subr.mxu0 0.0
    %1615 = vmatpush2.msra.mxu0 %v1564
    %1616 = vmatprep.subr.mxu0 0.0
    %1617 = vmatpush2.msra.mxu0 %v1563
    %1618 = vmatprep.subr.mxu0 0.0
    %1619 = vmatpush2.msra.mxu0 %v1562
    %1620 = vmatprep.subr.mxu0 0.0
    %1621 = vmatpush2.msra.mxu0 %v1561
    %1622 = vmatprep.subr.mxu0 0.0
    %1623 = vmatpush2.msra.mxu0 %v1560
    %1624 = vmatprep.subr.mxu0 0.0
    %1625 = vmatpush2.msra.mxu0 %v1559
    %1626 = vmatprep.subr.mxu0 0.0
    %1627 = vmatpush2.msra.mxu0 %v1558
    %1628 = vmatprep.subr.mxu0 0.0
    %1629 = vmatpush2.msra.mxu0 %v1557
    %1630 = vmatprep.subr.mxu0 0.0
    %1631 = vmatpush2.msra.mxu0 %v1556
    %1632 = vmatprep.subr.mxu0 0.0
    %1633 = vmatpush2.msra.mxu0 %v1555
    %1634 = vmatprep.subr.mxu0 0.0
    %1635 = vmatpush2.msra.mxu0 %v1554
    %1636 = vmatprep.subr.mxu0 0.0
    %1637 = vmatpush2.msra.mxu0 %v1553
    %1638 = vmatprep.subr.mxu0 0.0
    %1639 = vmatpush2.msra.mxu0 %v1552
    %1640 = vmatprep.subr.mxu0 0.0
    %1641 = vmatpush2.msra.mxu0 %v1551
    %1642 = vmatprep.mubr.f32.mxu0 %v1575
    %1643 = vmatmul.mubr.f32.gmra.mxu0 %v1574
    %v1644 = vpop.f32.mrf.mxu0
    %v1645 = vadd.f32 0.0, %v1644
    %v1646 = vpop.f32.mrf.mxu0
    %1647 = vdwg.mxu0
    %v1648 = vadd.f32 %v1531, %v1645
    %s1649 = scalar_lea.vmem %s0, 56
    %v1650 = vld [vmem:[%s1649] sm:$0xf]
    %s1651 = scalar_lea.vmem %s1, 3584
    %v1652 = vld [vmem:[%s1651] sm:$0xff]
    %v1653 = vld [vmem:[%s1651 + $0x8] sm:$0xff]
    %v1654 = vld [vmem:[%s1651 + $0x10] sm:$0xff]
    %v1655 = vld [vmem:[%s1651 + $0x18] sm:$0xff]
    %v1656 = vld [vmem:[%s1651 + $0x20] sm:$0xff]
    %v1657 = vld [vmem:[%s1651 + $0x28] sm:$0xff]
    %v1658 = vld [vmem:[%s1651 + $0x30] sm:$0xff]
    %v1659 = vld [vmem:[%s1651 + $0x38] sm:$0xff]
    %v1660 = vld [vmem:[%s1651 + $0x40] sm:$0xff]
    %v1661 = vld [vmem:[%s1651 + $0x48] sm:$0xff]
    %v1662 = vld [vmem:[%s1651 + $0x50] sm:$0xff]
    %v1663 = vld [vmem:[%s1651 + $0x58] sm:$0xff]
    %v1664 = vld [vmem:[%s1651 + $0x60] sm:$0xff]
    %v1665 = vld [vmem:[%s1651 + $0x68] sm:$0xff]
    %v1666 = vld [vmem:[%s1651 + $0x70] sm:$0xff]
    %v1667 = vld [vmem:[%s1651 + $0x78] sm:$0xff]
    %v1668 = vld [vmem:[%s1651 + $0x80] sm:$0xff]
    %v1669 = vld [vmem:[%s1651 + $0x88] sm:$0xff]
    %v1670 = vld [vmem:[%s1651 + $0x90] sm:$0xff]
    %v1671 = vld [vmem:[%s1651 + $0x98] sm:$0xff]
    %v1672 = vld [vmem:[%s1651 + $0xa0] sm:$0xff]
    %v1673 = vld [vmem:[%s1651 + $0xa8] sm:$0xff]
    %v1674 = vld [vmem:[%s1651 + $0xb0] sm:$0xff]
    %v1675 = vld [vmem:[%s1651 + $0xb8] sm:$0xff]
    %v1676 = vld [vmem:[%s1651 + $0xc0] sm:$0xff]
    %v1677 = vld [vmem:[%s1651 + $0xc8] sm:$0xff]
    %v1678 = vld [vmem:[%s1651 + $0xd0] sm:$0xff]
    %v1679 = vld [vmem:[%s1651 + $0xd8] sm:$0xff]
    %v1680 = vld [vmem:[%s1651 + $0xe0] sm:$0xff]
    %v1681 = vld [vmem:[%s1651 + $0xe8] sm:$0xff]
    %v1682 = vld [vmem:[%s1651 + $0xf0] sm:$0xff]
    %v1683 = vld [vmem:[%s1651 + $0xf8] sm:$0xff]
    %v1686 = vunpack.c.l.s4 1983009808
    %v1687 = vunpack.c.0.s8 %v1686
    %v1688 = vlaneseq
    %v1689 = vshrl.u32 %v1688, 7
    %v1690 = vsub.s32 %v1687, %v1689
    %v1691 = vrot.slane %v1650, %v1690
    %v1692 = vcombine.high %v1691, %v1691
    %1695 = vmatprep.subr.mxu0 0.0
    %1696 = vmatpush1.msra.mxu0 %v1667
    %1697 = vmatprep.subr.mxu0 0.0
    %1698 = vmatpush1.msra.mxu0 %v1666
    %1699 = vmatprep.subr.mxu0 0.0
    %1700 = vmatpush1.msra.mxu0 %v1665
    %1701 = vmatprep.subr.mxu0 0.0
    %1702 = vmatpush1.msra.mxu0 %v1664
    %1703 = vmatprep.subr.mxu0 0.0
    %1704 = vmatpush1.msra.mxu0 %v1663
    %1705 = vmatprep.subr.mxu0 0.0
    %1706 = vmatpush1.msra.mxu0 %v1662
    %1707 = vmatprep.subr.mxu0 0.0
    %1708 = vmatpush1.msra.mxu0 %v1661
    %1709 = vmatprep.subr.mxu0 0.0
    %1710 = vmatpush1.msra.mxu0 %v1660
    %1711 = vmatprep.subr.mxu0 0.0
    %1712 = vmatpush1.msra.mxu0 %v1659
    %1713 = vmatprep.subr.mxu0 0.0
    %1714 = vmatpush1.msra.mxu0 %v1658
    %1715 = vmatprep.subr.mxu0 0.0
    %1716 = vmatpush1.msra.mxu0 %v1657
    %1717 = vmatprep.subr.mxu0 0.0
    %1718 = vmatpush1.msra.mxu0 %v1656
    %1719 = vmatprep.subr.mxu0 0.0
    %1720 = vmatpush1.msra.mxu0 %v1655
    %1721 = vmatprep.subr.mxu0 0.0
    %1722 = vmatpush1.msra.mxu0 %v1654
    %1723 = vmatprep.subr.mxu0 0.0
    %1724 = vmatpush1.msra.mxu0 %v1653
    %1725 = vmatprep.subr.mxu0 0.0
    %1726 = vmatpush1.msra.mxu0 %v1652
    %1727 = vmatprep.subr.mxu0 0.0
    %1728 = vmatpush2.msra.mxu0 %v1683
    %1729 = vmatprep.subr.mxu0 0.0
    %1730 = vmatpush2.msra.mxu0 %v1682
    %1731 = vmatprep.subr.mxu0 0.0
    %1732 = vmatpush2.msra.mxu0 %v1681
    %1733 = vmatprep.subr.mxu0 0.0
    %1734 = vmatpush2.msra.mxu0 %v1680
    %1735 = vmatprep.subr.mxu0 0.0
    %1736 = vmatpush2.msra.mxu0 %v1679
    %1737 = vmatprep.subr.mxu0 0.0
    %1738 = vmatpush2.msra.mxu0 %v1678
    %1739 = vmatprep.subr.mxu0 0.0
    %1740 = vmatpush2.msra.mxu0 %v1677
    %1741 = vmatprep.subr.mxu0 0.0
    %1742 = vmatpush2.msra.mxu0 %v1676
    %1743 = vmatprep.subr.mxu0 0.0
    %1744 = vmatpush2.msra.mxu0 %v1675
    %1745 = vmatprep.subr.mxu0 0.0
    %1746 = vmatpush2.msra.mxu0 %v1674
    %1747 = vmatprep.subr.mxu0 0.0
    %1748 = vmatpush2.msra.mxu0 %v1673
    %1749 = vmatprep.subr.mxu0 0.0
    %1750 = vmatpush2.msra.mxu0 %v1672
    %1751 = vmatprep.subr.mxu0 0.0
    %1752 = vmatpush2.msra.mxu0 %v1671
    %1753 = vmatprep.subr.mxu0 0.0
    %1754 = vmatpush2.msra.mxu0 %v1670
    %1755 = vmatprep.subr.mxu0 0.0
    %1756 = vmatpush2.msra.mxu0 %v1669
    %1757 = vmatprep.subr.mxu0 0.0
    %1758 = vmatpush2.msra.mxu0 %v1668
    %1759 = vmatprep.mubr.f32.mxu0 %v1692
    %1760 = vmatmul.mubr.f32.gmra.mxu0 %v1691
    %v1761 = vpop.f32.mrf.mxu0
    %v1762 = vadd.f32 0.0, %v1761
    %v1763 = vpop.f32.mrf.mxu0
    %1764 = vdwg.mxu0
    %v1765 = vadd.f32 %v1648, %v1762
    %s1766 = scalar_lea.vmem %s0, 60
    %v1767 = vld [vmem:[%s1766] sm:$0xf]
    %s1768 = scalar_lea.vmem %s1, 3840
    %v1769 = vld [vmem:[%s1768] sm:$0xff]
    %v1770 = vld [vmem:[%s1768 + $0x8] sm:$0xff]
    %v1771 = vld [vmem:[%s1768 + $0x10] sm:$0xff]
    %v1772 = vld [vmem:[%s1768 + $0x18] sm:$0xff]
    %v1773 = vld [vmem:[%s1768 + $0x20] sm:$0xff]
    %v1774 = vld [vmem:[%s1768 + $0x28] sm:$0xff]
    %v1775 = vld [vmem:[%s1768 + $0x30] sm:$0xff]
    %v1776 = vld [vmem:[%s1768 + $0x38] sm:$0xff]
    %v1777 = vld [vmem:[%s1768 + $0x40] sm:$0xff]
    %v1778 = vld [vmem:[%s1768 + $0x48] sm:$0xff]
    %v1779 = vld [vmem:[%s1768 + $0x50] sm:$0xff]
    %v1780 = vld [vmem:[%s1768 + $0x58] sm:$0xff]
    %v1781 = vld [vmem:[%s1768 + $0x60] sm:$0xff]
    %v1782 = vld [vmem:[%s1768 + $0x68] sm:$0xff]
    %v1783 = vld [vmem:[%s1768 + $0x70] sm:$0xff]
    %v1784 = vld [vmem:[%s1768 + $0x78] sm:$0xff]
    %v1785 = vld [vmem:[%s1768 + $0x80] sm:$0xff]
    %v1786 = vld [vmem:[%s1768 + $0x88] sm:$0xff]
    %v1787 = vld [vmem:[%s1768 + $0x90] sm:$0xff]
    %v1788 = vld [vmem:[%s1768 + $0x98] sm:$0xff]
    %v1789 = vld [vmem:[%s1768 + $0xa0] sm:$0xff]
    %v1790 = vld [vmem:[%s1768 + $0xa8] sm:$0xff]
    %v1791 = vld [vmem:[%s1768 + $0xb0] sm:$0xff]
    %v1792 = vld [vmem:[%s1768 + $0xb8] sm:$0xff]
    %v1793 = vld [vmem:[%s1768 + $0xc0] sm:$0xff]
    %v1794 = vld [vmem:[%s1768 + $0xc8] sm:$0xff]
    %v1795 = vld [vmem:[%s1768 + $0xd0] sm:$0xff]
    %v1796 = vld [vmem:[%s1768 + $0xd8] sm:$0xff]
    %v1797 = vld [vmem:[%s1768 + $0xe0] sm:$0xff]
    %v1798 = vld [vmem:[%s1768 + $0xe8] sm:$0xff]
    %v1799 = vld [vmem:[%s1768 + $0xf0] sm:$0xff]
    %v1800 = vld [vmem:[%s1768 + $0xf8] sm:$0xff]
    %v1803 = vunpack.c.l.s4 1983009808
    %v1804 = vunpack.c.0.s8 %v1803
    %v1805 = vlaneseq
    %v1806 = vshrl.u32 %v1805, 7
    %v1807 = vsub.s32 %v1804, %v1806
    %v1808 = vrot.slane %v1767, %v1807
    %v1809 = vcombine.high %v1808, %v1808
    %1812 = vmatprep.subr.mxu0 0.0
    %1813 = vmatpush1.msra.mxu0 %v1784
    %1814 = vmatprep.subr.mxu0 0.0
    %1815 = vmatpush1.msra.mxu0 %v1783
    %1816 = vmatprep.subr.mxu0 0.0
    %1817 = vmatpush1.msra.mxu0 %v1782
    %1818 = vmatprep.subr.mxu0 0.0
    %1819 = vmatpush1.msra.mxu0 %v1781
    %1820 = vmatprep.subr.mxu0 0.0
    %1821 = vmatpush1.msra.mxu0 %v1780
    %1822 = vmatprep.subr.mxu0 0.0
    %1823 = vmatpush1.msra.mxu0 %v1779
    %1824 = vmatprep.subr.mxu0 0.0
    %1825 = vmatpush1.msra.mxu0 %v1778
    %1826 = vmatprep.subr.mxu0 0.0
    %1827 = vmatpush1.msra.mxu0 %v1777
    %1828 = vmatprep.subr.mxu0 0.0
    %1829 = vmatpush1.msra.mxu0 %v1776
    %1830 = vmatprep.subr.mxu0 0.0
    %1831 = vmatpush1.msra.mxu0 %v1775
    %1832 = vmatprep.subr.mxu0 0.0
    %1833 = vmatpush1.msra.mxu0 %v1774
    %1834 = vmatprep.subr.mxu0 0.0
    %1835 = vmatpush1.msra.mxu0 %v1773
    %1836 = vmatprep.subr.mxu0 0.0
    %1837 = vmatpush1.msra.mxu0 %v1772
    %1838 = vmatprep.subr.mxu0 0.0
    %1839 = vmatpush1.msra.mxu0 %v1771
    %1840 = vmatprep.subr.mxu0 0.0
    %1841 = vmatpush1.msra.mxu0 %v1770
    %1842 = vmatprep.subr.mxu0 0.0
    %1843 = vmatpush1.msra.mxu0 %v1769
    %1844 = vmatprep.subr.mxu0 0.0
    %1845 = vmatpush2.msra.mxu0 %v1800
    %1846 = vmatprep.subr.mxu0 0.0
    %1847 = vmatpush2.msra.mxu0 %v1799
    %1848 = vmatprep.subr.mxu0 0.0
    %1849 = vmatpush2.msra.mxu0 %v1798
    %1850 = vmatprep.subr.mxu0 0.0
    %1851 = vmatpush2.msra.mxu0 %v1797
    %1852 = vmatprep.subr.mxu0 0.0
    %1853 = vmatpush2.msra.mxu0 %v1796
    %1854 = vmatprep.subr.mxu0 0.0
    %1855 = vmatpush2.msra.mxu0 %v1795
    %1856 = vmatprep.subr.mxu0 0.0
    %1857 = vmatpush2.msra.mxu0 %v1794
    %1858 = vmatprep.subr.mxu0 0.0
    %1859 = vmatpush2.msra.mxu0 %v1793
    %1860 = vmatprep.subr.mxu0 0.0
    %1861 = vmatpush2.msra.mxu0 %v1792
    %1862 = vmatprep.subr.mxu0 0.0
    %1863 = vmatpush2.msra.mxu0 %v1791
    %1864 = vmatprep.subr.mxu0 0.0
    %1865 = vmatpush2.msra.mxu0 %v1790
    %1866 = vmatprep.subr.mxu0 0.0
    %1867 = vmatpush2.msra.mxu0 %v1789
    %1868 = vmatprep.subr.mxu0 0.0
    %1869 = vmatpush2.msra.mxu0 %v1788
    %1870 = vmatprep.subr.mxu0 0.0
    %1871 = vmatpush2.msra.mxu0 %v1787
    %1872 = vmatprep.subr.mxu0 0.0
    %1873 = vmatpush2.msra.mxu0 %v1786
    %1874 = vmatprep.subr.mxu0 0.0
    %1875 = vmatpush2.msra.mxu0 %v1785
    %1876 = vmatprep.mubr.f32.mxu0 %v1809
    %1877 = vmatmul.mubr.f32.gmra.mxu0 %v1808
    %v1878 = vpop.f32.mrf.mxu0
    %v1879 = vadd.f32 0.0, %v1878
    %v1880 = vpop.f32.mrf.mxu0
    %1881 = vdwg.mxu0
    %v1882 = vadd.f32 %v1765, %v1879
    %s1883 = scalar_lea.vmem %s0, 64
    %v1884 = vld [vmem:[%s1883] sm:$0xf]
    %s1885 = scalar_lea.vmem %s1, 4096
    %v1886 = vld [vmem:[%s1885] sm:$0xff]
    %v1887 = vld [vmem:[%s1885 + $0x8] sm:$0xff]
    %v1888 = vld [vmem:[%s1885 + $0x10] sm:$0xff]
    %v1889 = vld [vmem:[%s1885 + $0x18] sm:$0xff]
    %v1890 = vld [vmem:[%s1885 + $0x20] sm:$0xff]
    %v1891 = vld [vmem:[%s1885 + $0x28] sm:$0xff]
    %v1892 = vld [vmem:[%s1885 + $0x30] sm:$0xff]
    %v1893 = vld [vmem:[%s1885 + $0x38] sm:$0xff]
    %v1894 = vld [vmem:[%s1885 + $0x40] sm:$0xff]
    %v1895 = vld [vmem:[%s1885 + $0x48] sm:$0xff]
    %v1896 = vld [vmem:[%s1885 + $0x50] sm:$0xff]
    %v1897 = vld [vmem:[%s1885 + $0x58] sm:$0xff]
    %v1898 = vld [vmem:[%s1885 + $0x60] sm:$0xff]
    %v1899 = vld [vmem:[%s1885 + $0x68] sm:$0xff]
    %v1900 = vld [vmem:[%s1885 + $0x70] sm:$0xff]
    %v1901 = vld [vmem:[%s1885 + $0x78] sm:$0xff]
    %v1902 = vld [vmem:[%s1885 + $0x80] sm:$0xff]
    %v1903 = vld [vmem:[%s1885 + $0x88] sm:$0xff]
    %v1904 = vld [vmem:[%s1885 + $0x90] sm:$0xff]
    %v1905 = vld [vmem:[%s1885 + $0x98] sm:$0xff]
    %v1906 = vld [vmem:[%s1885 + $0xa0] sm:$0xff]
    %v1907 = vld [vmem:[%s1885 + $0xa8] sm:$0xff]
    %v1908 = vld [vmem:[%s1885 + $0xb0] sm:$0xff]
    %v1909 = vld [vmem:[%s1885 + $0xb8] sm:$0xff]
    %v1910 = vld [vmem:[%s1885 + $0xc0] sm:$0xff]
    %v1911 = vld [vmem:[%s1885 + $0xc8] sm:$0xff]
    %v1912 = vld [vmem:[%s1885 + $0xd0] sm:$0xff]
    %v1913 = vld [vmem:[%s1885 + $0xd8] sm:$0xff]
    %v1914 = vld [vmem:[%s1885 + $0xe0] sm:$0xff]
    %v1915 = vld [vmem:[%s1885 + $0xe8] sm:$0xff]
    %v1916 = vld [vmem:[%s1885 + $0xf0] sm:$0xff]
    %v1917 = vld [vmem:[%s1885 + $0xf8] sm:$0xff]
    %v1920 = vunpack.c.l.s4 1983009808
    %v1921 = vunpack.c.0.s8 %v1920
    %v1922 = vlaneseq
    %v1923 = vshrl.u32 %v1922, 7
    %v1924 = vsub.s32 %v1921, %v1923
    %v1925 = vrot.slane %v1884, %v1924
    %v1926 = vcombine.high %v1925, %v1925
    %1929 = vmatprep.subr.mxu0 0.0
    %1930 = vmatpush1.msra.mxu0 %v1901
    %1931 = vmatprep.subr.mxu0 0.0
    %1932 = vmatpush1.msra.mxu0 %v1900
    %1933 = vmatprep.subr.mxu0 0.0
    %1934 = vmatpush1.msra.mxu0 %v1899
    %1935 = vmatprep.subr.mxu0 0.0
    %1936 = vmatpush1.msra.mxu0 %v1898
    %1937 = vmatprep.subr.mxu0 0.0
    %1938 = vmatpush1.msra.mxu0 %v1897
    %1939 = vmatprep.subr.mxu0 0.0
    %1940 = vmatpush1.msra.mxu0 %v1896
    %1941 = vmatprep.subr.mxu0 0.0
    %1942 = vmatpush1.msra.mxu0 %v1895
    %1943 = vmatprep.subr.mxu0 0.0
    %1944 = vmatpush1.msra.mxu0 %v1894
    %1945 = vmatprep.subr.mxu0 0.0
    %1946 = vmatpush1.msra.mxu0 %v1893
    %1947 = vmatprep.subr.mxu0 0.0
    %1948 = vmatpush1.msra.mxu0 %v1892
    %1949 = vmatprep.subr.mxu0 0.0
    %1950 = vmatpush1.msra.mxu0 %v1891
    %1951 = vmatprep.subr.mxu0 0.0
    %1952 = vmatpush1.msra.mxu0 %v1890
    %1953 = vmatprep.subr.mxu0 0.0
    %1954 = vmatpush1.msra.mxu0 %v1889
    %1955 = vmatprep.subr.mxu0 0.0
    %1956 = vmatpush1.msra.mxu0 %v1888
    %1957 = vmatprep.subr.mxu0 0.0
    %1958 = vmatpush1.msra.mxu0 %v1887
    %1959 = vmatprep.subr.mxu0 0.0
    %1960 = vmatpush1.msra.mxu0 %v1886
    %1961 = vmatprep.subr.mxu0 0.0
    %1962 = vmatpush2.msra.mxu0 %v1917
    %1963 = vmatprep.subr.mxu0 0.0
    %1964 = vmatpush2.msra.mxu0 %v1916
    %1965 = vmatprep.subr.mxu0 0.0
    %1966 = vmatpush2.msra.mxu0 %v1915
    %1967 = vmatprep.subr.mxu0 0.0
    %1968 = vmatpush2.msra.mxu0 %v1914
    %1969 = vmatprep.subr.mxu0 0.0
    %1970 = vmatpush2.msra.mxu0 %v1913
    %1971 = vmatprep.subr.mxu0 0.0
    %1972 = vmatpush2.msra.mxu0 %v1912
    %1973 = vmatprep.subr.mxu0 0.0
    %1974 = vmatpush2.msra.mxu0 %v1911
    %1975 = vmatprep.subr.mxu0 0.0
    %1976 = vmatpush2.msra.mxu0 %v1910
    %1977 = vmatprep.subr.mxu0 0.0
    %1978 = vmatpush2.msra.mxu0 %v1909
    %1979 = vmatprep.subr.mxu0 0.0
    %1980 = vmatpush2.msra.mxu0 %v1908
    %1981 = vmatprep.subr.mxu0 0.0
    %1982 = vmatpush2.msra.mxu0 %v1907
    %1983 = vmatprep.subr.mxu0 0.0
    %1984 = vmatpush2.msra.mxu0 %v1906
    %1985 = vmatprep.subr.mxu0 0.0
    %1986 = vmatpush2.msra.mxu0 %v1905
    %1987 = vmatprep.subr.mxu0 0.0
    %1988 = vmatpush2.msra.mxu0 %v1904
    %1989 = vmatprep.subr.mxu0 0.0
    %1990 = vmatpush2.msra.mxu0 %v1903
    %1991 = vmatprep.subr.mxu0 0.0
    %1992 = vmatpush2.msra.mxu0 %v1902
    %1993 = vmatprep.mubr.f32.mxu0 %v1926
    %1994 = vmatmul.mubr.f32.gmra.mxu0 %v1925
    %v1995 = vpop.f32.mrf.mxu0
    %v1996 = vadd.f32 0.0, %v1995
    %v1997 = vpop.f32.mrf.mxu0
    %1998 = vdwg.mxu0
    %v1999 = vadd.f32 %v1882, %v1996
    %s2000 = scalar_lea.vmem %s0, 68
    %v2001 = vld [vmem:[%s2000] sm:$0xf]
    %s2002 = scalar_lea.vmem %s1, 4352
    %v2003 = vld [vmem:[%s2002] sm:$0xff]
    %v2004 = vld [vmem:[%s2002 + $0x8] sm:$0xff]
    %v2005 = vld [vmem:[%s2002 + $0x10] sm:$0xff]
    %v2006 = vld [vmem:[%s2002 + $0x18] sm:$0xff]
    %v2007 = vld [vmem:[%s2002 + $0x20] sm:$0xff]
    %v2008 = vld [vmem:[%s2002 + $0x28] sm:$0xff]
    %v2009 = vld [vmem:[%s2002 + $0x30] sm:$0xff]
    %v2010 = vld [vmem:[%s2002 + $0x38] sm:$0xff]
    %v2011 = vld [vmem:[%s2002 + $0x40] sm:$0xff]
    %v2012 = vld [vmem:[%s2002 + $0x48] sm:$0xff]
    %v2013 = vld [vmem:[%s2002 + $0x50] sm:$0xff]
    %v2014 = vld [vmem:[%s2002 + $0x58] sm:$0xff]
    %v2015 = vld [vmem:[%s2002 + $0x60] sm:$0xff]
    %v2016 = vld [vmem:[%s2002 + $0x68] sm:$0xff]
    %v2017 = vld [vmem:[%s2002 + $0x70] sm:$0xff]
    %v2018 = vld [vmem:[%s2002 + $0x78] sm:$0xff]
    %v2019 = vld [vmem:[%s2002 + $0x80] sm:$0xff]
    %v2020 = vld [vmem:[%s2002 + $0x88] sm:$0xff]
    %v2021 = vld [vmem:[%s2002 + $0x90] sm:$0xff]
    %v2022 = vld [vmem:[%s2002 + $0x98] sm:$0xff]
    %v2023 = vld [vmem:[%s2002 + $0xa0] sm:$0xff]
    %v2024 = vld [vmem:[%s2002 + $0xa8] sm:$0xff]
    %v2025 = vld [vmem:[%s2002 + $0xb0] sm:$0xff]
    %v2026 = vld [vmem:[%s2002 + $0xb8] sm:$0xff]
    %v2027 = vld [vmem:[%s2002 + $0xc0] sm:$0xff]
    %v2028 = vld [vmem:[%s2002 + $0xc8] sm:$0xff]
    %v2029 = vld [vmem:[%s2002 + $0xd0] sm:$0xff]
    %v2030 = vld [vmem:[%s2002 + $0xd8] sm:$0xff]
    %v2031 = vld [vmem:[%s2002 + $0xe0] sm:$0xff]
    %v2032 = vld [vmem:[%s2002 + $0xe8] sm:$0xff]
    %v2033 = vld [vmem:[%s2002 + $0xf0] sm:$0xff]
    %v2034 = vld [vmem:[%s2002 + $0xf8] sm:$0xff]
    %v2037 = vunpack.c.l.s4 1983009808
    %v2038 = vunpack.c.0.s8 %v2037
    %v2039 = vlaneseq
    %v2040 = vshrl.u32 %v2039, 7
    %v2041 = vsub.s32 %v2038, %v2040
    %v2042 = vrot.slane %v2001, %v2041
    %v2043 = vcombine.high %v2042, %v2042
    %2046 = vmatprep.subr.mxu0 0.0
    %2047 = vmatpush1.msra.mxu0 %v2018
    %2048 = vmatprep.subr.mxu0 0.0
    %2049 = vmatpush1.msra.mxu0 %v2017
    %2050 = vmatprep.subr.mxu0 0.0
    %2051 = vmatpush1.msra.mxu0 %v2016
    %2052 = vmatprep.subr.mxu0 0.0
    %2053 = vmatpush1.msra.mxu0 %v2015
    %2054 = vmatprep.subr.mxu0 0.0
    %2055 = vmatpush1.msra.mxu0 %v2014
    %2056 = vmatprep.subr.mxu0 0.0
    %2057 = vmatpush1.msra.mxu0 %v2013
    %2058 = vmatprep.subr.mxu0 0.0
    %2059 = vmatpush1.msra.mxu0 %v2012
    %2060 = vmatprep.subr.mxu0 0.0
    %2061 = vmatpush1.msra.mxu0 %v2011
    %2062 = vmatprep.subr.mxu0 0.0
    %2063 = vmatpush1.msra.mxu0 %v2010
    %2064 = vmatprep.subr.mxu0 0.0
    %2065 = vmatpush1.msra.mxu0 %v2009
    %2066 = vmatprep.subr.mxu0 0.0
    %2067 = vmatpush1.msra.mxu0 %v2008
    %2068 = vmatprep.subr.mxu0 0.0
    %2069 = vmatpush1.msra.mxu0 %v2007
    %2070 = vmatprep.subr.mxu0 0.0
    %2071 = vmatpush1.msra.mxu0 %v2006
    %2072 = vmatprep.subr.mxu0 0.0
    %2073 = vmatpush1.msra.mxu0 %v2005
    %2074 = vmatprep.subr.mxu0 0.0
    %2075 = vmatpush1.msra.mxu0 %v2004
    %2076 = vmatprep.subr.mxu0 0.0
    %2077 = vmatpush1.msra.mxu0 %v2003
    %2078 = vmatprep.subr.mxu0 0.0
    %2079 = vmatpush2.msra.mxu0 %v2034
    %2080 = vmatprep.subr.mxu0 0.0
    %2081 = vmatpush2.msra.mxu0 %v2033
    %2082 = vmatprep.subr.mxu0 0.0
    %2083 = vmatpush2.msra.mxu0 %v2032
    %2084 = vmatprep.subr.mxu0 0.0
    %2085 = vmatpush2.msra.mxu0 %v2031
    %2086 = vmatprep.subr.mxu0 0.0
    %2087 = vmatpush2.msra.mxu0 %v2030
    %2088 = vmatprep.subr.mxu0 0.0
    %2089 = vmatpush2.msra.mxu0 %v2029
    %2090 = vmatprep.subr.mxu0 0.0
    %2091 = vmatpush2.msra.mxu0 %v2028
    %2092 = vmatprep.subr.mxu0 0.0
    %2093 = vmatpush2.msra.mxu0 %v2027
    %2094 = vmatprep.subr.mxu0 0.0
    %2095 = vmatpush2.msra.mxu0 %v2026
    %2096 = vmatprep.subr.mxu0 0.0
    %2097 = vmatpush2.msra.mxu0 %v2025
    %2098 = vmatprep.subr.mxu0 0.0
    %2099 = vmatpush2.msra.mxu0 %v2024
    %2100 = vmatprep.subr.mxu0 0.0
    %2101 = vmatpush2.msra.mxu0 %v2023
    %2102 = vmatprep.subr.mxu0 0.0
    %2103 = vmatpush2.msra.mxu0 %v2022
    %2104 = vmatprep.subr.mxu0 0.0
    %2105 = vmatpush2.msra.mxu0 %v2021
    %2106 = vmatprep.subr.mxu0 0.0
    %2107 = vmatpush2.msra.mxu0 %v2020
    %2108 = vmatprep.subr.mxu0 0.0
    %2109 = vmatpush2.msra.mxu0 %v2019
    %2110 = vmatprep.mubr.f32.mxu0 %v2043
    %2111 = vmatmul.mubr.f32.gmra.mxu0 %v2042
    %v2112 = vpop.f32.mrf.mxu0
    %v2113 = vadd.f32 0.0, %v2112
    %v2114 = vpop.f32.mrf.mxu0
    %2115 = vdwg.mxu0
    %v2116 = vadd.f32 %v1999, %v2113
    %s2117 = scalar_lea.vmem %s0, 72
    %v2118 = vld [vmem:[%s2117] sm:$0xf]
    %s2119 = scalar_lea.vmem %s1, 4608
    %v2120 = vld [vmem:[%s2119] sm:$0xff]
    %v2121 = vld [vmem:[%s2119 + $0x8] sm:$0xff]
    %v2122 = vld [vmem:[%s2119 + $0x10] sm:$0xff]
    %v2123 = vld [vmem:[%s2119 + $0x18] sm:$0xff]
    %v2124 = vld [vmem:[%s2119 + $0x20] sm:$0xff]
    %v2125 = vld [vmem:[%s2119 + $0x28] sm:$0xff]
    %v2126 = vld [vmem:[%s2119 + $0x30] sm:$0xff]
    %v2127 = vld [vmem:[%s2119 + $0x38] sm:$0xff]
    %v2128 = vld [vmem:[%s2119 + $0x40] sm:$0xff]
    %v2129 = vld [vmem:[%s2119 + $0x48] sm:$0xff]
    %v2130 = vld [vmem:[%s2119 + $0x50] sm:$0xff]
    %v2131 = vld [vmem:[%s2119 + $0x58] sm:$0xff]
    %v2132 = vld [vmem:[%s2119 + $0x60] sm:$0xff]
    %v2133 = vld [vmem:[%s2119 + $0x68] sm:$0xff]
    %v2134 = vld [vmem:[%s2119 + $0x70] sm:$0xff]
    %v2135 = vld [vmem:[%s2119 + $0x78] sm:$0xff]
    %v2136 = vld [vmem:[%s2119 + $0x80] sm:$0xff]
    %v2137 = vld [vmem:[%s2119 + $0x88] sm:$0xff]
    %v2138 = vld [vmem:[%s2119 + $0x90] sm:$0xff]
    %v2139 = vld [vmem:[%s2119 + $0x98] sm:$0xff]
    %v2140 = vld [vmem:[%s2119 + $0xa0] sm:$0xff]
    %v2141 = vld [vmem:[%s2119 + $0xa8] sm:$0xff]
    %v2142 = vld [vmem:[%s2119 + $0xb0] sm:$0xff]
    %v2143 = vld [vmem:[%s2119 + $0xb8] sm:$0xff]
    %v2144 = vld [vmem:[%s2119 + $0xc0] sm:$0xff]
    %v2145 = vld [vmem:[%s2119 + $0xc8] sm:$0xff]
    %v2146 = vld [vmem:[%s2119 + $0xd0] sm:$0xff]
    %v2147 = vld [vmem:[%s2119 + $0xd8] sm:$0xff]
    %v2148 = vld [vmem:[%s2119 + $0xe0] sm:$0xff]
    %v2149 = vld [vmem:[%s2119 + $0xe8] sm:$0xff]
    %v2150 = vld [vmem:[%s2119 + $0xf0] sm:$0xff]
    %v2151 = vld [vmem:[%s2119 + $0xf8] sm:$0xff]
    %v2154 = vunpack.c.l.s4 1983009808
    %v2155 = vunpack.c.0.s8 %v2154
    %v2156 = vlaneseq
    %v2157 = vshrl.u32 %v2156, 7
    %v2158 = vsub.s32 %v2155, %v2157
    %v2159 = vrot.slane %v2118, %v2158
    %v2160 = vcombine.high %v2159, %v2159
    %2163 = vmatprep.subr.mxu0 0.0
    %2164 = vmatpush1.msra.mxu0 %v2135
    %2165 = vmatprep.subr.mxu0 0.0
    %2166 = vmatpush1.msra.mxu0 %v2134
    %2167 = vmatprep.subr.mxu0 0.0
    %2168 = vmatpush1.msra.mxu0 %v2133
    %2169 = vmatprep.subr.mxu0 0.0
    %2170 = vmatpush1.msra.mxu0 %v2132
    %2171 = vmatprep.subr.mxu0 0.0
    %2172 = vmatpush1.msra.mxu0 %v2131
    %2173 = vmatprep.subr.mxu0 0.0
    %2174 = vmatpush1.msra.mxu0 %v2130
    %2175 = vmatprep.subr.mxu0 0.0
    %2176 = vmatpush1.msra.mxu0 %v2129
    %2177 = vmatprep.subr.mxu0 0.0
    %2178 = vmatpush1.msra.mxu0 %v2128
    %2179 = vmatprep.subr.mxu0 0.0
    %2180 = vmatpush1.msra.mxu0 %v2127
    %2181 = vmatprep.subr.mxu0 0.0
    %2182 = vmatpush1.msra.mxu0 %v2126
    %2183 = vmatprep.subr.mxu0 0.0
    %2184 = vmatpush1.msra.mxu0 %v2125
    %2185 = vmatprep.subr.mxu0 0.0
    %2186 = vmatpush1.msra.mxu0 %v2124
    %2187 = vmatprep.subr.mxu0 0.0
    %2188 = vmatpush1.msra.mxu0 %v2123
    %2189 = vmatprep.subr.mxu0 0.0
    %2190 = vmatpush1.msra.mxu0 %v2122
    %2191 = vmatprep.subr.mxu0 0.0
    %2192 = vmatpush1.msra.mxu0 %v2121
    %2193 = vmatprep.subr.mxu0 0.0
    %2194 = vmatpush1.msra.mxu0 %v2120
    %2195 = vmatprep.subr.mxu0 0.0
    %2196 = vmatpush2.msra.mxu0 %v2151
    %2197 = vmatprep.subr.mxu0 0.0
    %2198 = vmatpush2.msra.mxu0 %v2150
    %2199 = vmatprep.subr.mxu0 0.0
    %2200 = vmatpush2.msra.mxu0 %v2149
    %2201 = vmatprep.subr.mxu0 0.0
    %2202 = vmatpush2.msra.mxu0 %v2148
    %2203 = vmatprep.subr.mxu0 0.0
    %2204 = vmatpush2.msra.mxu0 %v2147
    %2205 = vmatprep.subr.mxu0 0.0
    %2206 = vmatpush2.msra.mxu0 %v2146
    %2207 = vmatprep.subr.mxu0 0.0
    %2208 = vmatpush2.msra.mxu0 %v2145
    %2209 = vmatprep.subr.mxu0 0.0
    %2210 = vmatpush2.msra.mxu0 %v2144
    %2211 = vmatprep.subr.mxu0 0.0
    %2212 = vmatpush2.msra.mxu0 %v2143
    %2213 = vmatprep.subr.mxu0 0.0
    %2214 = vmatpush2.msra.mxu0 %v2142
    %2215 = vmatprep.subr.mxu0 0.0
    %2216 = vmatpush2.msra.mxu0 %v2141
    %2217 = vmatprep.subr.mxu0 0.0
    %2218 = vmatpush2.msra.mxu0 %v2140
    %2219 = vmatprep.subr.mxu0 0.0
    %2220 = vmatpush2.msra.mxu0 %v2139
    %2221 = vmatprep.subr.mxu0 0.0
    %2222 = vmatpush2.msra.mxu0 %v2138
    %2223 = vmatprep.subr.mxu0 0.0
    %2224 = vmatpush2.msra.mxu0 %v2137
    %2225 = vmatprep.subr.mxu0 0.0
    %2226 = vmatpush2.msra.mxu0 %v2136
    %2227 = vmatprep.mubr.f32.mxu0 %v2160
    %2228 = vmatmul.mubr.f32.gmra.mxu0 %v2159
    %v2229 = vpop.f32.mrf.mxu0
    %v2230 = vadd.f32 0.0, %v2229
    %v2231 = vpop.f32.mrf.mxu0
    %2232 = vdwg.mxu0
    %v2233 = vadd.f32 %v2116, %v2230
    %s2234 = scalar_lea.vmem %s0, 76
    %v2235 = vld [vmem:[%s2234] sm:$0xf]
    %s2236 = scalar_lea.vmem %s1, 4864
    %v2237 = vld [vmem:[%s2236] sm:$0xff]
    %v2238 = vld [vmem:[%s2236 + $0x8] sm:$0xff]
    %v2239 = vld [vmem:[%s2236 + $0x10] sm:$0xff]
    %v2240 = vld [vmem:[%s2236 + $0x18] sm:$0xff]
    %v2241 = vld [vmem:[%s2236 + $0x20] sm:$0xff]
    %v2242 = vld [vmem:[%s2236 + $0x28] sm:$0xff]
    %v2243 = vld [vmem:[%s2236 + $0x30] sm:$0xff]
    %v2244 = vld [vmem:[%s2236 + $0x38] sm:$0xff]
    %v2245 = vld [vmem:[%s2236 + $0x40] sm:$0xff]
    %v2246 = vld [vmem:[%s2236 + $0x48] sm:$0xff]
    %v2247 = vld [vmem:[%s2236 + $0x50] sm:$0xff]
    %v2248 = vld [vmem:[%s2236 + $0x58] sm:$0xff]
    %v2249 = vld [vmem:[%s2236 + $0x60] sm:$0xff]
    %v2250 = vld [vmem:[%s2236 + $0x68] sm:$0xff]
    %v2251 = vld [vmem:[%s2236 + $0x70] sm:$0xff]
    %v2252 = vld [vmem:[%s2236 + $0x78] sm:$0xff]
    %v2253 = vld [vmem:[%s2236 + $0x80] sm:$0xff]
    %v2254 = vld [vmem:[%s2236 + $0x88] sm:$0xff]
    %v2255 = vld [vmem:[%s2236 + $0x90] sm:$0xff]
    %v2256 = vld [vmem:[%s2236 + $0x98] sm:$0xff]
    %v2257 = vld [vmem:[%s2236 + $0xa0] sm:$0xff]
    %v2258 = vld [vmem:[%s2236 + $0xa8] sm:$0xff]
    %v2259 = vld [vmem:[%s2236 + $0xb0] sm:$0xff]
    %v2260 = vld [vmem:[%s2236 + $0xb8] sm:$0xff]
    %v2261 = vld [vmem:[%s2236 + $0xc0] sm:$0xff]
    %v2262 = vld [vmem:[%s2236 + $0xc8] sm:$0xff]
    %v2263 = vld [vmem:[%s2236 + $0xd0] sm:$0xff]
    %v2264 = vld [vmem:[%s2236 + $0xd8] sm:$0xff]
    %v2265 = vld [vmem:[%s2236 + $0xe0] sm:$0xff]
    %v2266 = vld [vmem:[%s2236 + $0xe8] sm:$0xff]
    %v2267 = vld [vmem:[%s2236 + $0xf0] sm:$0xff]
    %v2268 = vld [vmem:[%s2236 + $0xf8] sm:$0xff]
    %v2271 = vunpack.c.l.s4 1983009808
    %v2272 = vunpack.c.0.s8 %v2271
    %v2273 = vlaneseq
    %v2274 = vshrl.u32 %v2273, 7
    %v2275 = vsub.s32 %v2272, %v2274
    %v2276 = vrot.slane %v2235, %v2275
    %v2277 = vcombine.high %v2276, %v2276
    %2280 = vmatprep.subr.mxu0 0.0
    %2281 = vmatpush1.msra.mxu0 %v2252
    %2282 = vmatprep.subr.mxu0 0.0
    %2283 = vmatpush1.msra.mxu0 %v2251
    %2284 = vmatprep.subr.mxu0 0.0
    %2285 = vmatpush1.msra.mxu0 %v2250
    %2286 = vmatprep.subr.mxu0 0.0
    %2287 = vmatpush1.msra.mxu0 %v2249
    %2288 = vmatprep.subr.mxu0 0.0
    %2289 = vmatpush1.msra.mxu0 %v2248
    %2290 = vmatprep.subr.mxu0 0.0
    %2291 = vmatpush1.msra.mxu0 %v2247
    %2292 = vmatprep.subr.mxu0 0.0
    %2293 = vmatpush1.msra.mxu0 %v2246
    %2294 = vmatprep.subr.mxu0 0.0
    %2295 = vmatpush1.msra.mxu0 %v2245
    %2296 = vmatprep.subr.mxu0 0.0
    %2297 = vmatpush1.msra.mxu0 %v2244
    %2298 = vmatprep.subr.mxu0 0.0
    %2299 = vmatpush1.msra.mxu0 %v2243
    %2300 = vmatprep.subr.mxu0 0.0
    %2301 = vmatpush1.msra.mxu0 %v2242
    %2302 = vmatprep.subr.mxu0 0.0
    %2303 = vmatpush1.msra.mxu0 %v2241
    %2304 = vmatprep.subr.mxu0 0.0
    %2305 = vmatpush1.msra.mxu0 %v2240
    %2306 = vmatprep.subr.mxu0 0.0
    %2307 = vmatpush1.msra.mxu0 %v2239
    %2308 = vmatprep.subr.mxu0 0.0
    %2309 = vmatpush1.msra.mxu0 %v2238
    %2310 = vmatprep.subr.mxu0 0.0
    %2311 = vmatpush1.msra.mxu0 %v2237
    %2312 = vmatprep.subr.mxu0 0.0
    %2313 = vmatpush2.msra.mxu0 %v2268
    %2314 = vmatprep.subr.mxu0 0.0
    %2315 = vmatpush2.msra.mxu0 %v2267
    %2316 = vmatprep.subr.mxu0 0.0
    %2317 = vmatpush2.msra.mxu0 %v2266
    %2318 = vmatprep.subr.mxu0 0.0
    %2319 = vmatpush2.msra.mxu0 %v2265
    %2320 = vmatprep.subr.mxu0 0.0
    %2321 = vmatpush2.msra.mxu0 %v2264
    %2322 = vmatprep.subr.mxu0 0.0
    %2323 = vmatpush2.msra.mxu0 %v2263
    %2324 = vmatprep.subr.mxu0 0.0
    %2325 = vmatpush2.msra.mxu0 %v2262
    %2326 = vmatprep.subr.mxu0 0.0
    %2327 = vmatpush2.msra.mxu0 %v2261
    %2328 = vmatprep.subr.mxu0 0.0
    %2329 = vmatpush2.msra.mxu0 %v2260
    %2330 = vmatprep.subr.mxu0 0.0
    %2331 = vmatpush2.msra.mxu0 %v2259
    %2332 = vmatprep.subr.mxu0 0.0
    %2333 = vmatpush2.msra.mxu0 %v2258
    %2334 = vmatprep.subr.mxu0 0.0
    %2335 = vmatpush2.msra.mxu0 %v2257
    %2336 = vmatprep.subr.mxu0 0.0
    %2337 = vmatpush2.msra.mxu0 %v2256
    %2338 = vmatprep.subr.mxu0 0.0
    %2339 = vmatpush2.msra.mxu0 %v2255
    %2340 = vmatprep.subr.mxu0 0.0
    %2341 = vmatpush2.msra.mxu0 %v2254
    %2342 = vmatprep.subr.mxu0 0.0
    %2343 = vmatpush2.msra.mxu0 %v2253
    %2344 = vmatprep.mubr.f32.mxu0 %v2277
    %2345 = vmatmul.mubr.f32.gmra.mxu0 %v2276
    %v2346 = vpop.f32.mrf.mxu0
    %v2347 = vadd.f32 0.0, %v2346
    %v2348 = vpop.f32.mrf.mxu0
    %2349 = vdwg.mxu0
    %v2350 = vadd.f32 %v2233, %v2347
    %v2351 = vld [vmem:[%s2] sm:$0x1]
    %v2353 = vlaneseq
    %v2354 = vshrl.u32 %v2353, 7
    %v2355 = vsub.s32 0, %v2354
    %v2356 = vrot.slane %v2351, %v2355
    %v2358 = vadd.f32 %v2350, %v2356
    %vm2359 = vcmask 74752
    %2360 = vst.msk [vmem:[#allocation2] sm:$0x3] %vm2359, %v2358
    // Predicated region
    $region14: #{model_forward.3} parent=1 // pred_check
      _
    $region15: #{model_forward.3} parent=1 // pred_check_branch
      %2362 = sbr.rel (0) target = $region17
    $region16: #{model_forward.3} parent=1 // pred_region
      %s2364 = ssub.s32 32, 32
      %2365 = vsyncadd [#allocation3], %s2364
      %s2367 = sshll.u32 [#allocation2], 4
      %s2368 = int_to_ptr.vmem [resolvable:$true] %s2367
      %2370 = dma.vmem_to_hbm [thread:$0]  %s2368, 32, %s3, [#allocation3]
    $region17: #{model_forward.3} parent=1 // pred_fallthru
      _
    // Predicated region
    $region18: #{model_forward.3} parent=1 // pred_check
      _
    $region19: #{model_forward.3} parent=1 // pred_check_branch
      %2372 = sbr.rel (0) target = $region21
    $region20: #{model_forward.3} parent=1 // pred_region
      %2373 = dma.done [#allocation3], 32
    $region21: #{model_forward.3} parent=1 // pred_fallthru
      _
    %2374 = vsyncpa [#allocation3], 1

</llo_original>
